<compile_context>
chip_gen: v7x
topology: tpu7x:2x2x1
jax: 0.10.0
libtpu: 0.0.40
codegen_flags: <defaults>
</compile_context>

<pallas_src>
import functools

import numpy as np
import jax
import jax.numpy as jnp
from jax.experimental import pallas as pl
from jax.experimental.pallas import tpu as pltpu


# ------------------------------ Pallas kernel --------------------------------

def _inception_aux_kernel(x_ref, pool_ref, convw_ref, scale_ref, shift_ref,
                          w1_ref, b1_ref, w2_ref, o_ref, z_ref, *, n_batch):
    """Fused pool + 1x1 conv + BN + ReLU + fc1 + ReLU + fc2 (partial logits).

    grid = (num_cores, hidden_blocks):
      axis 0 ("parallel")  : per-TensorCore split of the fc1/fc2 hidden dim;
                             each core owns one (N, 128) partial-logits block.
      axis 1 ("arbitrary") : sequential streaming of hidden blocks per core.
    The conv activation z (16N, 128) is (re)computed per core at j==0 (tiny)
    and stays resident in a bf16 VMEM scratch.
    """
    j = pl.program_id(1)

    # --- per-core, once: adaptive avg-pool + 1x1 conv + folded BN + ReLU ----
    @pl.when(j == 0)
    def _():
        # pool_ref rows are ordered (s*N + n); columns index (n, h*W + w).
        pooled = jnp.dot(pool_ref[...], x_ref[...],
                         preferred_element_type=jnp.float32)        # (16N, C)
        z = jnp.dot(pooled, convw_ref[...],
                    preferred_element_type=jnp.float32)             # (16N,128)
        z_ref[...] = jnp.maximum(z * scale_ref[...] + shift_ref[...],
                                 0.0).astype(jnp.bfloat16)
        o_ref[...] = jnp.zeros_like(o_ref)      # per-core partial accumulator

    # --- fc1 block j: h = relu(sum_s z_s @ W1q[s, :, blk] + b1[blk]) --------
    # bf16 operands go straight to the MXU (f32 accumulation) — no VPU casts.
    tb = b1_ref.shape[1]
    acc = jnp.zeros((n_batch, tb), jnp.float32)
    for s in range(16):                       # static unroll over 4x4 spatial
        z_s = z_ref[pl.ds(s * n_batch, n_batch), :]            # (N, 128) bf16
        acc = acc + jnp.dot(z_s, w1_ref[s],
                            preferred_element_type=jnp.float32)
    h = jnp.maximum(acc + b1_ref[...], 0.0).astype(jnp.bfloat16)    # (N, tb)
    # F.dropout(p=0.7, training=False) is the identity in eval mode.
    # TODO(synk): training-mode dropout (p=0.7) not implemented.

    # --- fc2 partial: logits_core += h_blk @ W2[blk, :] ----------------------
    o_ref[...] += jnp.dot(h, w2_ref[...], preferred_element_type=jnp.float32)


# --------------------------- one-time preprocessing ---------------------------

def adaptive_pool_matrix(H, W, out_h=4, out_w=4):
    """M s.t. flat(x)(H*W) @ M == adaptive_avg_pool2d(x, (4,4)) flattened."""
    M = np.zeros((H * W, out_h * out_w), dtype=np.float32)
    for oi in range(out_h):
        h0 = (oi * H) // out_h
        h1 = -(-((oi + 1) * H) // out_h)          # ceil
        for oj in range(out_w):
            w0 = (oj * W) // out_w
            w1 = -(-((oj + 1) * W) // out_w)
            cnt = (h1 - h0) * (w1 - w0)
            for h in range(h0, h1):
                for w in range(w0, w1):
                    M[h * W + w, oi * out_w + oj] = 1.0 / cnt
    return M


def init_params(key, in_channels, num_classes):
    """PyTorch-layout params. fc weights are bf16-rounded (stored f32) since
    the kernel streams them as bf16."""
    ks = jax.random.split(key, 9)
    bf = lambda a: a.astype(jnp.bfloat16).astype(jnp.float32)
    return {
        "conv_w": jax.random.normal(ks[0], (128, in_channels), jnp.float32) * 0.05,
        "bn_gamma": 1.0 + 0.1 * jax.random.normal(ks[1], (128,), jnp.float32),
        "bn_beta": 0.1 * jax.random.normal(ks[2], (128,), jnp.float32),
        "bn_mean": 0.1 * jax.random.normal(ks[3], (128,), jnp.float32),
        "bn_var": 1.0 + 0.5 * jax.random.uniform(ks[4], (128,), jnp.float32),
        "fc1_w": bf(jax.random.normal(ks[5], (1024, 2048), jnp.float32) * 0.02),
        "fc1_b": 0.01 * jax.random.normal(ks[6], (1024,), jnp.float32),
        "fc2_w": bf(jax.random.normal(ks[7], (num_classes, 1024), jnp.float32) * 0.02),
        "fc2_b": 0.01 * jax.random.normal(ks[8], (num_classes,), jnp.float32),
    }


def prepare_kernel_params(params, N, H, W, eps=1e-3):
    """Fold pool / flatten / BN / transposes into weights (runs once)."""
    C = params["conv_w"].shape[1]
    num_classes, hidden = params["fc2_w"].shape
    assert params["fc1_w"].shape == (hidden, 128 * 16)
    assert num_classes <= 128
    HW = H * W

    # pool + batch-interleave matrix: rows ordered s*N + n, cols n*HW + hw.
    # TODO(synk): N^2-scaling — replace with per-sample pooling at large N.
    M = adaptive_pool_matrix(H, W)                        # (HW, 16)
    pool = np.zeros((16 * N, N * HW), np.float32)
    for n in range(N):
        pool[n::N, n * HW:(n + 1) * HW] = M.T

    scale = params["bn_gamma"] / jnp.sqrt(params["bn_var"] + eps)
    shift = params["bn_beta"] - params["bn_mean"] * scale

    # fc1 weight permuted so torch.flatten feature (c_out*16 + s) -> [s, c_out, k]
    w1q = jnp.transpose(params["fc1_w"].reshape(hidden, 128, 16),
                        (2, 1, 0)).astype(jnp.bfloat16)   # (16, 128, 1024)

    # fc2 transposed + zero-padded to a lane-dense 128-wide output.
    w2p = jnp.zeros((hidden, 128), jnp.float32).at[:, :num_classes].set(
        params["fc2_w"].T).astype(jnp.bfloat16)           # (1024, 128)

    return {
        "pool": jnp.asarray(pool),                        # (16N, N*HW) f32
        "conv_wt": params["conv_w"].T,                    # (C, 128)    f32
        "bn_scale": scale.reshape(1, 128),
        "bn_shift": shift.reshape(1, 128),
        "fc1_wq": w1q,                                    # (16,128,1024) bf16
        "fc1_b": params["fc1_b"].reshape(1, hidden),
        "fc2_wp": w2p,                                    # (1024,128)  bf16
        "fc2_b": params["fc2_b"],                         # (num_classes,) f32
    }


# ------------------------------ forward wrapper -------------------------------

def make_forward(N, C, H, W, num_classes, hidden=1024, tb=512, num_cores=2):
    """forward(x_nhwc, kernel_params) -> (N, num_classes) logits."""
    assert hidden % (num_cores * tb) == 0
    inner = hidden // (num_cores * tb)
    grid = (num_cores, inner)
    HW = H * W
    kernel = functools.partial(_inception_aux_kernel, n_batch=N)

    @jax.jit
    def forward(x_nhwc, kp):
        # free reshape of contiguous NHWC input; no per-call transpose op.
        x2d = x_nhwc.astype(jnp.float32).reshape(N * HW, C)
        partials = pl.pallas_call(
            kernel,
            out_shape=jax.ShapeDtypeStruct((num_cores, N, 128), jnp.float32),
            grid=grid,
            in_specs=[
                pl.BlockSpec((N * HW, C), lambda c, j: (0, 0)),         # x
                pl.BlockSpec((16 * N, N * HW), lambda c, j: (0, 0)),    # pool
                pl.BlockSpec((C, 128), lambda c, j: (0, 0)),            # conv W^T
                pl.BlockSpec((1, 128), lambda c, j: (0, 0)),            # bn scale
                pl.BlockSpec((1, 128), lambda c, j: (0, 0)),            # bn shift
                pl.BlockSpec((16, 128, tb),
                             lambda c, j: (0, 0, c * inner + j)),       # fc1 W blk
                pl.BlockSpec((1, tb),
                             lambda c, j: (0, c * inner + j)),          # fc1 b blk
                pl.BlockSpec((tb, 128),
                             lambda c, j: (c * inner + j, 0)),          # fc2 W blk
            ],
            out_specs=pl.BlockSpec((None, N, 128), lambda c, j: (c, 0, 0)),
            scratch_shapes=[pltpu.VMEM((16 * N, 128), jnp.bfloat16)],   # z (bf16)
            compiler_params=pltpu.CompilerParams(
                dimension_semantics=("parallel", "arbitrary"),
                vmem_limit_bytes=32 * 1024 * 1024,
            ),
        )(x2d, kp["pool"], kp["conv_wt"], kp["bn_scale"], kp["bn_shift"],
          kp["fc1_wq"], kp["fc1_b"], kp["fc2_wp"])
        # tiny fused epilogue: sum per-core partials, add fc2 bias, drop the
        # 128-lane padding.
        return partials.sum(axis=0)[:, :num_classes] + kp["fc2_b"]

    return forward


# --------------------------------- reference ----------------------------------

def reference_forward(x, params, eps=1e-3):
    N, C, H, W = x.shape
    M = jnp.asarray(adaptive_pool_matrix(H, W))                       # (HW,16)
    pooled = (x.reshape(N, C, H * W) @ M).reshape(N, C, 4, 4)
    z = jnp.einsum("oc,ncij->noij", params["conv_w"], pooled)
    scale = params["bn_gamma"] / jnp.sqrt(params["bn_var"] + eps)
    shift = params["bn_beta"] - params["bn_mean"] * scale
    z = jnp.maximum(z * scale[None, :, None, None]
                    + shift[None, :, None, None], 0.0)
    feat = z.reshape(N, 2048)                      # torch.flatten: c*16 + s
    h = jnp.maximum(feat @ params["fc1_w"].T + params["fc1_b"], 0.0)
    return h @ params["fc2_w"].T + params["fc2_b"]


# ------------------------------------ main -------------------------------------

if __name__ == "__main__":
    key = jax.random.PRNGKey(0)
    k_x, k_p = jax.random.split(key)

    N, C, H, W = 2, 8, 16, 16
    num_classes = 10

    x = jax.random.normal(k_x, (N, C, H, W), dtype=jnp.float32)
    params = init_params(k_p, in_channels=C, num_classes=num_classes)
    kparams = prepare_kernel_params(params, N, H, W)      # one-time folding

    # one-time layout conversion to NHWC (kernel input layout)
    x_nhwc = jnp.transpose(x, (0, 2, 3, 1))

    forward = make_forward(N, C, H, W, num_classes)
    out = jax.block_until_ready(forward(x_nhwc, kparams))

    ref = jax.block_until_ready(reference_forward(x, params))
    np.testing.assert_allclose(np.asarray(out), np.asarray(ref),
                               rtol=2e-2, atol=2e-2)
    assert out.shape == (N, num_classes)
    print("KERNEL_OK")
</pallas_src>

<mosaic_0001>
module attributes {stable_mosaic.version = 11 : i64} {
  func.func @_inception_aux_kernel(%arg0: i32, %arg1: i32, %arg2: memref<512x8xf32, #tpu.memory_space<vmem>>, %arg3: memref<32x512xf32, #tpu.memory_space<vmem>>, %arg4: memref<8x128xf32, #tpu.memory_space<vmem>>, %arg5: memref<1x128xf32, #tpu.memory_space<vmem>>, %arg6: memref<1x128xf32, #tpu.memory_space<vmem>>, %arg7: memref<16x128x512xbf16, #tpu.memory_space<vmem>>, %arg8: memref<1x512xf32, #tpu.memory_space<vmem>>, %arg9: memref<512x128xbf16, #tpu.memory_space<vmem>>, %arg10: memref<1x2x128xf32, #tpu.memory_space<vmem>>, %arg11: memref<32x128xbf16, #tpu.memory_space<vmem>>) attributes {dimension_semantics = [#tpu.dimension_semantics<parallel>, #tpu.dimension_semantics<arbitrary>], iteration_bounds = array<i64: 2, 1>, scalar_prefetch = 0 : i64, scratch_operands = 1 : i64, tpu.core_type = #tpu.core_type<tc>, window_params = [{pipeline_mode = #tpu.pipeline_mode<synchronous>, transform_indices = @transform_0, window_bounds = array<i64: 512, 8>}, {pipeline_mode = #tpu.pipeline_mode<synchronous>, transform_indices = @transform_1, window_bounds = array<i64: 32, 512>}, {pipeline_mode = #tpu.pipeline_mode<synchronous>, transform_indices = @transform_2, window_bounds = array<i64: 8, 128>}, {pipeline_mode = #tpu.pipeline_mode<synchronous>, transform_indices = @transform_3, window_bounds = array<i64: 1, 128>}, {pipeline_mode = #tpu.pipeline_mode<synchronous>, transform_indices = @transform_4, window_bounds = array<i64: 1, 128>}, {transform_indices = @transform_5, window_bounds = array<i64: 16, 128, 512>}, {transform_indices = @transform_6, window_bounds = array<i64: 1, 512>}, {transform_indices = @transform_7, window_bounds = array<i64: 512, 128>}, {transform_indices = @transform_8, window_bounds = array<i64: 1, 2, 128>}]} {
    %c0_i32 = arith.constant 0 : i32
    %0 = arith.cmpi eq, %arg1, %c0_i32 : i32
    %1 = arith.extui %0 : i1 to i32
    %c0_i32_0 = arith.constant 0 : i32
    %2 = arith.cmpi ne, %1, %c0_i32_0 : i32
    scf.if %2 {
      %c0_85 = arith.constant 0 : index
      %c0_86 = arith.constant 0 : index
      %98 = vector.load %arg3[%c0_85, %c0_86] : memref<32x512xf32, #tpu.memory_space<vmem>>, vector<32x512xf32>
      %c0_87 = arith.constant 0 : index
      %c0_88 = arith.constant 0 : index
      %99 = vector.load %arg2[%c0_87, %c0_88] : memref<512x8xf32, #tpu.memory_space<vmem>>, vector<512x8xf32>
      %cst_89 = arith.constant dense<0.000000e+00> : vector<32x8xf32>
      %100 = tpu.matmul %98, %99, %cst_89 {dimension_numbers = #tpu.dot_dimension_numbers<[1], [0], [0], [1], [0, 0, 1, 1], [], []>} : vector<32x512xf32>, vector<512x8xf32>, vector<32x8xf32> -> vector<32x8xf32>
      %c0_90 = arith.constant 0 : index
      %c0_91 = arith.constant 0 : index
      %101 = vector.load %arg4[%c0_90, %c0_91] : memref<8x128xf32, #tpu.memory_space<vmem>>, vector<8x128xf32>
      %cst_92 = arith.constant dense<0.000000e+00> : vector<32x128xf32>
      %102 = tpu.matmul %100, %101, %cst_92 {dimension_numbers = #tpu.dot_dimension_numbers<[1], [0], [0], [1], [0, 0, 1, 1], [], []>} : vector<32x8xf32>, vector<8x128xf32>, vector<32x128xf32> -> vector<32x128xf32>
      %c0_93 = arith.constant 0 : index
      %c0_94 = arith.constant 0 : index
      %103 = vector.load %arg5[%c0_93, %c0_94] : memref<1x128xf32, #tpu.memory_space<vmem>>, vector<1x128xf32>
      %104 = vector.broadcast %103 : vector<1x128xf32> to vector<32x128xf32>
      %105 = arith.mulf %102, %104 : vector<32x128xf32>
      %c0_95 = arith.constant 0 : index
      %c0_96 = arith.constant 0 : index
      %106 = vector.load %arg6[%c0_95, %c0_96] : memref<1x128xf32, #tpu.memory_space<vmem>>, vector<1x128xf32>
      %107 = vector.broadcast %106 : vector<1x128xf32> to vector<32x128xf32>
      %108 = arith.addf %105, %107 : vector<32x128xf32>
      %cst_97 = arith.constant 0.000000e+00 : f32
      %109 = vector.broadcast %cst_97 : f32 to vector<32x128xf32>
      %110 = arith.maximumf %108, %109 : vector<32x128xf32>
      %111 = arith.truncf %110 : vector<32x128xf32> to vector<32x128xbf16>
      %c0_98 = arith.constant 0 : index
      %c0_99 = arith.constant 0 : index
      %112 = vector.load %arg11[%c0_98, %c0_99] : memref<32x128xbf16, #tpu.memory_space<vmem>>, vector<32x128xbf16>
      tpu.vector_store %arg11[%c0_98, %c0_99], %111 {strides = array<i32>} : memref<32x128xbf16, #tpu.memory_space<vmem>>, vector<32x128xbf16>,
      %cst_100 = arith.constant 0.000000e+00 : f32
      %113 = vector.broadcast %cst_100 : f32 to vector<2x128xf32>
      %c0_101 = arith.constant 0 : index
      %c0_102 = arith.constant 0 : index
      %c0_103 = arith.constant 0 : index
      %114 = vector.load %arg10[%c0_101, %c0_102, %c0_103] : memref<1x2x128xf32, #tpu.memory_space<vmem>>, vector<1x2x128xf32>
      %115 = vector.shape_cast %114 : vector<1x2x128xf32> to vector<2x128xf32>
      %116 = vector.shape_cast %113 : vector<2x128xf32> to vector<1x2x128xf32>
      tpu.vector_store %arg10[%c0_101, %c0_102, %c0_103], %116 {strides = array<i32>} : memref<1x2x128xf32, #tpu.memory_space<vmem>>, vector<1x2x128xf32>,
    } else {
    }
    %cst = arith.constant 0.000000e+00 : f32
    %3 = vector.broadcast %cst : f32 to vector<2x512xf32>
    %c0 = arith.constant 0 : index
    %c0_1 = arith.constant 0 : index
    %4 = vector.load %arg11[%c0, %c0_1] : memref<32x128xbf16, #tpu.memory_space<vmem>>, vector<2x128xbf16>
    %c0_2 = arith.constant 0 : index
    %c0_3 = arith.constant 0 : index
    %c0_4 = arith.constant 0 : index
    %5 = vector.load %arg7[%c0_2, %c0_3, %c0_4] : memref<16x128x512xbf16, #tpu.memory_space<vmem>>, vector<1x128x512xbf16>
    %6 = vector.shape_cast %5 : vector<1x128x512xbf16> to vector<128x512xbf16>
    %cst_5 = arith.constant dense<0.000000e+00> : vector<2x512xf32>
    %7 = tpu.matmul %4, %6, %cst_5 {dimension_numbers = #tpu.dot_dimension_numbers<[1], [0], [0], [1], [0, 0, 1, 1], [], []>} : vector<2x128xbf16>, vector<128x512xbf16>, vector<2x512xf32> -> vector<2x512xf32>
    %8 = arith.addf %3, %7 : vector<2x512xf32>
    %c2 = arith.constant 2 : index
    %c0_6 = arith.constant 0 : index
    %9 = vector.load %arg11[%c2, %c0_6] : memref<32x128xbf16, #tpu.memory_space<vmem>>, vector<2x128xbf16>
    %c1 = arith.constant 1 : index
    %c0_7 = arith.constant 0 : index
    %c0_8 = arith.constant 0 : index
    %10 = vector.load %arg7[%c1, %c0_7, %c0_8] : memref<16x128x512xbf16, #tpu.memory_space<vmem>>, vector<1x128x512xbf16>
    %11 = vector.shape_cast %10 : vector<1x128x512xbf16> to vector<128x512xbf16>
    %cst_9 = arith.constant dense<0.000000e+00> : vector<2x512xf32>
    %12 = tpu.matmul %9, %11, %cst_9 {dimension_numbers = #tpu.dot_dimension_numbers<[1], [0], [0], [1], [0, 0, 1, 1], [], []>} : vector<2x128xbf16>, vector<128x512xbf16>, vector<2x512xf32> -> vector<2x512xf32>
    %13 = arith.addf %8, %12 : vector<2x512xf32>
    %c4 = arith.constant 4 : index
    %c0_10 = arith.constant 0 : index
    %14 = vector.load %arg11[%c4, %c0_10] : memref<32x128xbf16, #tpu.memory_space<vmem>>, vector<2x128xbf16>
    %c2_11 = arith.constant 2 : index
    %c0_12 = arith.constant 0 : index
    %c0_13 = arith.constant 0 : index
    %15 = vector.load %arg7[%c2_11, %c0_12, %c0_13] : memref<16x128x512xbf16, #tpu.memory_space<vmem>>, vector<1x128x512xbf16>
    %16 = vector.shape_cast %15 : vector<1x128x512xbf16> to vector<128x512xbf16>
    %cst_14 = arith.constant dense<0.000000e+00> : vector<2x512xf32>
    %17 = tpu.matmul %14, %16, %cst_14 {dimension_numbers = #tpu.dot_dimension_numbers<[1], [0], [0], [1], [0, 0, 1, 1], [], []>} : vector<2x128xbf16>, vector<128x512xbf16>, vector<2x512xf32> -> vector<2x512xf32>
    %18 = arith.addf %13, %17 : vector<2x512xf32>
    %c6 = arith.constant 6 : index
    %c0_15 = arith.constant 0 : index
    %19 = vector.load %arg11[%c6, %c0_15] : memref<32x128xbf16, #tpu.memory_space<vmem>>, vector<2x128xbf16>
    %c3 = arith.constant 3 : index
    %c0_16 = arith.constant 0 : index
    %c0_17 = arith.constant 0 : index
    %20 = vector.load %arg7[%c3, %c0_16, %c0_17] : memref<16x128x512xbf16, #tpu.memory_space<vmem>>, vector<1x128x512xbf16>
    %21 = vector.shape_cast %20 : vector<1x128x512xbf16> to vector<128x512xbf16>
    %cst_18 = arith.constant dense<0.000000e+00> : vector<2x512xf32>
    %22 = tpu.matmul %19, %21, %cst_18 {dimension_numbers = #tpu.dot_dimension_numbers<[1], [0], [0], [1], [0, 0, 1, 1], [], []>} : vector<2x128xbf16>, vector<128x512xbf16>, vector<2x512xf32> -> vector<2x512xf32>
    %23 = arith.addf %18, %22 : vector<2x512xf32>
    %c8 = arith.constant 8 : index
    %c0_19 = arith.constant 0 : index
    %24 = vector.load %arg11[%c8, %c0_19] : memref<32x128xbf16, #tpu.memory_space<vmem>>, vector<2x128xbf16>
    %c4_20 = arith.constant 4 : index
    %c0_21 = arith.constant 0 : index
    %c0_22 = arith.constant 0 : index
    %25 = vector.load %arg7[%c4_20, %c0_21, %c0_22] : memref<16x128x512xbf16, #tpu.memory_space<vmem>>, vector<1x128x512xbf16>
    %26 = vector.shape_cast %25 : vector<1x128x512xbf16> to vector<128x512xbf16>
    %cst_23 = arith.constant dense<0.000000e+00> : vector<2x512xf32>
    %27 = tpu.matmul %24, %26, %cst_23 {dimension_numbers = #tpu.dot_dimension_numbers<[1], [0], [0], [1], [0, 0, 1, 1], [], []>} : vector<2x128xbf16>, vector<128x512xbf16>, vector<2x512xf32> -> vector<2x512xf32>
    %28 = arith.addf %23, %27 : vector<2x512xf32>
    %c10 = arith.constant 10 : index
    %c0_24 = arith.constant 0 : index
    %29 = vector.load %arg11[%c10, %c0_24] : memref<32x128xbf16, #tpu.memory_space<vmem>>, vector<2x128xbf16>
    %c5 = arith.constant 5 : index
    %c0_25 = arith.constant 0 : index
    %c0_26 = arith.constant 0 : index
    %30 = vector.load %arg7[%c5, %c0_25, %c0_26] : memref<16x128x512xbf16, #tpu.memory_space<vmem>>, vector<1x128x512xbf16>
    %31 = vector.shape_cast %30 : vector<1x128x512xbf16> to vector<128x512xbf16>
    %cst_27 = arith.constant dense<0.000000e+00> : vector<2x512xf32>
    %32 = tpu.matmul %29, %31, %cst_27 {dimension_numbers = #tpu.dot_dimension_numbers<[1], [0], [0], [1], [0, 0, 1, 1], [], []>} : vector<2x128xbf16>, vector<128x512xbf16>, vector<2x512xf32> -> vector<2x512xf32>
    %33 = arith.addf %28, %32 : vector<2x512xf32>
    %c12 = arith.constant 12 : index
    %c0_28 = arith.constant 0 : index
    %34 = vector.load %arg11[%c12, %c0_28] : memref<32x128xbf16, #tpu.memory_space<vmem>>, vector<2x128xbf16>
    %c6_29 = arith.constant 6 : index
    %c0_30 = arith.constant 0 : index
    %c0_31 = arith.constant 0 : index
    %35 = vector.load %arg7[%c6_29, %c0_30, %c0_31] : memref<16x128x512xbf16, #tpu.memory_space<vmem>>, vector<1x128x512xbf16>
    %36 = vector.shape_cast %35 : vector<1x128x512xbf16> to vector<128x512xbf16>
    %cst_32 = arith.constant dense<0.000000e+00> : vector<2x512xf32>
    %37 = tpu.matmul %34, %36, %cst_32 {dimension_numbers = #tpu.dot_dimension_numbers<[1], [0], [0], [1], [0, 0, 1, 1], [], []>} : vector<2x128xbf16>, vector<128x512xbf16>, vector<2x512xf32> -> vector<2x512xf32>
    %38 = arith.addf %33, %37 : vector<2x512xf32>
    %c14 = arith.constant 14 : index
    %c0_33 = arith.constant 0 : index
    %39 = vector.load %arg11[%c14, %c0_33] : memref<32x128xbf16, #tpu.memory_space<vmem>>, vector<2x128xbf16>
    %c7 = arith.constant 7 : index
    %c0_34 = arith.constant 0 : index
    %c0_35 = arith.constant 0 : index
    %40 = vector.load %arg7[%c7, %c0_34, %c0_35] : memref<16x128x512xbf16, #tpu.memory_space<vmem>>, vector<1x128x512xbf16>
    %41 = vector.shape_cast %40 : vector<1x128x512xbf16> to vector<128x512xbf16>
    %cst_36 = arith.constant dense<0.000000e+00> : vector<2x512xf32>
    %42 = tpu.matmul %39, %41, %cst_36 {dimension_numbers = #tpu.dot_dimension_numbers<[1], [0], [0], [1], [0, 0, 1, 1], [], []>} : vector<2x128xbf16>, vector<128x512xbf16>, vector<2x512xf32> -> vector<2x512xf32>
    %43 = arith.addf %38, %42 : vector<2x512xf32>
    %c16 = arith.constant 16 : index
    %c0_37 = arith.constant 0 : index
    %44 = vector.load %arg11[%c16, %c0_37] : memref<32x128xbf16, #tpu.memory_space<vmem>>, vector<2x128xbf16>
    %c8_38 = arith.constant 8 : index
    %c0_39 = arith.constant 0 : index
    %c0_40 = arith.constant 0 : index
    %45 = vector.load %arg7[%c8_38, %c0_39, %c0_40] : memref<16x128x512xbf16, #tpu.memory_space<vmem>>, vector<1x128x512xbf16>
    %46 = vector.shape_cast %45 : vector<1x128x512xbf16> to vector<128x512xbf16>
    %cst_41 = arith.constant dense<0.000000e+00> : vector<2x512xf32>
    %47 = tpu.matmul %44, %46, %cst_41 {dimension_numbers = #tpu.dot_dimension_numbers<[1], [0], [0], [1], [0, 0, 1, 1], [], []>} : vector<2x128xbf16>, vector<128x512xbf16>, vector<2x512xf32> -> vector<2x512xf32>
    %48 = arith.addf %43, %47 : vector<2x512xf32>
    %c18 = arith.constant 18 : index
    %c0_42 = arith.constant 0 : index
    %49 = vector.load %arg11[%c18, %c0_42] : memref<32x128xbf16, #tpu.memory_space<vmem>>, vector<2x128xbf16>
    %c9 = arith.constant 9 : index
    %c0_43 = arith.constant 0 : index
    %c0_44 = arith.constant 0 : index
    %50 = vector.load %arg7[%c9, %c0_43, %c0_44] : memref<16x128x512xbf16, #tpu.memory_space<vmem>>, vector<1x128x512xbf16>
    %51 = vector.shape_cast %50 : vector<1x128x512xbf16> to vector<128x512xbf16>
    %cst_45 = arith.constant dense<0.000000e+00> : vector<2x512xf32>
    %52 = tpu.matmul %49, %51, %cst_45 {dimension_numbers = #tpu.dot_dimension_numbers<[1], [0], [0], [1], [0, 0, 1, 1], [], []>} : vector<2x128xbf16>, vector<128x512xbf16>, vector<2x512xf32> -> vector<2x512xf32>
    %53 = arith.addf %48, %52 : vector<2x512xf32>
    %c20 = arith.constant 20 : index
    %c0_46 = arith.constant 0 : index
    %54 = vector.load %arg11[%c20, %c0_46] : memref<32x128xbf16, #tpu.memory_space<vmem>>, vector<2x128xbf16>
    %c10_47 = arith.constant 10 : index
    %c0_48 = arith.constant 0 : index
    %c0_49 = arith.constant 0 : index
    %55 = vector.load %arg7[%c10_47, %c0_48, %c0_49] : memref<16x128x512xbf16, #tpu.memory_space<vmem>>, vector<1x128x512xbf16>
    %56 = vector.shape_cast %55 : vector<1x128x512xbf16> to vector<128x512xbf16>
    %cst_50 = arith.constant dense<0.000000e+00> : vector<2x512xf32>
    %57 = tpu.matmul %54, %56, %cst_50 {dimension_numbers = #tpu.dot_dimension_numbers<[1], [0], [0], [1], [0, 0, 1, 1], [], []>} : vector<2x128xbf16>, vector<128x512xbf16>, vector<2x512xf32> -> vector<2x512xf32>
    %58 = arith.addf %53, %57 : vector<2x512xf32>
    %c22 = arith.constant 22 : index
    %c0_51 = arith.constant 0 : index
    %59 = vector.load %arg11[%c22, %c0_51] : memref<32x128xbf16, #tpu.memory_space<vmem>>, vector<2x128xbf16>
    %c11 = arith.constant 11 : index
    %c0_52 = arith.constant 0 : index
    %c0_53 = arith.constant 0 : index
    %60 = vector.load %arg7[%c11, %c0_52, %c0_53] : memref<16x128x512xbf16, #tpu.memory_space<vmem>>, vector<1x128x512xbf16>
    %61 = vector.shape_cast %60 : vector<1x128x512xbf16> to vector<128x512xbf16>
    %cst_54 = arith.constant dense<0.000000e+00> : vector<2x512xf32>
    %62 = tpu.matmul %59, %61, %cst_54 {dimension_numbers = #tpu.dot_dimension_numbers<[1], [0], [0], [1], [0, 0, 1, 1], [], []>} : vector<2x128xbf16>, vector<128x512xbf16>, vector<2x512xf32> -> vector<2x512xf32>
    %63 = arith.addf %58, %62 : vector<2x512xf32>
    %c24 = arith.constant 24 : index
    %c0_55 = arith.constant 0 : index
    %64 = vector.load %arg11[%c24, %c0_55] : memref<32x128xbf16, #tpu.memory_space<vmem>>, vector<2x128xbf16>
    %c12_56 = arith.constant 12 : index
    %c0_57 = arith.constant 0 : index
    %c0_58 = arith.constant 0 : index
    %65 = vector.load %arg7[%c12_56, %c0_57, %c0_58] : memref<16x128x512xbf16, #tpu.memory_space<vmem>>, vector<1x128x512xbf16>
    %66 = vector.shape_cast %65 : vector<1x128x512xbf16> to vector<128x512xbf16>
    %cst_59 = arith.constant dense<0.000000e+00> : vector<2x512xf32>
    %67 = tpu.matmul %64, %66, %cst_59 {dimension_numbers = #tpu.dot_dimension_numbers<[1], [0], [0], [1], [0, 0, 1, 1], [], []>} : vector<2x128xbf16>, vector<128x512xbf16>, vector<2x512xf32> -> vector<2x512xf32>
    %68 = arith.addf %63, %67 : vector<2x512xf32>
    %c26 = arith.constant 26 : index
    %c0_60 = arith.constant 0 : index
    %69 = vector.load %arg11[%c26, %c0_60] : memref<32x128xbf16, #tpu.memory_space<vmem>>, vector<2x128xbf16>
    %c13 = arith.constant 13 : index
    %c0_61 = arith.constant 0 : index
    %c0_62 = arith.constant 0 : index
    %70 = vector.load %arg7[%c13, %c0_61, %c0_62] : memref<16x128x512xbf16, #tpu.memory_space<vmem>>, vector<1x128x512xbf16>
    %71 = vector.shape_cast %70 : vector<1x128x512xbf16> to vector<128x512xbf16>
    %cst_63 = arith.constant dense<0.000000e+00> : vector<2x512xf32>
    %72 = tpu.matmul %69, %71, %cst_63 {dimension_numbers = #tpu.dot_dimension_numbers<[1], [0], [0], [1], [0, 0, 1, 1], [], []>} : vector<2x128xbf16>, vector<128x512xbf16>, vector<2x512xf32> -> vector<2x512xf32>
    %73 = arith.addf %68, %72 : vector<2x512xf32>
    %c28 = arith.constant 28 : index
    %c0_64 = arith.constant 0 : index
    %74 = vector.load %arg11[%c28, %c0_64] : memref<32x128xbf16, #tpu.memory_space<vmem>>, vector<2x128xbf16>
    %c14_65 = arith.constant 14 : index
    %c0_66 = arith.constant 0 : index
    %c0_67 = arith.constant 0 : index
    %75 = vector.load %arg7[%c14_65, %c0_66, %c0_67] : memref<16x128x512xbf16, #tpu.memory_space<vmem>>, vector<1x128x512xbf16>
    %76 = vector.shape_cast %75 : vector<1x128x512xbf16> to vector<128x512xbf16>
    %cst_68 = arith.constant dense<0.000000e+00> : vector<2x512xf32>
    %77 = tpu.matmul %74, %76, %cst_68 {dimension_numbers = #tpu.dot_dimension_numbers<[1], [0], [0], [1], [0, 0, 1, 1], [], []>} : vector<2x128xbf16>, vector<128x512xbf16>, vector<2x512xf32> -> vector<2x512xf32>
    %78 = arith.addf %73, %77 : vector<2x512xf32>
    %c30 = arith.constant 30 : index
    %c0_69 = arith.constant 0 : index
    %79 = vector.load %arg11[%c30, %c0_69] : memref<32x128xbf16, #tpu.memory_space<vmem>>, vector<2x128xbf16>
    %c15 = arith.constant 15 : index
    %c0_70 = arith.constant 0 : index
    %c0_71 = arith.constant 0 : index
    %80 = vector.load %arg7[%c15, %c0_70, %c0_71] : memref<16x128x512xbf16, #tpu.memory_space<vmem>>, vector<1x128x512xbf16>
    %81 = vector.shape_cast %80 : vector<1x128x512xbf16> to vector<128x512xbf16>
    %cst_72 = arith.constant dense<0.000000e+00> : vector<2x512xf32>
    %82 = tpu.matmul %79, %81, %cst_72 {dimension_numbers = #tpu.dot_dimension_numbers<[1], [0], [0], [1], [0, 0, 1, 1], [], []>} : vector<2x128xbf16>, vector<128x512xbf16>, vector<2x512xf32> -> vector<2x512xf32>
    %83 = arith.addf %78, %82 : vector<2x512xf32>
    %c0_73 = arith.constant 0 : index
    %c0_74 = arith.constant 0 : index
    %84 = vector.load %arg8[%c0_73, %c0_74] : memref<1x512xf32, #tpu.memory_space<vmem>>, vector<1x512xf32>
    %85 = vector.broadcast %84 : vector<1x512xf32> to vector<2x512xf32>
    %86 = arith.addf %83, %85 : vector<2x512xf32>
    %cst_75 = arith.constant 0.000000e+00 : f32
    %87 = vector.broadcast %cst_75 : f32 to vector<2x512xf32>
    %88 = arith.maximumf %86, %87 : vector<2x512xf32>
    %89 = arith.truncf %88 : vector<2x512xf32> to vector<2x512xbf16>
    %c0_76 = arith.constant 0 : index
    %c0_77 = arith.constant 0 : index
    %c0_78 = arith.constant 0 : index
    %90 = vector.load %arg10[%c0_76, %c0_77, %c0_78] : memref<1x2x128xf32, #tpu.memory_space<vmem>>, vector<1x2x128xf32>
    %91 = vector.shape_cast %90 : vector<1x2x128xf32> to vector<2x128xf32>
    %c0_79 = arith.constant 0 : index
    %c0_80 = arith.constant 0 : index
    %92 = vector.load %arg9[%c0_79, %c0_80] : memref<512x128xbf16, #tpu.memory_space<vmem>>, vector<512x128xbf16>
    %cst_81 = arith.constant dense<0.000000e+00> : vector<2x128xf32>
    %93 = tpu.matmul %89, %92, %cst_81 {dimension_numbers = #tpu.dot_dimension_numbers<[1], [0], [0], [1], [0, 0, 1, 1], [], []>} : vector<2x512xbf16>, vector<512x128xbf16>, vector<2x128xf32> -> vector<2x128xf32>
    %94 = arith.addf %91, %93 : vector<2x128xf32>
    %c0_82 = arith.constant 0 : index
    %c0_83 = arith.constant 0 : index
    %c0_84 = arith.constant 0 : index
    %95 = vector.load %arg10[%c0_82, %c0_83, %c0_84] : memref<1x2x128xf32, #tpu.memory_space<vmem>>, vector<1x2x128xf32>
    %96 = vector.shape_cast %95 : vector<1x2x128xf32> to vector<2x128xf32>
    %97 = vector.shape_cast %94 : vector<2x128xf32> to vector<1x2x128xf32>
    tpu.vector_store %arg10[%c0_82, %c0_83, %c0_84], %97 {strides = array<i32>} : memref<1x2x128xf32, #tpu.memory_space<vmem>>, vector<1x2x128xf32>,
    return
  }
  func.func @transform_0(%arg0: i32, %arg1: i32) -> (i32, i32) {
    %c0_i32 = arith.constant 0 : i32
    %c0_i32_0 = arith.constant 0 : i32
    %c0_i32_1 = arith.constant 0 : i32
    return %c0_i32, %c0_i32_0 : i32, i32
  }
  func.func @transform_1(%arg0: i32, %arg1: i32) -> (i32, i32) {
    %c0_i32 = arith.constant 0 : i32
    %c0_i32_0 = arith.constant 0 : i32
    %c0_i32_1 = arith.constant 0 : i32
    return %c0_i32, %c0_i32_0 : i32, i32
  }
  func.func @transform_2(%arg0: i32, %arg1: i32) -> (i32, i32) {
    %c0_i32 = arith.constant 0 : i32
    %c0_i32_0 = arith.constant 0 : i32
    %c0_i32_1 = arith.constant 0 : i32
    return %c0_i32, %c0_i32_0 : i32, i32
  }
  func.func @transform_3(%arg0: i32, %arg1: i32) -> (i32, i32) {
    %c0_i32 = arith.constant 0 : i32
    %c0_i32_0 = arith.constant 0 : i32
    %c0_i32_1 = arith.constant 0 : i32
    return %c0_i32, %c0_i32_0 : i32, i32
  }
  func.func @transform_4(%arg0: i32, %arg1: i32) -> (i32, i32) {
    %c0_i32 = arith.constant 0 : i32
    %c0_i32_0 = arith.constant 0 : i32
    %c0_i32_1 = arith.constant 0 : i32
    return %c0_i32, %c0_i32_0 : i32, i32
  }
  func.func @transform_5(%arg0: i32, %arg1: i32) -> (i32, i32, i32) {
    %c1_i32 = arith.constant 1 : i32
    %0 = arith.muli %arg0, %c1_i32 : i32
    %1 = arith.addi %0, %arg1 : i32
    %c0_i32 = arith.constant 0 : i32
    %c0_i32_0 = arith.constant 0 : i32
    %c0_i32_1 = arith.constant 0 : i32
    return %c0_i32, %c0_i32_0, %1 : i32, i32, i32
  }
  func.func @transform_6(%arg0: i32, %arg1: i32) -> (i32, i32) {
    %c1_i32 = arith.constant 1 : i32
    %0 = arith.muli %arg0, %c1_i32 : i32
    %1 = arith.addi %0, %arg1 : i32
    %c0_i32 = arith.constant 0 : i32
    %c0_i32_0 = arith.constant 0 : i32
    return %c0_i32, %1 : i32, i32
  }
  func.func @transform_7(%arg0: i32, %arg1: i32) -> (i32, i32) {
    %c1_i32 = arith.constant 1 : i32
    %0 = arith.muli %arg0, %c1_i32 : i32
    %1 = arith.addi %0, %arg1 : i32
    %c0_i32 = arith.constant 0 : i32
    %c0_i32_0 = arith.constant 0 : i32
    return %1, %c0_i32 : i32, i32
  }
  func.func @transform_8(%arg0: i32, %arg1: i32) -> (i32, i32, i32) {
    %c0_i32 = arith.constant 0 : i32
    %c0_i32_0 = arith.constant 0 : i32
    %c0_i32_1 = arith.constant 0 : i32
    return %arg0, %c0_i32, %c0_i32_0 : i32, i32, i32
  }
}

</mosaic_0001>

<llo_original>
// kernel: forward.1
$region0: #{forward.1}
  #allocation0 [shape = 'u32[]', space=smem, size = 0x4, offset = 0x4, fixed_abs, tag = 'smem constant byte address 0x4 - core index']
  #allocation1 [shape = 'u32[144,128]{1,0:T(1,128)}', space=vmem, size = 0x12000, scoped, tag = 'internal scratch']
  #allocation2 [shape = 'bf16[32,128]{1,0:T(16,128)(2,1)}', space=vmem, size = 0x2000, scoped, tag = 'scratch operand']
  %s0 = inlined_call_operand.vmem [shape: f32[512,8], index: 0, kind: input, shape index: {}]
  %s1 = inlined_call_operand.hbm [shape: f32[32,512], index: 1, kind: input, shape index: {}]
  %s2 = inlined_call_operand.hbm [shape: f32[8,128], index: 2, kind: input, shape index: {}]
  %s3 = inlined_call_operand.hbm [shape: f32[1,128], index: 3, kind: input, shape index: {}]
  %s4 = inlined_call_operand.hbm [shape: f32[1,128], index: 4, kind: input, shape index: {}]
  %s5 = inlined_call_operand.hbm [shape: bf16[16,128,1024], index: 5, kind: input, shape index: {}]
  %s6 = inlined_call_operand.hbm [shape: f32[1,1024], index: 6, kind: input, shape index: {}]
  %s7 = inlined_call_operand.hbm [shape: bf16[1024,128], index: 7, kind: input, shape index: {}]
  %s8 = inlined_call_operand.vmem [shape: f32[2,2,128], index: 8, kind: output, shape index: {}]
  %s9 = sld [smem:[#allocation0]]
  $region97: #{forward.1} parent=0
    _
  %s11 = ssub.s32 1, %s9
  %s12 = scalar_select 0, %s11, %s9
  $region1: #{forward.1} parent=0
    #allocation3 [shape = 'u8[65536]{0}', space=vmem, size = 0x10000, scoped, tag = 'input window, operand 1, single buffered']
    #allocation4 [shape = 's32[2]{0}', space=sflag, size = 0x8, scoped, tag = 'scoped memory for forward.1']
    #allocation5 [shape = 'u8[4096]{0}', space=vmem, size = 0x1000, scoped, tag = 'input window, operand 2, single buffered']
    #allocation6 [shape = 's32[1]{0}', space=sflag, size = 0x4, scoped, tag = 'scoped memory for forward.1']
    #allocation7 [shape = 'u8[512]{0}', space=vmem, size = 0x400, scoped, tag = 'input window, operand 3, single buffered']
    #allocation8 [shape = 'u8[512]{0}', space=vmem, size = 0x400, scoped, tag = 'input window, operand 4, single buffered']
    #allocation9 [shape = 's32[1]{0}', space=sflag, size = 0x4, scoped, tag = 'scoped memory for forward.1']
    #allocation10 [shape = 'u8[4194304]{0}', space=vmem, size = 0x400000, scoped, tag = 'input window, operand 5']
    #allocation11 [shape = 'u8[4096]{0}', space=vmem, size = 0x1000, scoped, tag = 'input window, operand 6']
    #allocation12 [shape = 'u8[262144]{0}', space=vmem, size = 0x40000, scoped, tag = 'input window, operand 7']
    %13 = vsyncpa [#allocation4], 0
    %14 = vsyncpa [#allocation6], 0
    %15 = vsyncpa [#allocation9], 0
    loop: start=0, step=1, limit=4
    $region2: #{forward.1} parent=1 // loop_pre_header
      _
    $region3: #{forward.1} parent=1 // loop_header
      %s17 = sphi 0, %s21
      %p18 = scmp.ge.s32.totalorder %s17, 4
      %s24 = sphi 0, %s36
      %s25 = sphi 0, %s32
      %s26 = sphi 0, %s24
      %s27 = sphi 0, %s25
      %s28 = sphi 0, %s26
      %s29 = sphi 0, %s27
      %s37 = sphi 0, %s37
      %s39 = sphi 0, %s37
      %s40 = sphi 0, %s39
      %s54 = sphi 0, %s40
      %s58 = sphi 0, %s58
      %s60 = sphi 0, %s58
      %s61 = sphi 0, %s60
      %s75 = sphi 0, %s61
      %s79 = sphi 0, %s79
      %s81 = sphi 0, %s79
      %s82 = sphi 0, %s81
      %s96 = sphi 0, %s82
      %s100 = sphi 0, %s100
      %s102 = sphi 0, %s100
      %s103 = sphi 0, %s102
      %s117 = sphi 0, %s103
      %s121 = sphi 0, %s121
      %s123 = sphi 0, %s121
      %s124 = sphi 0, %s123
      %s138 = sphi 0, %s124
      %s146 = sphi 0, %s148
      %s149 = sphi 0, %s146
      %s150 = sphi 0, %s149
      %s166 = sphi 0, %s150
      %s174 = sphi 0, %s176
      %s177 = sphi 0, %s174
      %s178 = sphi 0, %s177
      %s194 = sphi 0, %s178
      %s202 = sphi 0, %s204
      %s205 = sphi 0, %s202
      %s206 = sphi 0, %s205
      %s222 = sphi 0, %s206
      %s228 = sphi 0, %s230
      %s231 = sphi 0, %s228
      %s232 = sphi 0, %s231
      %s248 = sphi 0, %s232
    $region4: #{forward.1} parent=1 // loop_header_branch
      %20 = sbr.rel (%p18) target = $region8
    $region5: #{forward.1} parent=1 // loop_body
      %s22 = ssub.s32 %s17, 1
      %s23 = ssub.s32 %s17, 2
      %s30 = sadd.s32 1, %s25
      %p31 = scmp.ge.s32.totalorder %s30, 1
      %s32 = scalar_select %p31, 0, %s30
      %s33 = sadd.s32 1, %s24
      %s34 = scalar_select %p31, %s33, %s24
      %p35 = scmp.ge.s32.totalorder %s34, 2
      %s36 = scalar_select %p35, 0, %s34
      %s38 = sadd.s32 %s37, 1
      %p41 = scmp.eq.s32.totalorder %s17, 1
      %p42 = scmp.ne.s32.totalorder %s37, %s39
      %p43 = scmp.eq.s32.totalorder %s17, 0
      %p44 = por %p42, %p43
      %p45 = scmp.ne.s32.totalorder %s37, %s39
      %p46 = scmp.eq.s32.totalorder %s22, 1
      %p47 = por %p45, %p46
      %p48 = scmp.ne.s32.totalorder %s39, %s40
      %p49 = scmp.eq.s32.totalorder %s22, 0
      %p50 = por %p48, %p49
      %p51 = scmp.ne.s32.totalorder %s39, %s40
      %p52 = scmp.eq.s32.totalorder %s23, 1
      %p53 = por %p51, %p52
      %p55 = scmp.ne.s32.totalorder %s40, %s54
      %p56 = scmp.eq.s32.totalorder %s23, 0
      %p57 = por %p55, %p56
      %s59 = sadd.s32 %s58, 1
      %p62 = scmp.eq.s32.totalorder %s17, 1
      %p63 = scmp.ne.s32.totalorder %s58, %s60
      %p64 = scmp.eq.s32.totalorder %s17, 0
      %p65 = por %p63, %p64
      %p66 = scmp.ne.s32.totalorder %s58, %s60
      %p67 = scmp.eq.s32.totalorder %s22, 1
      %p68 = por %p66, %p67
      %p69 = scmp.ne.s32.totalorder %s60, %s61
      %p70 = scmp.eq.s32.totalorder %s22, 0
      %p71 = por %p69, %p70
      %p72 = scmp.ne.s32.totalorder %s60, %s61
      %p73 = scmp.eq.s32.totalorder %s23, 1
      %p74 = por %p72, %p73
      %p76 = scmp.ne.s32.totalorder %s61, %s75
      %p77 = scmp.eq.s32.totalorder %s23, 0
      %p78 = por %p76, %p77
      %s80 = sadd.s32 %s79, 1
      %p83 = scmp.eq.s32.totalorder %s17, 1
      %p84 = scmp.ne.s32.totalorder %s79, %s81
      %p85 = scmp.eq.s32.totalorder %s17, 0
      %p86 = por %p84, %p85
      %p87 = scmp.ne.s32.totalorder %s79, %s81
      %p88 = scmp.eq.s32.totalorder %s22, 1
      %p89 = por %p87, %p88
      %p90 = scmp.ne.s32.totalorder %s81, %s82
      %p91 = scmp.eq.s32.totalorder %s22, 0
      %p92 = por %p90, %p91
      %p93 = scmp.ne.s32.totalorder %s81, %s82
      %p94 = scmp.eq.s32.totalorder %s23, 1
      %p95 = por %p93, %p94
      %p97 = scmp.ne.s32.totalorder %s82, %s96
      %p98 = scmp.eq.s32.totalorder %s23, 0
      %p99 = por %p97, %p98
      %s101 = sadd.s32 %s100, 1
      %p104 = scmp.eq.s32.totalorder %s17, 1
      %p105 = scmp.ne.s32.totalorder %s100, %s102
      %p106 = scmp.eq.s32.totalorder %s17, 0
      %p107 = por %p105, %p106
      %p108 = scmp.ne.s32.totalorder %s100, %s102
      %p109 = scmp.eq.s32.totalorder %s22, 1
      %p110 = por %p108, %p109
      %p111 = scmp.ne.s32.totalorder %s102, %s103
      %p112 = scmp.eq.s32.totalorder %s22, 0
      %p113 = por %p111, %p112
      %p114 = scmp.ne.s32.totalorder %s102, %s103
      %p115 = scmp.eq.s32.totalorder %s23, 1
      %p116 = por %p114, %p115
      %p118 = scmp.ne.s32.totalorder %s103, %s117
      %p119 = scmp.eq.s32.totalorder %s23, 0
      %p120 = por %p118, %p119
      %s122 = sadd.s32 %s121, 1
      %p125 = scmp.eq.s32.totalorder %s17, 1
      %p126 = scmp.ne.s32.totalorder %s121, %s123
      %p127 = scmp.eq.s32.totalorder %s17, 0
      %p128 = por %p126, %p127
      %p129 = scmp.ne.s32.totalorder %s121, %s123
      %p130 = scmp.eq.s32.totalorder %s22, 1
      %p131 = por %p129, %p130
      %p132 = scmp.ne.s32.totalorder %s123, %s124
      %p133 = scmp.eq.s32.totalorder %s22, 0
      %p134 = por %p132, %p133
      %p135 = scmp.ne.s32.totalorder %s123, %s124
      %p136 = scmp.eq.s32.totalorder %s23, 1
      %p137 = por %p135, %p136
      %p139 = scmp.ne.s32.totalorder %s124, %s138
      %p140 = scmp.eq.s32.totalorder %s23, 0
      %p141 = por %p139, %p140
      %s142 = sadd.s32 %s24, %s25
      %s143 = sadd.s32 %s36, %s32
      %s144 = ssub.s32 %s142, %s143
      %p145 = scmp.eq.s32.totalorder %s144, 0
      %s147 = sadd.s32 %s146, 1
      %s148 = scalar_select %p145, %s146, %s147
      %p151 = pneg %p145
      %p152 = scmp.eq.s32.totalorder %s17, 1
      %p153 = por %p151, %p152
      %p154 = scmp.ne.s32.totalorder %s146, %s149
      %p155 = scmp.eq.s32.totalorder %s17, 0
      %p156 = por %p154, %p155
      %p157 = scmp.ne.s32.totalorder %s146, %s149
      %p158 = scmp.eq.s32.totalorder %s22, 1
      %p159 = por %p157, %p158
      %p160 = scmp.ne.s32.totalorder %s149, %s150
      %p161 = scmp.eq.s32.totalorder %s22, 0
      %p162 = por %p160, %p161
      %p163 = scmp.ne.s32.totalorder %s149, %s150
      %p164 = scmp.eq.s32.totalorder %s23, 1
      %p165 = por %p163, %p164
      %p167 = scmp.ne.s32.totalorder %s150, %s166
      %p168 = scmp.eq.s32.totalorder %s23, 0
      %p169 = por %p167, %p168
      %s170 = sadd.s32 %s24, %s25
      %s171 = sadd.s32 %s36, %s32
      %s172 = ssub.s32 %s170, %s171
      %p173 = scmp.eq.s32.totalorder %s172, 0
      %s175 = sadd.s32 %s174, 1
      %s176 = scalar_select %p173, %s174, %s175
      %p179 = pneg %p173
      %p180 = scmp.eq.s32.totalorder %s17, 1
      %p181 = por %p179, %p180
      %p182 = scmp.ne.s32.totalorder %s174, %s177
      %p183 = scmp.eq.s32.totalorder %s17, 0
      %p184 = por %p182, %p183
      %p185 = scmp.ne.s32.totalorder %s174, %s177
      %p186 = scmp.eq.s32.totalorder %s22, 1
      %p187 = por %p185, %p186
      %p188 = scmp.ne.s32.totalorder %s177, %s178
      %p189 = scmp.eq.s32.totalorder %s22, 0
      %p190 = por %p188, %p189
      %p191 = scmp.ne.s32.totalorder %s177, %s178
      %p192 = scmp.eq.s32.totalorder %s23, 1
      %p193 = por %p191, %p192
      %p195 = scmp.ne.s32.totalorder %s178, %s194
      %p196 = scmp.eq.s32.totalorder %s23, 0
      %p197 = por %p195, %p196
      %s198 = sadd.s32 %s24, %s25
      %s199 = sadd.s32 %s36, %s32
      %s200 = ssub.s32 %s198, %s199
      %p201 = scmp.eq.s32.totalorder %s200, 0
      %s203 = sadd.s32 %s202, 1
      %s204 = scalar_select %p201, %s202, %s203
      %p207 = pneg %p201
      %p208 = scmp.eq.s32.totalorder %s17, 1
      %p209 = por %p207, %p208
      %p210 = scmp.ne.s32.totalorder %s202, %s205
      %p211 = scmp.eq.s32.totalorder %s17, 0
      %p212 = por %p210, %p211
      %p213 = scmp.ne.s32.totalorder %s202, %s205
      %p214 = scmp.eq.s32.totalorder %s22, 1
      %p215 = por %p213, %p214
      %p216 = scmp.ne.s32.totalorder %s205, %s206
      %p217 = scmp.eq.s32.totalorder %s22, 0
      %p218 = por %p216, %p217
      %p219 = scmp.ne.s32.totalorder %s205, %s206
      %p220 = scmp.eq.s32.totalorder %s23, 1
      %p221 = por %p219, %p220
      %p223 = scmp.ne.s32.totalorder %s206, %s222
      %p224 = scmp.eq.s32.totalorder %s23, 0
      %p225 = por %p223, %p224
      %s226 = ssub.s32 %s24, %s36
      %p227 = scmp.eq.s32.totalorder %s226, 0
      %s229 = sadd.s32 %s228, 1
      %s230 = scalar_select %p227, %s228, %s229
      %p233 = pneg %p227
      %p234 = scmp.eq.s32.totalorder %s17, 1
      %p235 = por %p233, %p234
      %p236 = scmp.ne.s32.totalorder %s228, %s231
      %p237 = scmp.eq.s32.totalorder %s17, 0
      %p238 = por %p236, %p237
      %p239 = scmp.ne.s32.totalorder %s228, %s231
      %p240 = scmp.eq.s32.totalorder %s22, 1
      %p241 = por %p239, %p240
      %p242 = scmp.ne.s32.totalorder %s231, %s232
      %p243 = scmp.eq.s32.totalorder %s22, 0
      %p244 = por %p242, %p243
      %p245 = scmp.ne.s32.totalorder %s231, %s232
      %p246 = scmp.eq.s32.totalorder %s23, 1
      %p247 = por %p245, %p246
      %p249 = scmp.ne.s32.totalorder %s232, %s248
      %p250 = scmp.eq.s32.totalorder %s23, 0
      %p251 = por %p249, %p250
      %p252 = scmp.le.s32.totalorder 1, %s17
      %p253 = scmp.lt.s32.totalorder %s17, 3
      %p254 = pnand %p252, %p253
      %p255 = pneg %p254
      // Predicated region
      $region9: #{forward.1} parent=5 // pred_check
        _
      $region10: #{forward.1} parent=5 // pred_check_branch
        %257 = sbr.rel (%p254) target = $region12
      $region11: #{forward.1} parent=5 // pred_region
        %s258 = ssub.s32 %s17, 1
        // Predicated region
        $region13: #{forward.1} parent=11 // pred_check
          %p259 = pneg %p50
        $region14: #{forward.1} parent=11 // pred_check_branch
          %261 = sbr.rel (%p259) target = $region16
        $region15: #{forward.1} parent=11 // pred_region
          _
        $region16: #{forward.1} parent=11 // pred_fallthru
          _
        // Predicated region
        $region17: #{forward.1} parent=11 // pred_check
          %p262 = pneg %p71
        $region18: #{forward.1} parent=11 // pred_check_branch
          %264 = sbr.rel (%p262) target = $region20
        $region19: #{forward.1} parent=11 // pred_region
          %s266 = ssub.s32 2048, 2048
          %267 = vsyncadd [#allocation4], %s266
          %s268 = sshll.u32 [#allocation3], 4
          %s269 = int_to_ptr.vmem [resolvable:$true] %s268
          %274 = dma.hbm_to_vmem [thread:$0]  %s1, 2048, %s269, [#allocation4], 512, 512, 32
        $region20: #{forward.1} parent=11 // pred_fallthru
          _
        // Predicated region
        $region21: #{forward.1} parent=11 // pred_check
          %p275 = pneg %p92
        $region22: #{forward.1} parent=11 // pred_check_branch
          %277 = sbr.rel (%p275) target = $region24
        $region23: #{forward.1} parent=11 // pred_region
          %s279 = ssub.s32 128, 128
          %280 = vsyncadd [#allocation6], %s279
          %s282 = sshll.u32 [#allocation5], 4
          %s283 = int_to_ptr.vmem [resolvable:$true] %s282
          %285 = dma.hbm_to_vmem [thread:$0]  %s2, 128, %s283, [#allocation6]
        $region24: #{forward.1} parent=11 // pred_fallthru
          _
        // Predicated region
        $region25: #{forward.1} parent=11 // pred_check
          %p286 = pneg %p113
        $region26: #{forward.1} parent=11 // pred_check_branch
          %288 = sbr.rel (%p286) target = $region28
        $region27: #{forward.1} parent=11 // pred_region
          %s290 = ssub.s32 16, 16
          %291 = vsyncadd [#allocation6], %s290
          %s293 = sshll.u32 [#allocation7], 4
          %s294 = int_to_ptr.vmem [resolvable:$true] %s293
          %296 = dma.hbm_to_vmem [thread:$0]  %s3, 16, %s294, [#allocation6]
        $region28: #{forward.1} parent=11 // pred_fallthru
          _
        // Predicated region
        $region29: #{forward.1} parent=11 // pred_check
          %p297 = pneg %p134
        $region30: #{forward.1} parent=11 // pred_check_branch
          %299 = sbr.rel (%p297) target = $region32
        $region31: #{forward.1} parent=11 // pred_region
          %s301 = ssub.s32 16, 16
          %302 = vsyncadd [#allocation9], %s301
          %s304 = sshll.u32 [#allocation8], 4
          %s305 = int_to_ptr.vmem [resolvable:$true] %s304
          %307 = dma.hbm_to_vmem [thread:$0]  %s4, 16, %s305, [#allocation9]
        $region32: #{forward.1} parent=11 // pred_fallthru
          _
      $region12: #{forward.1} parent=5 // pred_fallthru
        _
      %p308 = scmp.lt.s32.totalorder %s17, 2
      // Predicated region
      $region33: #{forward.1} parent=5 // pred_check
        %p309 = pneg %p308
      $region34: #{forward.1} parent=5 // pred_check_branch
        %311 = sbr.rel (%p309) target = $region36
      $region35: #{forward.1} parent=5 // pred_region
        // Predicated region
        $region37: #{forward.1} parent=35 // pred_check
          %p312 = pneg %p156
        $region38: #{forward.1} parent=35 // pred_check_branch
          %314 = sbr.rel (%p312) target = $region40
        $region39: #{forward.1} parent=35 // pred_region
          %s315 = sand.u32 %s17, 1
          %s316 = scalar_lea.sflag [#allocation4], %s315
          %s317 = sand.u32 %s146, 1
          %s318 = smul.addr %s317, 4096
          %s319 = scalar_lea.vmem [#allocation10], %s318
          %s320 = sadd.s32 %s24, %s25
          %s321 = smul.u32 4, %s320
          %s323 = ssub.s32 65536, 65536
          %324 = vsyncadd %s316, %s323
          %s325 = smul.addr %s321, 64
          %s326 = scalar_lea.hbm %s5, %s325
          %s327 = sshll.u32 %s319, 4
          %s328 = int_to_ptr.vmem [resolvable:$true] %s327
          %333 = dma.hbm_to_vmem [thread:$0]  %s326, 65536, %s328, %s316, 512, 256, 16
        $region40: #{forward.1} parent=35 // pred_fallthru
          _
        // Predicated region
        $region41: #{forward.1} parent=35 // pred_check
          %p334 = pneg %p184
        $region42: #{forward.1} parent=35 // pred_check_branch
          %336 = sbr.rel (%p334) target = $region44
        $region43: #{forward.1} parent=35 // pred_region
          %s337 = sand.u32 %s17, 1
          %s338 = scalar_lea.sflag [#allocation4], %s337
          %s339 = sand.u32 %s174, 1
          %s340 = smul.addr %s339, 4
          %s341 = scalar_lea.vmem [#allocation11], %s340
          %s342 = sadd.s32 %s24, %s25
          %s343 = smul.u32 4, %s342
          %s345 = ssub.s32 64, 64
          %346 = vsyncadd %s338, %s345
          %s347 = smul.addr %s343, 16
          %s348 = scalar_lea.hbm %s6, %s347
          %s350 = sshll.u32 %s341, 4
          %s351 = int_to_ptr.vmem [resolvable:$true] %s350
          %353 = dma.hbm_to_vmem [thread:$0]  %s348, 64, %s351, %s338
        $region44: #{forward.1} parent=35 // pred_fallthru
          _
        // Predicated region
        $region45: #{forward.1} parent=35 // pred_check
          %p354 = pneg %p212
        $region46: #{forward.1} parent=35 // pred_check_branch
          %356 = sbr.rel (%p354) target = $region48
        $region47: #{forward.1} parent=35 // pred_region
          %s357 = sand.u32 %s17, 1
          %s358 = scalar_lea.sflag [#allocation4], %s357
          %s359 = sand.u32 %s202, 1
          %s360 = smul.addr %s359, 256
          %s361 = scalar_lea.vmem [#allocation12], %s360
          %s362 = sadd.s32 %s24, %s25
          %s363 = smul.u32 64, %s362
          %s365 = ssub.s32 4096, 4096
          %366 = vsyncadd %s358, %s365
          %s367 = smul.addr %s363, 64
          %s368 = scalar_lea.hbm %s7, %s367
          %s369 = sshll.u32 %s361, 4
          %s370 = int_to_ptr.vmem [resolvable:$true] %s369
          %375 = dma.hbm_to_vmem [thread:$0]  %s368, 4096, %s370, %s358, 64, 64, 4
        $region48: #{forward.1} parent=35 // pred_fallthru
          _
      $region36: #{forward.1} parent=5 // pred_fallthru
        _
      %p376 = scmp.le.s32.totalorder 1, %s17
      %p377 = scmp.lt.s32.totalorder %s17, 3
      %p378 = pnand %p376, %p377
      %p379 = pneg %p378
      // Predicated region
      $region49: #{forward.1} parent=5 // pred_check
        _
      $region50: #{forward.1} parent=5 // pred_check_branch
        %381 = sbr.rel (%p378) target = $region52
      $region51: #{forward.1} parent=5 // pred_region
        %s382 = ssub.s32 %s17, 1
        // Predicated region
        $region53: #{forward.1} parent=51 // pred_check
          %p383 = pneg %p71
        $region54: #{forward.1} parent=51 // pred_check_branch
          %385 = sbr.rel (%p383) target = $region56
        $region55: #{forward.1} parent=51 // pred_region
          %386 = dma.done [#allocation4], 2048
        $region56: #{forward.1} parent=51 // pred_fallthru
          _
        // Predicated region
        $region57: #{forward.1} parent=51 // pred_check
          %p387 = pneg %p92
        $region58: #{forward.1} parent=51 // pred_check_branch
          %389 = sbr.rel (%p387) target = $region60
        $region59: #{forward.1} parent=51 // pred_region
          %390 = dma.done [#allocation6], 128
        $region60: #{forward.1} parent=51 // pred_fallthru
          _
        // Predicated region
        $region61: #{forward.1} parent=51 // pred_check
          %p391 = pneg %p113
        $region62: #{forward.1} parent=51 // pred_check_branch
          %393 = sbr.rel (%p391) target = $region64
        $region63: #{forward.1} parent=51 // pred_region
          %394 = dma.done [#allocation6], 16
        $region64: #{forward.1} parent=51 // pred_fallthru
          _
        // Predicated region
        $region65: #{forward.1} parent=51 // pred_check
          %p395 = pneg %p134
        $region66: #{forward.1} parent=51 // pred_check_branch
          %397 = sbr.rel (%p395) target = $region68
        $region67: #{forward.1} parent=51 // pred_region
          %398 = dma.done [#allocation9], 16
        $region68: #{forward.1} parent=51 // pred_fallthru
          _
        %s399 = sand.u32 %s22, 1
        %s400 = scalar_lea.sflag [#allocation4], %s399
        %s401 = sand.u32 %s149, 1
        %s402 = smul.addr %s401, 4096
        %s403 = scalar_lea.vmem [#allocation10], %s402
        // Predicated region
        $region69: #{forward.1} parent=51 // pred_check
          %p404 = pneg %p162
        $region70: #{forward.1} parent=51 // pred_check_branch
          %406 = sbr.rel (%p404) target = $region72
        $region71: #{forward.1} parent=51 // pred_region
          %407 = dma.done %s400, 65536
        $region72: #{forward.1} parent=51 // pred_fallthru
          _
        %s408 = sand.u32 %s22, 1
        %s409 = scalar_lea.sflag [#allocation4], %s408
        %s410 = sand.u32 %s177, 1
        %s411 = smul.addr %s410, 4
        %s412 = scalar_lea.vmem [#allocation11], %s411
        // Predicated region
        $region73: #{forward.1} parent=51 // pred_check
          %p413 = pneg %p190
        $region74: #{forward.1} parent=51 // pred_check_branch
          %415 = sbr.rel (%p413) target = $region76
        $region75: #{forward.1} parent=51 // pred_region
          %416 = dma.done %s409, 64
        $region76: #{forward.1} parent=51 // pred_fallthru
          _
        %s417 = sand.u32 %s22, 1
        %s418 = scalar_lea.sflag [#allocation4], %s417
        %s419 = sand.u32 %s205, 1
        %s420 = smul.addr %s419, 256
        %s421 = scalar_lea.vmem [#allocation12], %s420
        // Predicated region
        $region77: #{forward.1} parent=51 // pred_check
          %p422 = pneg %p218
        $region78: #{forward.1} parent=51 // pred_check_branch
          %424 = sbr.rel (%p422) target = $region80
        $region79: #{forward.1} parent=51 // pred_region
          %425 = dma.done %s418, 4096
        $region80: #{forward.1} parent=51 // pred_fallthru
          _
        %p426 = pneg %p50
        %p427 = pneg %p47
        %p428 = pneg %p71
        %p429 = pneg %p68
        %p430 = pneg %p92
        %p431 = pneg %p89
        %p432 = pneg %p113
        %p433 = pneg %p110
        %p434 = pneg %p134
        %p435 = pneg %p131
        %s436 = sand.u32 %s22, 1
        %s437 = scalar_lea.sflag [#allocation4], %s436
        %s438 = sand.u32 %s149, 1
        %s439 = smul.addr %s438, 4096
        %s440 = scalar_lea.vmem [#allocation10], %s439
        %p441 = pneg %p162
        %p442 = pneg %p159
        %s443 = sand.u32 %s22, 1
        %s444 = scalar_lea.sflag [#allocation4], %s443
        %s445 = sand.u32 %s177, 1
        %s446 = smul.addr %s445, 4
        %s447 = scalar_lea.vmem [#allocation11], %s446
        %p448 = pneg %p190
        %p449 = pneg %p187
        %s450 = sand.u32 %s22, 1
        %s451 = scalar_lea.sflag [#allocation4], %s450
        %s452 = sand.u32 %s205, 1
        %s453 = smul.addr %s452, 256
        %s454 = scalar_lea.vmem [#allocation12], %s453
        %p455 = pneg %p218
        %p456 = pneg %p215
        %p457 = pneg %p244
        %p458 = pneg %p241
        %p459 = scmp.lt.s32.totalorder %s26, 1
        %s460 = scalar_select %p459, %s26, 1
        %s461 = smul.addr %s460, 2
        %s462 = scalar_lea.vmem %s8, %s461
        %s463 = sadd.s32 %s26, %s27
        %s464 = smul.u32 4, %s463
        %s465 = sadd.s32 %s26, %s27
        %s466 = smul.u32 4, %s465
        %s467 = sadd.s32 %s26, %s27
        %s468 = smul.u32 64, %s467
        %p469 = scmp.lt.s32.totalorder %s26, 1
        %s470 = scalar_select %p469, %s26, 1
        %s471 = smul.addr %s470, 2
        %s472 = scalar_lea.vmem %s8, %s471
        %p474 = scmp.eq.s32.totalorder %s27, 0
        // Predicated region
        $region81: #{forward.1} parent=51 // pred_check
          %p475 = pneg %p474
        $region82: #{forward.1} parent=51 // pred_check_branch
          %477 = sbr.rel (%p475) target = $region84
        $region83: #{forward.1} parent=51 // pred_region
          %v478 = vld [vmem:[#allocation3] sm:$0xff]
          %v479 = vld [vmem:[#allocation3 + $0x8] sm:$0xff]
          %v480 = vld [vmem:[#allocation3 + $0x10] sm:$0xff]
          %v481 = vld [vmem:[#allocation3 + $0x18] sm:$0xff]
          %v482 = vld [vmem:[#allocation3 + $0x20] sm:$0xff]
          %v483 = vld [vmem:[#allocation3 + $0x28] sm:$0xff]
          %v484 = vld [vmem:[#allocation3 + $0x30] sm:$0xff]
          %v485 = vld [vmem:[#allocation3 + $0x38] sm:$0xff]
          %v486 = vld [vmem:[#allocation3 + $0x40] sm:$0xff]
          %v487 = vld [vmem:[#allocation3 + $0x48] sm:$0xff]
          %v488 = vld [vmem:[#allocation3 + $0x50] sm:$0xff]
          %v489 = vld [vmem:[#allocation3 + $0x58] sm:$0xff]
          %v490 = vld [vmem:[#allocation3 + $0x60] sm:$0xff]
          %v491 = vld [vmem:[#allocation3 + $0x68] sm:$0xff]
          %v492 = vld [vmem:[#allocation3 + $0x70] sm:$0xff]
          %v493 = vld [vmem:[#allocation3 + $0x78] sm:$0xff]
          %v494 = vld [vmem:[%s0] sm:$0xff]
          %v495 = vld [vmem:[%s0 + $0x8] sm:$0xff]
          %v496 = vld [vmem:[%s0 + $0x10] sm:$0xff]
          %v497 = vld [vmem:[%s0 + $0x18] sm:$0xff]
          %v498 = vld [vmem:[%s0 + $0x20] sm:$0xff]
          %v499 = vld [vmem:[%s0 + $0x28] sm:$0xff]
          %v500 = vld [vmem:[%s0 + $0x30] sm:$0xff]
          %v501 = vld [vmem:[%s0 + $0x38] sm:$0xff]
          %v502 = vld [vmem:[%s0 + $0x40] sm:$0xff]
          %v503 = vld [vmem:[%s0 + $0x48] sm:$0xff]
          %v504 = vld [vmem:[%s0 + $0x50] sm:$0xff]
          %v505 = vld [vmem:[%s0 + $0x58] sm:$0xff]
          %v506 = vld [vmem:[%s0 + $0x60] sm:$0xff]
          %v507 = vld [vmem:[%s0 + $0x68] sm:$0xff]
          %v508 = vld [vmem:[%s0 + $0x70] sm:$0xff]
          %v509 = vld [vmem:[%s0 + $0x78] sm:$0xff]
          %v510 = vld [vmem:[%s0 + $0x80] sm:$0xff]
          %v511 = vld [vmem:[%s0 + $0x88] sm:$0xff]
          %v512 = vld [vmem:[%s0 + $0x90] sm:$0xff]
          %v513 = vld [vmem:[%s0 + $0x98] sm:$0xff]
          %v514 = vld [vmem:[%s0 + $0xa0] sm:$0xff]
          %v515 = vld [vmem:[%s0 + $0xa8] sm:$0xff]
          %v516 = vld [vmem:[%s0 + $0xb0] sm:$0xff]
          %v517 = vld [vmem:[%s0 + $0xb8] sm:$0xff]
          %v518 = vld [vmem:[%s0 + $0xc0] sm:$0xff]
          %v519 = vld [vmem:[%s0 + $0xc8] sm:$0xff]
          %v520 = vld [vmem:[%s0 + $0xd0] sm:$0xff]
          %v521 = vld [vmem:[%s0 + $0xd8] sm:$0xff]
          %v522 = vld [vmem:[%s0 + $0xe0] sm:$0xff]
          %v523 = vld [vmem:[%s0 + $0xe8] sm:$0xff]
          %v524 = vld [vmem:[%s0 + $0xf0] sm:$0xff]
          %v525 = vld [vmem:[%s0 + $0xf8] sm:$0xff]
          %v526 = vld [vmem:[%s0 + $0x100] sm:$0xff]
          %v527 = vld [vmem:[%s0 + $0x108] sm:$0xff]
          %v528 = vld [vmem:[%s0 + $0x110] sm:$0xff]
          %v529 = vld [vmem:[%s0 + $0x118] sm:$0xff]
          %v530 = vld [vmem:[%s0 + $0x120] sm:$0xff]
          %v531 = vld [vmem:[%s0 + $0x128] sm:$0xff]
          %v532 = vld [vmem:[%s0 + $0x130] sm:$0xff]
          %v533 = vld [vmem:[%s0 + $0x138] sm:$0xff]
          %v534 = vld [vmem:[%s0 + $0x140] sm:$0xff]
          %v535 = vld [vmem:[%s0 + $0x148] sm:$0xff]
          %v536 = vld [vmem:[%s0 + $0x150] sm:$0xff]
          %v537 = vld [vmem:[%s0 + $0x158] sm:$0xff]
          %v538 = vld [vmem:[%s0 + $0x160] sm:$0xff]
          %v539 = vld [vmem:[%s0 + $0x168] sm:$0xff]
          %v540 = vld [vmem:[%s0 + $0x170] sm:$0xff]
          %v541 = vld [vmem:[%s0 + $0x178] sm:$0xff]
          %v542 = vld [vmem:[%s0 + $0x180] sm:$0xff]
          %v543 = vld [vmem:[%s0 + $0x188] sm:$0xff]
          %v544 = vld [vmem:[%s0 + $0x190] sm:$0xff]
          %v545 = vld [vmem:[%s0 + $0x198] sm:$0xff]
          %v546 = vld [vmem:[%s0 + $0x1a0] sm:$0xff]
          %v547 = vld [vmem:[%s0 + $0x1a8] sm:$0xff]
          %v548 = vld [vmem:[%s0 + $0x1b0] sm:$0xff]
          %v549 = vld [vmem:[%s0 + $0x1b8] sm:$0xff]
          %v550 = vld [vmem:[%s0 + $0x1c0] sm:$0xff]
          %v551 = vld [vmem:[%s0 + $0x1c8] sm:$0xff]
          %v552 = vld [vmem:[%s0 + $0x1d0] sm:$0xff]
          %v553 = vld [vmem:[%s0 + $0x1d8] sm:$0xff]
          %v554 = vld [vmem:[%s0 + $0x1e0] sm:$0xff]
          %v555 = vld [vmem:[%s0 + $0x1e8] sm:$0xff]
          %v556 = vld [vmem:[%s0 + $0x1f0] sm:$0xff]
          %v557 = vld [vmem:[%s0 + $0x1f8] sm:$0xff]
          %558 = vmatprep.subr.mxu0 0.0
          %559 = vmatpush1.msra.mxu0 %v494
          %560 = vmatprep.subr.mxu0 0.0
          %561 = vmatpush1.msra.mxu0 %v495
          %562 = vmatprep.subr.mxu0 0.0
          %563 = vmatpush1.msra.mxu0 %v496
          %564 = vmatprep.subr.mxu0 0.0
          %565 = vmatpush1.msra.mxu0 %v497
          %566 = vmatprep.subr.mxu0 0.0
          %567 = vmatpush1.msra.mxu0 %v498
          %568 = vmatprep.subr.mxu0 0.0
          %569 = vmatpush1.msra.mxu0 %v499
          %570 = vmatprep.subr.mxu0 0.0
          %571 = vmatpush1.msra.mxu0 %v500
          %572 = vmatprep.subr.mxu0 0.0
          %573 = vmatpush1.msra.mxu0 %v501
          %574 = vmatprep.subr.mxu0 0.0
          %575 = vmatpush1.msra.mxu0 %v502
          %576 = vmatprep.subr.mxu0 0.0
          %577 = vmatpush1.msra.mxu0 %v503
          %578 = vmatprep.subr.mxu0 0.0
          %579 = vmatpush1.msra.mxu0 %v504
          %580 = vmatprep.subr.mxu0 0.0
          %581 = vmatpush1.msra.mxu0 %v505
          %582 = vmatprep.subr.mxu0 0.0
          %583 = vmatpush1.msra.mxu0 %v506
          %584 = vmatprep.subr.mxu0 0.0
          %585 = vmatpush1.msra.mxu0 %v507
          %586 = vmatprep.subr.mxu0 0.0
          %587 = vmatpush1.msra.mxu0 %v508
          %588 = vmatprep.subr.mxu0 0.0
          %589 = vmatpush1.msra.mxu0 %v509
          %590 = vmatprep.subr.mxu0 0.0
          %591 = vmatpush1.msra.mxu0 %v510
          %592 = vmatprep.subr.mxu0 0.0
          %593 = vmatpush1.msra.mxu0 %v511
          %594 = vmatprep.subr.mxu0 0.0
          %595 = vmatpush1.msra.mxu0 %v512
          %596 = vmatprep.subr.mxu0 0.0
          %597 = vmatpush1.msra.mxu0 %v513
          %598 = vmatprep.subr.mxu0 0.0
          %599 = vmatpush1.msra.mxu0 %v514
          %600 = vmatprep.subr.mxu0 0.0
          %601 = vmatpush1.msra.mxu0 %v515
          %602 = vmatprep.subr.mxu0 0.0
          %603 = vmatpush1.msra.mxu0 %v516
          %604 = vmatprep.subr.mxu0 0.0
          %605 = vmatpush1.msra.mxu0 %v517
          %606 = vmatprep.subr.mxu0 0.0
          %607 = vmatpush1.msra.mxu0 %v518
          %608 = vmatprep.subr.mxu0 0.0
          %609 = vmatpush1.msra.mxu0 %v519
          %610 = vmatprep.subr.mxu0 0.0
          %611 = vmatpush1.msra.mxu0 %v520
          %612 = vmatprep.subr.mxu0 0.0
          %613 = vmatpush1.msra.mxu0 %v521
          %614 = vmatprep.subr.mxu0 0.0
          %615 = vmatpush1.msra.mxu0 %v522
          %616 = vmatprep.subr.mxu0 0.0
          %617 = vmatpush1.msra.mxu0 %v523
          %618 = vmatprep.subr.mxu0 0.0
          %619 = vmatpush1.msra.mxu0 %v524
          %620 = vmatprep.subr.mxu0 0.0
          %621 = vmatpush1.msra.mxu0 %v525
          %622 = vmatprep.mubr.f32.mxu0 %v479
          %623 = vmatmul.mubr.f32.gmra.mrb[0].mxu0 %v478
          %v624 = vpop.f32.mrb[0].mxu0
          %v625 = vadd.f32 0.0, %v624
          %v626 = vpop.f32.mrb[0].mxu0
          %627 = vmatprep.mubr.f32.mxu0 %v483
          %628 = vmatmul.mubr.f32.gmra.mrb[0].mxu0 %v482
          %v629 = vpop.f32.mrb[0].mxu0
          %v630 = vadd.f32 0.0, %v629
          %v631 = vpop.f32.mrb[0].mxu0
          %632 = vmatprep.mubr.f32.mxu0 %v487
          %633 = vmatmul.mubr.f32.gmra.mrb[0].mxu0 %v486
          %v634 = vpop.f32.mrb[0].mxu0
          %v635 = vadd.f32 0.0, %v634
          %v636 = vpop.f32.mrb[0].mxu0
          %637 = vmatprep.mubr.f32.mxu0 %v491
          %638 = vmatmul.mubr.f32.gmra.mrb[0].mxu0 %v490
          %v639 = vpop.f32.mrb[0].mxu0
          %v640 = vadd.f32 0.0, %v639
          %v641 = vpop.f32.mrb[0].mxu0
          %642 = vdwg.mxu0
          %643 = vmatprep.subr.mxu0 0.0
          %644 = vmatpush1.msra.mxu0 %v526
          %645 = vmatprep.subr.mxu0 0.0
          %646 = vmatpush1.msra.mxu0 %v527
          %647 = vmatprep.subr.mxu0 0.0
          %648 = vmatpush1.msra.mxu0 %v528
          %649 = vmatprep.subr.mxu0 0.0
          %650 = vmatpush1.msra.mxu0 %v529
          %651 = vmatprep.subr.mxu0 0.0
          %652 = vmatpush1.msra.mxu0 %v530
          %653 = vmatprep.subr.mxu0 0.0
          %654 = vmatpush1.msra.mxu0 %v531
          %655 = vmatprep.subr.mxu0 0.0
          %656 = vmatpush1.msra.mxu0 %v532
          %657 = vmatprep.subr.mxu0 0.0
          %658 = vmatpush1.msra.mxu0 %v533
          %659 = vmatprep.subr.mxu0 0.0
          %660 = vmatpush1.msra.mxu0 %v534
          %661 = vmatprep.subr.mxu0 0.0
          %662 = vmatpush1.msra.mxu0 %v535
          %663 = vmatprep.subr.mxu0 0.0
          %664 = vmatpush1.msra.mxu0 %v536
          %665 = vmatprep.subr.mxu0 0.0
          %666 = vmatpush1.msra.mxu0 %v537
          %667 = vmatprep.subr.mxu0 0.0
          %668 = vmatpush1.msra.mxu0 %v538
          %669 = vmatprep.subr.mxu0 0.0
          %670 = vmatpush1.msra.mxu0 %v539
          %671 = vmatprep.subr.mxu0 0.0
          %672 = vmatpush1.msra.mxu0 %v540
          %673 = vmatprep.subr.mxu0 0.0
          %674 = vmatpush1.msra.mxu0 %v541
          %675 = vmatprep.subr.mxu0 0.0
          %676 = vmatpush1.msra.mxu0 %v542
          %677 = vmatprep.subr.mxu0 0.0
          %678 = vmatpush1.msra.mxu0 %v543
          %679 = vmatprep.subr.mxu0 0.0
          %680 = vmatpush1.msra.mxu0 %v544
          %681 = vmatprep.subr.mxu0 0.0
          %682 = vmatpush1.msra.mxu0 %v545
          %683 = vmatprep.subr.mxu0 0.0
          %684 = vmatpush1.msra.mxu0 %v546
          %685 = vmatprep.subr.mxu0 0.0
          %686 = vmatpush1.msra.mxu0 %v547
          %687 = vmatprep.subr.mxu0 0.0
          %688 = vmatpush1.msra.mxu0 %v548
          %689 = vmatprep.subr.mxu0 0.0
          %690 = vmatpush1.msra.mxu0 %v549
          %691 = vmatprep.subr.mxu0 0.0
          %692 = vmatpush1.msra.mxu0 %v550
          %693 = vmatprep.subr.mxu0 0.0
          %694 = vmatpush1.msra.mxu0 %v551
          %695 = vmatprep.subr.mxu0 0.0
          %696 = vmatpush1.msra.mxu0 %v552
          %697 = vmatprep.subr.mxu0 0.0
          %698 = vmatpush1.msra.mxu0 %v553
          %699 = vmatprep.subr.mxu0 0.0
          %700 = vmatpush1.msra.mxu0 %v554
          %701 = vmatprep.subr.mxu0 0.0
          %702 = vmatpush1.msra.mxu0 %v555
          %703 = vmatprep.subr.mxu0 0.0
          %704 = vmatpush1.msra.mxu0 %v556
          %705 = vmatprep.subr.mxu0 0.0
          %706 = vmatpush1.msra.mxu0 %v557
          %707 = vmatprep.mubr.f32.mxu0 %v481
          %708 = vmatmul.mubr.f32.gmra.mrb[0].mxu0 %v480
          %v709 = vpop.f32.mrb[0].mxu0
          %v710 = vadd.f32 %v625, %v709
          %v711 = vpop.f32.mrb[0].mxu0
          %712 = vmatprep.mubr.f32.mxu0 %v485
          %713 = vmatmul.mubr.f32.gmra.mrb[0].mxu0 %v484
          %v714 = vpop.f32.mrb[0].mxu0
          %v715 = vadd.f32 %v630, %v714
          %v716 = vpop.f32.mrb[0].mxu0
          %717 = vmatprep.mubr.f32.mxu0 %v489
          %718 = vmatmul.mubr.f32.gmra.mrb[0].mxu0 %v488
          %v719 = vpop.f32.mrb[0].mxu0
          %v720 = vadd.f32 %v635, %v719
          %v721 = vpop.f32.mrb[0].mxu0
          %722 = vmatprep.mubr.f32.mxu0 %v493
          %723 = vmatmul.mubr.f32.gmra.mrb[0].mxu0 %v492
          %v724 = vpop.f32.mrb[0].mxu0
          %v725 = vadd.f32 %v640, %v724
          %v726 = vpop.f32.mrb[0].mxu0
          %727 = vdwg.mxu0
          %v728 = vld [vmem:[#allocation5] sm:$0xff]
          %vm729 = vcmask 64512
          %v731 = vsel %vm729, %v710, 0
          %v734 = vsel %vm729, %v715, 0
          %v737 = vsel %vm729, %v720, 0
          %v740 = vsel %vm729, %v725, 0
          %742 = vmatprep.subr.mxu0 0.0
          %743 = vmatpush1.msra.mxu0 %v728
          %744 = vmatprep.subr.mxu0 0.0
          %745 = vmatpush1.msra.mxu0 0.0
          %746 = vmatprep.subr.mxu0 0.0
          %747 = vmatpush1.msra.mxu0 0.0
          %748 = vmatprep.subr.mxu0 0.0
          %749 = vmatpush1.msra.mxu0 0.0
          %750 = vmatprep.subr.mxu0 0.0
          %751 = vmatpush1.msra.mxu0 0.0
          %752 = vmatprep.subr.mxu0 0.0
          %753 = vmatpush1.msra.mxu0 0.0
          %754 = vmatprep.subr.mxu0 0.0
          %755 = vmatpush1.msra.mxu0 0.0
          %756 = vmatprep.subr.mxu0 0.0
          %757 = vmatpush1.msra.mxu0 0.0
          %758 = vmatprep.subr.mxu0 0.0
          %759 = vmatpush1.msra.mxu0 0.0
          %760 = vmatprep.subr.mxu0 0.0
          %761 = vmatpush1.msra.mxu0 0.0
          %762 = vmatprep.subr.mxu0 0.0
          %763 = vmatpush1.msra.mxu0 0.0
          %764 = vmatprep.subr.mxu0 0.0
          %765 = vmatpush1.msra.mxu0 0.0
          %766 = vmatprep.subr.mxu0 0.0
          %767 = vmatpush1.msra.mxu0 0.0
          %768 = vmatprep.subr.mxu0 0.0
          %769 = vmatpush1.msra.mxu0 0.0
          %770 = vmatprep.subr.mxu0 0.0
          %771 = vmatpush1.msra.mxu0 0.0
          %772 = vmatprep.subr.mxu0 0.0
          %773 = vmatpush1.msra.mxu0 0.0
          %774 = vmatprep.subr.mxu0 0.0
          %775 = vmatpush1.msra.mxu0 0.0
          %776 = vmatprep.subr.mxu0 0.0
          %777 = vmatpush1.msra.mxu0 0.0
          %778 = vmatprep.subr.mxu0 0.0
          %779 = vmatpush1.msra.mxu0 0.0
          %780 = vmatprep.subr.mxu0 0.0
          %781 = vmatpush1.msra.mxu0 0.0
          %782 = vmatprep.subr.mxu0 0.0
          %783 = vmatpush1.msra.mxu0 0.0
          %784 = vmatprep.subr.mxu0 0.0
          %785 = vmatpush1.msra.mxu0 0.0
          %786 = vmatprep.subr.mxu0 0.0
          %787 = vmatpush1.msra.mxu0 0.0
          %788 = vmatprep.subr.mxu0 0.0
          %789 = vmatpush1.msra.mxu0 0.0
          %790 = vmatprep.subr.mxu0 0.0
          %791 = vmatpush1.msra.mxu0 0.0
          %792 = vmatprep.subr.mxu0 0.0
          %793 = vmatpush1.msra.mxu0 0.0
          %794 = vmatprep.subr.mxu0 0.0
          %795 = vmatpush1.msra.mxu0 0.0
          %796 = vmatprep.subr.mxu0 0.0
          %797 = vmatpush1.msra.mxu0 0.0
          %798 = vmatprep.subr.mxu0 0.0
          %799 = vmatpush1.msra.mxu0 0.0
          %800 = vmatprep.subr.mxu0 0.0
          %801 = vmatpush1.msra.mxu0 0.0
          %802 = vmatprep.subr.mxu0 0.0
          %803 = vmatpush1.msra.mxu0 0.0
          %804 = vmatprep.subr.mxu0 0.0
          %805 = vmatpush1.msra.mxu0 0.0
          %806 = vmatprep.mubr.f32.mxu0 0.0
          %807 = vmatmul.mubr.f32.gmra.mrb[0].mxu0 %v731
          %v808 = vpop.f32.mrb[0].mxu0
          %v809 = vadd.f32 0.0, %v808
          %v810 = vpop.f32.mrb[0].mxu0
          %811 = vmatprep.mubr.f32.mxu0 0.0
          %812 = vmatmul.mubr.f32.gmra.mrb[0].mxu0 %v734
          %v813 = vpop.f32.mrb[0].mxu0
          %v814 = vadd.f32 0.0, %v813
          %v815 = vpop.f32.mrb[0].mxu0
          %816 = vmatprep.mubr.f32.mxu0 0.0
          %817 = vmatmul.mubr.f32.gmra.mrb[0].mxu0 %v737
          %v818 = vpop.f32.mrb[0].mxu0
          %v819 = vadd.f32 0.0, %v818
          %v820 = vpop.f32.mrb[0].mxu0
          %821 = vmatprep.mubr.f32.mxu0 0.0
          %822 = vmatmul.mubr.f32.gmra.mrb[0].mxu0 %v740
          %v823 = vpop.f32.mrb[0].mxu0
          %v824 = vadd.f32 0.0, %v823
          %v825 = vpop.f32.mrb[0].mxu0
          %826 = vdwg.mxu0
          %v827 = vld [vmem:[#allocation7] sm:$0x1]
          %v829 = vlaneseq
          %v830 = vshrl.u32 %v829, 7
          %v831 = vsub.s32 0, %v830
          %v832 = vrot.slane %v827, %v831
          %v834 = vmul.f32 %v809, %v832
          %v835 = vmul.f32 %v814, %v832
          %v836 = vmul.f32 %v819, %v832
          %v837 = vmul.f32 %v824, %v832
          %v838 = vld [vmem:[#allocation8] sm:$0x1]
          %v840 = vlaneseq
          %v841 = vshrl.u32 %v840, 7
          %v842 = vsub.s32 0, %v841
          %v843 = vrot.slane %v838, %v842
          %v845 = vadd.f32 %v834, %v843
          %v846 = vadd.f32 %v835, %v843
          %v847 = vadd.f32 %v836, %v843
          %v848 = vadd.f32 %v837, %v843
          %v849 = vmax.f32 %v845, 0.0
          %v850 = vmax.f32 %v846, 0.0
          %v851 = vmax.f32 %v847, 0.0
          %v852 = vmax.f32 %v848, 0.0
          %v853 = vpack.c.bf16 %v850, %v849
          %v854 = vpack.c.bf16 %v852, %v851
          %855 = vst [vmem:[#allocation2] sm:$0xff] %v853
          %856 = vst [vmem:[#allocation2 + $0x8] sm:$0xff] %v854
          %857 = vst [vmem:[%s472] sm:$0x3] 0.0
        $region84: #{forward.1} parent=51 // pred_fallthru
          _
        %v858 = vld [vmem:[#allocation2] sm:$0x1]
        %v859 = vld [vmem:[%s403] sm:$0xff]
        %v860 = vld [vmem:[%s403 + $0x8] sm:$0xff]
        %v861 = vld [vmem:[%s403 + $0x10] sm:$0xff]
        %v862 = vld [vmem:[%s403 + $0x18] sm:$0xff]
        %v863 = vld [vmem:[%s403 + $0x20] sm:$0xff]
        %v864 = vld [vmem:[%s403 + $0x28] sm:$0xff]
        %v865 = vld [vmem:[%s403 + $0x30] sm:$0xff]
        %v866 = vld [vmem:[%s403 + $0x38] sm:$0xff]
        %v867 = vld [vmem:[%s403 + $0x40] sm:$0xff]
        %v868 = vld [vmem:[%s403 + $0x48] sm:$0xff]
        %v869 = vld [vmem:[%s403 + $0x50] sm:$0xff]
        %v870 = vld [vmem:[%s403 + $0x58] sm:$0xff]
        %v871 = vld [vmem:[%s403 + $0x60] sm:$0xff]
        %v872 = vld [vmem:[%s403 + $0x68] sm:$0xff]
        %v873 = vld [vmem:[%s403 + $0x70] sm:$0xff]
        %v874 = vld [vmem:[%s403 + $0x78] sm:$0xff]
        %v875 = vld [vmem:[%s403 + $0x80] sm:$0xff]
        %v876 = vld [vmem:[%s403 + $0x88] sm:$0xff]
        %v877 = vld [vmem:[%s403 + $0x90] sm:$0xff]
        %v878 = vld [vmem:[%s403 + $0x98] sm:$0xff]
        %v879 = vld [vmem:[%s403 + $0xa0] sm:$0xff]
        %v880 = vld [vmem:[%s403 + $0xa8] sm:$0xff]
        %v881 = vld [vmem:[%s403 + $0xb0] sm:$0xff]
        %v882 = vld [vmem:[%s403 + $0xb8] sm:$0xff]
        %v883 = vld [vmem:[%s403 + $0xc0] sm:$0xff]
        %v884 = vld [vmem:[%s403 + $0xc8] sm:$0xff]
        %v885 = vld [vmem:[%s403 + $0xd0] sm:$0xff]
        %v886 = vld [vmem:[%s403 + $0xd8] sm:$0xff]
        %v887 = vld [vmem:[%s403 + $0xe0] sm:$0xff]
        %v888 = vld [vmem:[%s403 + $0xe8] sm:$0xff]
        %v889 = vld [vmem:[%s403 + $0xf0] sm:$0xff]
        %v890 = vld [vmem:[%s403 + $0xf8] sm:$0xff]
        %v891 = vld [vmem:[#allocation2] sm:$0x2]
        %s892 = scalar_lea.vmem %s403, 256 [#allocation10]
        %v893 = vld [vmem:[%s892] sm:$0xff]
        %v894 = vld [vmem:[%s892 + $0x8] sm:$0xff]
        %v895 = vld [vmem:[%s892 + $0x10] sm:$0xff]
        %v896 = vld [vmem:[%s892 + $0x18] sm:$0xff]
        %v897 = vld [vmem:[%s892 + $0x20] sm:$0xff]
        %v898 = vld [vmem:[%s892 + $0x28] sm:$0xff]
        %v899 = vld [vmem:[%s892 + $0x30] sm:$0xff]
        %v900 = vld [vmem:[%s892 + $0x38] sm:$0xff]
        %v901 = vld [vmem:[%s892 + $0x40] sm:$0xff]
        %v902 = vld [vmem:[%s892 + $0x48] sm:$0xff]
        %v903 = vld [vmem:[%s892 + $0x50] sm:$0xff]
        %v904 = vld [vmem:[%s892 + $0x58] sm:$0xff]
        %v905 = vld [vmem:[%s892 + $0x60] sm:$0xff]
        %v906 = vld [vmem:[%s892 + $0x68] sm:$0xff]
        %v907 = vld [vmem:[%s892 + $0x70] sm:$0xff]
        %v908 = vld [vmem:[%s892 + $0x78] sm:$0xff]
        %v909 = vld [vmem:[%s892 + $0x80] sm:$0xff]
        %v910 = vld [vmem:[%s892 + $0x88] sm:$0xff]
        %v911 = vld [vmem:[%s892 + $0x90] sm:$0xff]
        %v912 = vld [vmem:[%s892 + $0x98] sm:$0xff]
        %v913 = vld [vmem:[%s892 + $0xa0] sm:$0xff]
        %v914 = vld [vmem:[%s892 + $0xa8] sm:$0xff]
        %v915 = vld [vmem:[%s892 + $0xb0] sm:$0xff]
        %v916 = vld [vmem:[%s892 + $0xb8] sm:$0xff]
        %v917 = vld [vmem:[%s892 + $0xc0] sm:$0xff]
        %v918 = vld [vmem:[%s892 + $0xc8] sm:$0xff]
        %v919 = vld [vmem:[%s892 + $0xd0] sm:$0xff]
        %v920 = vld [vmem:[%s892 + $0xd8] sm:$0xff]
        %v921 = vld [vmem:[%s892 + $0xe0] sm:$0xff]
        %v922 = vld [vmem:[%s892 + $0xe8] sm:$0xff]
        %v923 = vld [vmem:[%s892 + $0xf0] sm:$0xff]
        %v924 = vld [vmem:[%s892 + $0xf8] sm:$0xff]
        %v926 = vrot.slane %v891, 1
        %v960 = vunpack.c.l.b16 %v893
        %v961 = vunpack.c.h.b16 %v893
        %v962 = vunpack.c.l.b16 %v894
        %v963 = vunpack.c.h.b16 %v894
        %v964 = vunpack.c.l.b16 %v895
        %v965 = vunpack.c.h.b16 %v895
        %v966 = vunpack.c.l.b16 %v896
        %v967 = vunpack.c.h.b16 %v896
        %v968 = vunpack.c.l.b16 %v897
        %v969 = vunpack.c.h.b16 %v897
        %v970 = vunpack.c.l.b16 %v898
        %v971 = vunpack.c.h.b16 %v898
        %v972 = vunpack.c.l.b16 %v899
        %v973 = vunpack.c.h.b16 %v899
        %v974 = vunpack.c.l.b16 %v900
        %v975 = vunpack.c.h.b16 %v900
        %v976 = vunpack.c.l.b16 %v901
        %v977 = vunpack.c.h.b16 %v901
        %v978 = vunpack.c.l.b16 %v902
        %v979 = vunpack.c.h.b16 %v902
        %v980 = vunpack.c.l.b16 %v903
        %v981 = vunpack.c.h.b16 %v903
        %v982 = vunpack.c.l.b16 %v904
        %v983 = vunpack.c.h.b16 %v904
        %v984 = vunpack.c.l.b16 %v905
        %v985 = vunpack.c.h.b16 %v905
        %v986 = vunpack.c.l.b16 %v906
        %v987 = vunpack.c.h.b16 %v906
        %v988 = vunpack.c.l.b16 %v907
        %v989 = vunpack.c.h.b16 %v907
        %v990 = vunpack.c.l.b16 %v908
        %v991 = vunpack.c.h.b16 %v908
        %v992 = vunpack.c.l.b16 %v909
        %v993 = vunpack.c.h.b16 %v909
        %v994 = vunpack.c.l.b16 %v910
        %v995 = vunpack.c.h.b16 %v910
        %v996 = vunpack.c.l.b16 %v911
        %v997 = vunpack.c.h.b16 %v911
        %v998 = vunpack.c.l.b16 %v912
        %v999 = vunpack.c.h.b16 %v912
        %v1000 = vunpack.c.l.b16 %v913
        %v1001 = vunpack.c.h.b16 %v913
        %v1002 = vunpack.c.l.b16 %v914
        %v1003 = vunpack.c.h.b16 %v914
        %v1004 = vunpack.c.l.b16 %v915
        %v1005 = vunpack.c.h.b16 %v915
        %v1006 = vunpack.c.l.b16 %v916
        %v1007 = vunpack.c.h.b16 %v916
        %v1008 = vunpack.c.l.b16 %v917
        %v1009 = vunpack.c.h.b16 %v917
        %v1010 = vunpack.c.l.b16 %v918
        %v1011 = vunpack.c.h.b16 %v918
        %v1012 = vunpack.c.l.b16 %v919
        %v1013 = vunpack.c.h.b16 %v919
        %v1014 = vunpack.c.l.b16 %v920
        %v1015 = vunpack.c.h.b16 %v920
        %v1016 = vunpack.c.l.b16 %v921
        %v1017 = vunpack.c.h.b16 %v921
        %v1018 = vunpack.c.l.b16 %v922
        %v1019 = vunpack.c.h.b16 %v922
        %v1020 = vunpack.c.l.b16 %v923
        %v1021 = vunpack.c.h.b16 %v923
        %v1022 = vunpack.c.l.b16 %v924
        %v1023 = vunpack.c.h.b16 %v924
        %v1024 = vpack.c.b16 %v964, %v960
        %v1025 = vpack.c.b16 %v965, %v961
        %v1026 = vpack.c.b16 %v966, %v962
        %v1027 = vpack.c.b16 %v967, %v963
        %v1028 = vpack.c.b16 %v972, %v968
        %v1029 = vpack.c.b16 %v973, %v969
        %v1030 = vpack.c.b16 %v974, %v970
        %v1031 = vpack.c.b16 %v975, %v971
        %v1032 = vpack.c.b16 %v980, %v976
        %v1033 = vpack.c.b16 %v981, %v977
        %v1034 = vpack.c.b16 %v982, %v978
        %v1035 = vpack.c.b16 %v983, %v979
        %v1036 = vpack.c.b16 %v988, %v984
        %v1037 = vpack.c.b16 %v989, %v985
        %v1038 = vpack.c.b16 %v990, %v986
        %v1039 = vpack.c.b16 %v991, %v987
        %v1040 = vpack.c.b16 %v996, %v992
        %v1041 = vpack.c.b16 %v997, %v993
        %v1042 = vpack.c.b16 %v998, %v994
        %v1043 = vpack.c.b16 %v999, %v995
        %v1044 = vpack.c.b16 %v1004, %v1000
        %v1045 = vpack.c.b16 %v1005, %v1001
        %v1046 = vpack.c.b16 %v1006, %v1002
        %v1047 = vpack.c.b16 %v1007, %v1003
        %v1048 = vpack.c.b16 %v1012, %v1008
        %v1049 = vpack.c.b16 %v1013, %v1009
        %v1050 = vpack.c.b16 %v1014, %v1010
        %v1051 = vpack.c.b16 %v1015, %v1011
        %v1052 = vpack.c.b16 %v1020, %v1016
        %v1053 = vpack.c.b16 %v1021, %v1017
        %v1054 = vpack.c.b16 %v1022, %v1018
        %v1055 = vpack.c.b16 %v1023, %v1019
        %1088 = vmatprep.subr.bf16.mxu0 %v1025
        %1089 = vmatpush1.bf16.msra.mxu0 %v1024
        %1090 = vmatprep.subr.bf16.mxu0 %v1029
        %1091 = vmatpush1.bf16.msra.mxu0 %v1028
        %1092 = vmatprep.subr.bf16.mxu0 %v1033
        %1093 = vmatpush1.bf16.msra.mxu0 %v1032
        %1094 = vmatprep.subr.bf16.mxu0 %v1037
        %1095 = vmatpush1.bf16.msra.mxu0 %v1036
        %1096 = vmatprep.subr.bf16.mxu0 %v1041
        %1097 = vmatpush1.bf16.msra.mxu0 %v1040
        %1098 = vmatprep.subr.bf16.mxu0 %v1045
        %1099 = vmatpush1.bf16.msra.mxu0 %v1044
        %1100 = vmatprep.subr.bf16.mxu0 %v1049
        %1101 = vmatpush1.bf16.msra.mxu0 %v1048
        %1102 = vmatprep.subr.bf16.mxu0 %v1053
        %1103 = vmatpush1.bf16.msra.mxu0 %v1052
        %1104 = vmatprep.subr.bf16.mxu0 0
        %1105 = vmatpush1.bf16.msra.mxu0 0
        %1106 = vmatprep.subr.bf16.mxu0 0
        %1107 = vmatpush1.bf16.msra.mxu0 0
        %1108 = vmatprep.subr.bf16.mxu0 0
        %1109 = vmatpush1.bf16.msra.mxu0 0
        %1110 = vmatprep.subr.bf16.mxu0 0
        %1111 = vmatpush1.bf16.msra.mxu0 0
        %1112 = vmatprep.subr.bf16.mxu0 0
        %1113 = vmatpush1.bf16.msra.mxu0 0
        %1114 = vmatprep.subr.bf16.mxu0 0
        %1115 = vmatpush1.bf16.msra.mxu0 0
        %1116 = vmatprep.subr.bf16.mxu0 0
        %1117 = vmatpush1.bf16.msra.mxu0 0
        %1118 = vmatprep.subr.bf16.mxu0 0
        %1119 = vmatpush1.bf16.msra.mxu0 0
        %1120 = vmatprep.mubr.bf16.mxu0 0
        %1121 = vmatmul.mubr.bf16.gmra.mrb[0].mxu0 %v926
        %v1122 = vpop.f32.mrb[0].mxu0
        %v1123 = vadd.f32 0.0, %v1122
        %v1124 = vpop.f32.mrb[0].mxu0
        %v1125 = vadd.f32 0.0, %v1124
        %v1126 = vpop.f32.mrb[0].mxu0
        %v1127 = vpop.f32.mrb[0].mxu0
        %1128 = vdwg.mxu0
        %1129 = vmatprep.subr.bf16.mxu0 %v1027
        %1130 = vmatpush1.bf16.msra.mxu0 %v1026
        %1131 = vmatprep.subr.bf16.mxu0 %v1031
        %1132 = vmatpush1.bf16.msra.mxu0 %v1030
        %1133 = vmatprep.subr.bf16.mxu0 %v1035
        %1134 = vmatpush1.bf16.msra.mxu0 %v1034
        %1135 = vmatprep.subr.bf16.mxu0 %v1039
        %1136 = vmatpush1.bf16.msra.mxu0 %v1038
        %1137 = vmatprep.subr.bf16.mxu0 %v1043
        %1138 = vmatpush1.bf16.msra.mxu0 %v1042
        %1139 = vmatprep.subr.bf16.mxu0 %v1047
        %1140 = vmatpush1.bf16.msra.mxu0 %v1046
        %1141 = vmatprep.subr.bf16.mxu0 %v1051
        %1142 = vmatpush1.bf16.msra.mxu0 %v1050
        %1143 = vmatprep.subr.bf16.mxu0 %v1055
        %1144 = vmatpush1.bf16.msra.mxu0 %v1054
        %1145 = vmatprep.subr.bf16.mxu0 0
        %1146 = vmatpush1.bf16.msra.mxu0 0
        %1147 = vmatprep.subr.bf16.mxu0 0
        %1148 = vmatpush1.bf16.msra.mxu0 0
        %1149 = vmatprep.subr.bf16.mxu0 0
        %1150 = vmatpush1.bf16.msra.mxu0 0
        %1151 = vmatprep.subr.bf16.mxu0 0
        %1152 = vmatpush1.bf16.msra.mxu0 0
        %1153 = vmatprep.subr.bf16.mxu0 0
        %1154 = vmatpush1.bf16.msra.mxu0 0
        %1155 = vmatprep.subr.bf16.mxu0 0
        %1156 = vmatpush1.bf16.msra.mxu0 0
        %1157 = vmatprep.subr.bf16.mxu0 0
        %1158 = vmatpush1.bf16.msra.mxu0 0
        %1159 = vmatprep.subr.bf16.mxu0 0
        %1160 = vmatpush1.bf16.msra.mxu0 0
        %1161 = vmatprep.mubr.bf16.mxu0 0
        %1162 = vmatmul.mubr.bf16.gmra.mrb[0].mxu0 %v926
        %v1163 = vpop.f32.mrb[0].mxu0
        %v1164 = vadd.f32 0.0, %v1163
        %v1165 = vpop.f32.mrb[0].mxu0
        %v1166 = vadd.f32 0.0, %v1165
        %v1167 = vpop.f32.mrb[0].mxu0
        %v1168 = vpop.f32.mrb[0].mxu0
        %1169 = vdwg.mxu0
        %v1202 = vunpack.c.l.b16 %v859
        %v1203 = vunpack.c.h.b16 %v859
        %v1204 = vunpack.c.l.b16 %v860
        %v1205 = vunpack.c.h.b16 %v860
        %v1206 = vunpack.c.l.b16 %v861
        %v1207 = vunpack.c.h.b16 %v861
        %v1208 = vunpack.c.l.b16 %v862
        %v1209 = vunpack.c.h.b16 %v862
        %v1210 = vunpack.c.l.b16 %v863
        %v1211 = vunpack.c.h.b16 %v863
        %v1212 = vunpack.c.l.b16 %v864
        %v1213 = vunpack.c.h.b16 %v864
        %v1214 = vunpack.c.l.b16 %v865
        %v1215 = vunpack.c.h.b16 %v865
        %v1216 = vunpack.c.l.b16 %v866
        %v1217 = vunpack.c.h.b16 %v866
        %v1218 = vunpack.c.l.b16 %v867
        %v1219 = vunpack.c.h.b16 %v867
        %v1220 = vunpack.c.l.b16 %v868
        %v1221 = vunpack.c.h.b16 %v868
        %v1222 = vunpack.c.l.b16 %v869
        %v1223 = vunpack.c.h.b16 %v869
        %v1224 = vunpack.c.l.b16 %v870
        %v1225 = vunpack.c.h.b16 %v870
        %v1226 = vunpack.c.l.b16 %v871
        %v1227 = vunpack.c.h.b16 %v871
        %v1228 = vunpack.c.l.b16 %v872
        %v1229 = vunpack.c.h.b16 %v872
        %v1230 = vunpack.c.l.b16 %v873
        %v1231 = vunpack.c.h.b16 %v873
        %v1232 = vunpack.c.l.b16 %v874
        %v1233 = vunpack.c.h.b16 %v874
        %v1234 = vunpack.c.l.b16 %v875
        %v1235 = vunpack.c.h.b16 %v875
        %v1236 = vunpack.c.l.b16 %v876
        %v1237 = vunpack.c.h.b16 %v876
        %v1238 = vunpack.c.l.b16 %v877
        %v1239 = vunpack.c.h.b16 %v877
        %v1240 = vunpack.c.l.b16 %v878
        %v1241 = vunpack.c.h.b16 %v878
        %v1242 = vunpack.c.l.b16 %v879
        %v1243 = vunpack.c.h.b16 %v879
        %v1244 = vunpack.c.l.b16 %v880
        %v1245 = vunpack.c.h.b16 %v880
        %v1246 = vunpack.c.l.b16 %v881
        %v1247 = vunpack.c.h.b16 %v881
        %v1248 = vunpack.c.l.b16 %v882
        %v1249 = vunpack.c.h.b16 %v882
        %v1250 = vunpack.c.l.b16 %v883
        %v1251 = vunpack.c.h.b16 %v883
        %v1252 = vunpack.c.l.b16 %v884
        %v1253 = vunpack.c.h.b16 %v884
        %v1254 = vunpack.c.l.b16 %v885
        %v1255 = vunpack.c.h.b16 %v885
        %v1256 = vunpack.c.l.b16 %v886
        %v1257 = vunpack.c.h.b16 %v886
        %v1258 = vunpack.c.l.b16 %v887
        %v1259 = vunpack.c.h.b16 %v887
        %v1260 = vunpack.c.l.b16 %v888
        %v1261 = vunpack.c.h.b16 %v888
        %v1262 = vunpack.c.l.b16 %v889
        %v1263 = vunpack.c.h.b16 %v889
        %v1264 = vunpack.c.l.b16 %v890
        %v1265 = vunpack.c.h.b16 %v890
        %v1266 = vpack.c.b16 %v1206, %v1202
        %v1267 = vpack.c.b16 %v1207, %v1203
        %v1268 = vpack.c.b16 %v1208, %v1204
        %v1269 = vpack.c.b16 %v1209, %v1205
        %v1270 = vpack.c.b16 %v1214, %v1210
        %v1271 = vpack.c.b16 %v1215, %v1211
        %v1272 = vpack.c.b16 %v1216, %v1212
        %v1273 = vpack.c.b16 %v1217, %v1213
        %v1274 = vpack.c.b16 %v1222, %v1218
        %v1275 = vpack.c.b16 %v1223, %v1219
        %v1276 = vpack.c.b16 %v1224, %v1220
        %v1277 = vpack.c.b16 %v1225, %v1221
        %v1278 = vpack.c.b16 %v1230, %v1226
        %v1279 = vpack.c.b16 %v1231, %v1227
        %v1280 = vpack.c.b16 %v1232, %v1228
        %v1281 = vpack.c.b16 %v1233, %v1229
        %v1282 = vpack.c.b16 %v1238, %v1234
        %v1283 = vpack.c.b16 %v1239, %v1235
        %v1284 = vpack.c.b16 %v1240, %v1236
        %v1285 = vpack.c.b16 %v1241, %v1237
        %v1286 = vpack.c.b16 %v1246, %v1242
        %v1287 = vpack.c.b16 %v1247, %v1243
        %v1288 = vpack.c.b16 %v1248, %v1244
        %v1289 = vpack.c.b16 %v1249, %v1245
        %v1290 = vpack.c.b16 %v1254, %v1250
        %v1291 = vpack.c.b16 %v1255, %v1251
        %v1292 = vpack.c.b16 %v1256, %v1252
        %v1293 = vpack.c.b16 %v1257, %v1253
        %v1294 = vpack.c.b16 %v1262, %v1258
        %v1295 = vpack.c.b16 %v1263, %v1259
        %v1296 = vpack.c.b16 %v1264, %v1260
        %v1297 = vpack.c.b16 %v1265, %v1261
        %1330 = vmatprep.subr.bf16.mxu0 %v1267
        %1331 = vmatpush1.bf16.msra.mxu0 %v1266
        %1332 = vmatprep.subr.bf16.mxu0 %v1271
        %1333 = vmatpush1.bf16.msra.mxu0 %v1270
        %1334 = vmatprep.subr.bf16.mxu0 %v1275
        %1335 = vmatpush1.bf16.msra.mxu0 %v1274
        %1336 = vmatprep.subr.bf16.mxu0 %v1279
        %1337 = vmatpush1.bf16.msra.mxu0 %v1278
        %1338 = vmatprep.subr.bf16.mxu0 %v1283
        %1339 = vmatpush1.bf16.msra.mxu0 %v1282
        %1340 = vmatprep.subr.bf16.mxu0 %v1287
        %1341 = vmatpush1.bf16.msra.mxu0 %v1286
        %1342 = vmatprep.subr.bf16.mxu0 %v1291
        %1343 = vmatpush1.bf16.msra.mxu0 %v1290
        %1344 = vmatprep.subr.bf16.mxu0 %v1295
        %1345 = vmatpush1.bf16.msra.mxu0 %v1294
        %1346 = vmatprep.subr.bf16.mxu0 0
        %1347 = vmatpush1.bf16.msra.mxu0 0
        %1348 = vmatprep.subr.bf16.mxu0 0
        %1349 = vmatpush1.bf16.msra.mxu0 0
        %1350 = vmatprep.subr.bf16.mxu0 0
        %1351 = vmatpush1.bf16.msra.mxu0 0
        %1352 = vmatprep.subr.bf16.mxu0 0
        %1353 = vmatpush1.bf16.msra.mxu0 0
        %1354 = vmatprep.subr.bf16.mxu0 0
        %1355 = vmatpush1.bf16.msra.mxu0 0
        %1356 = vmatprep.subr.bf16.mxu0 0
        %1357 = vmatpush1.bf16.msra.mxu0 0
        %1358 = vmatprep.subr.bf16.mxu0 0
        %1359 = vmatpush1.bf16.msra.mxu0 0
        %1360 = vmatprep.subr.bf16.mxu0 0
        %1361 = vmatpush1.bf16.msra.mxu0 0
        %1362 = vmatprep.mubr.bf16.mxu0 0
        %1363 = vmatmul.mubr.bf16.gmra.mrb[0].mxu0 %v858
        %v1364 = vpop.f32.mrb[0].mxu0
        %v1365 = vadd.f32 %v1123, %v1364
        %v1366 = vpop.f32.mrb[0].mxu0
        %v1367 = vadd.f32 %v1125, %v1366
        %v1368 = vpop.f32.mrb[0].mxu0
        %v1369 = vpop.f32.mrb[0].mxu0
        %1370 = vdwg.mxu0
        %1371 = vmatprep.subr.bf16.mxu0 %v1269
        %1372 = vmatpush1.bf16.msra.mxu0 %v1268
        %1373 = vmatprep.subr.bf16.mxu0 %v1273
        %1374 = vmatpush1.bf16.msra.mxu0 %v1272
        %1375 = vmatprep.subr.bf16.mxu0 %v1277
        %1376 = vmatpush1.bf16.msra.mxu0 %v1276
        %1377 = vmatprep.subr.bf16.mxu0 %v1281
        %1378 = vmatpush1.bf16.msra.mxu0 %v1280
        %1379 = vmatprep.subr.bf16.mxu0 %v1285
        %1380 = vmatpush1.bf16.msra.mxu0 %v1284
        %1381 = vmatprep.subr.bf16.mxu0 %v1289
        %1382 = vmatpush1.bf16.msra.mxu0 %v1288
        %1383 = vmatprep.subr.bf16.mxu0 %v1293
        %1384 = vmatpush1.bf16.msra.mxu0 %v1292
        %1385 = vmatprep.subr.bf16.mxu0 %v1297
        %1386 = vmatpush1.bf16.msra.mxu0 %v1296
        %1387 = vmatprep.subr.bf16.mxu0 0
        %1388 = vmatpush1.bf16.msra.mxu0 0
        %1389 = vmatprep.subr.bf16.mxu0 0
        %1390 = vmatpush1.bf16.msra.mxu0 0
        %1391 = vmatprep.subr.bf16.mxu0 0
        %1392 = vmatpush1.bf16.msra.mxu0 0
        %1393 = vmatprep.subr.bf16.mxu0 0
        %1394 = vmatpush1.bf16.msra.mxu0 0
        %1395 = vmatprep.subr.bf16.mxu0 0
        %1396 = vmatpush1.bf16.msra.mxu0 0
        %1397 = vmatprep.subr.bf16.mxu0 0
        %1398 = vmatpush1.bf16.msra.mxu0 0
        %1399 = vmatprep.subr.bf16.mxu0 0
        %1400 = vmatpush1.bf16.msra.mxu0 0
        %1401 = vmatprep.subr.bf16.mxu0 0
        %1402 = vmatpush1.bf16.msra.mxu0 0
        %1403 = vmatprep.mubr.bf16.mxu0 0
        %1404 = vmatmul.mubr.bf16.gmra.mrb[0].mxu0 %v858
        %v1405 = vpop.f32.mrb[0].mxu0
        %v1406 = vadd.f32 %v1164, %v1405
        %v1407 = vpop.f32.mrb[0].mxu0
        %v1408 = vadd.f32 %v1166, %v1407
        %v1409 = vpop.f32.mrb[0].mxu0
        %v1410 = vpop.f32.mrb[0].mxu0
        %1411 = vdwg.mxu0
        %v1412 = vld [vmem:[#allocation2] sm:$0x4]
        %s1413 = scalar_lea.vmem %s403, 512 [#allocation10]
        %v1414 = vld [vmem:[%s1413] sm:$0xff]
        %v1415 = vld [vmem:[%s1413 + $0x8] sm:$0xff]
        %v1416 = vld [vmem:[%s1413 + $0x10] sm:$0xff]
        %v1417 = vld [vmem:[%s1413 + $0x18] sm:$0xff]
        %v1418 = vld [vmem:[%s1413 + $0x20] sm:$0xff]
        %v1419 = vld [vmem:[%s1413 + $0x28] sm:$0xff]
        %v1420 = vld [vmem:[%s1413 + $0x30] sm:$0xff]
        %v1421 = vld [vmem:[%s1413 + $0x38] sm:$0xff]
        %v1422 = vld [vmem:[%s1413 + $0x40] sm:$0xff]
        %v1423 = vld [vmem:[%s1413 + $0x48] sm:$0xff]
        %v1424 = vld [vmem:[%s1413 + $0x50] sm:$0xff]
        %v1425 = vld [vmem:[%s1413 + $0x58] sm:$0xff]
        %v1426 = vld [vmem:[%s1413 + $0x60] sm:$0xff]
        %v1427 = vld [vmem:[%s1413 + $0x68] sm:$0xff]
        %v1428 = vld [vmem:[%s1413 + $0x70] sm:$0xff]
        %v1429 = vld [vmem:[%s1413 + $0x78] sm:$0xff]
        %v1430 = vld [vmem:[%s1413 + $0x80] sm:$0xff]
        %v1431 = vld [vmem:[%s1413 + $0x88] sm:$0xff]
        %v1432 = vld [vmem:[%s1413 + $0x90] sm:$0xff]
        %v1433 = vld [vmem:[%s1413 + $0x98] sm:$0xff]
        %v1434 = vld [vmem:[%s1413 + $0xa0] sm:$0xff]
        %v1435 = vld [vmem:[%s1413 + $0xa8] sm:$0xff]
        %v1436 = vld [vmem:[%s1413 + $0xb0] sm:$0xff]
        %v1437 = vld [vmem:[%s1413 + $0xb8] sm:$0xff]
        %v1438 = vld [vmem:[%s1413 + $0xc0] sm:$0xff]
        %v1439 = vld [vmem:[%s1413 + $0xc8] sm:$0xff]
        %v1440 = vld [vmem:[%s1413 + $0xd0] sm:$0xff]
        %v1441 = vld [vmem:[%s1413 + $0xd8] sm:$0xff]
        %v1442 = vld [vmem:[%s1413 + $0xe0] sm:$0xff]
        %v1443 = vld [vmem:[%s1413 + $0xe8] sm:$0xff]
        %v1444 = vld [vmem:[%s1413 + $0xf0] sm:$0xff]
        %v1445 = vld [vmem:[%s1413 + $0xf8] sm:$0xff]
        %v1447 = vrot.slane %v1412, 2
        %v1481 = vunpack.c.l.b16 %v1414
        %v1482 = vunpack.c.h.b16 %v1414
        %v1483 = vunpack.c.l.b16 %v1415
        %v1484 = vunpack.c.h.b16 %v1415
        %v1485 = vunpack.c.l.b16 %v1416
        %v1486 = vunpack.c.h.b16 %v1416
        %v1487 = vunpack.c.l.b16 %v1417
        %v1488 = vunpack.c.h.b16 %v1417
        %v1489 = vunpack.c.l.b16 %v1418
        %v1490 = vunpack.c.h.b16 %v1418
        %v1491 = vunpack.c.l.b16 %v1419
        %v1492 = vunpack.c.h.b16 %v1419
        %v1493 = vunpack.c.l.b16 %v1420
        %v1494 = vunpack.c.h.b16 %v1420
        %v1495 = vunpack.c.l.b16 %v1421
        %v1496 = vunpack.c.h.b16 %v1421
        %v1497 = vunpack.c.l.b16 %v1422
        %v1498 = vunpack.c.h.b16 %v1422
        %v1499 = vunpack.c.l.b16 %v1423
        %v1500 = vunpack.c.h.b16 %v1423
        %v1501 = vunpack.c.l.b16 %v1424
        %v1502 = vunpack.c.h.b16 %v1424
        %v1503 = vunpack.c.l.b16 %v1425
        %v1504 = vunpack.c.h.b16 %v1425
        %v1505 = vunpack.c.l.b16 %v1426
        %v1506 = vunpack.c.h.b16 %v1426
        %v1507 = vunpack.c.l.b16 %v1427
        %v1508 = vunpack.c.h.b16 %v1427
        %v1509 = vunpack.c.l.b16 %v1428
        %v1510 = vunpack.c.h.b16 %v1428
        %v1511 = vunpack.c.l.b16 %v1429
        %v1512 = vunpack.c.h.b16 %v1429
        %v1513 = vunpack.c.l.b16 %v1430
        %v1514 = vunpack.c.h.b16 %v1430
        %v1515 = vunpack.c.l.b16 %v1431
        %v1516 = vunpack.c.h.b16 %v1431
        %v1517 = vunpack.c.l.b16 %v1432
        %v1518 = vunpack.c.h.b16 %v1432
        %v1519 = vunpack.c.l.b16 %v1433
        %v1520 = vunpack.c.h.b16 %v1433
        %v1521 = vunpack.c.l.b16 %v1434
        %v1522 = vunpack.c.h.b16 %v1434
        %v1523 = vunpack.c.l.b16 %v1435
        %v1524 = vunpack.c.h.b16 %v1435
        %v1525 = vunpack.c.l.b16 %v1436
        %v1526 = vunpack.c.h.b16 %v1436
        %v1527 = vunpack.c.l.b16 %v1437
        %v1528 = vunpack.c.h.b16 %v1437
        %v1529 = vunpack.c.l.b16 %v1438
        %v1530 = vunpack.c.h.b16 %v1438
        %v1531 = vunpack.c.l.b16 %v1439
        %v1532 = vunpack.c.h.b16 %v1439
        %v1533 = vunpack.c.l.b16 %v1440
        %v1534 = vunpack.c.h.b16 %v1440
        %v1535 = vunpack.c.l.b16 %v1441
        %v1536 = vunpack.c.h.b16 %v1441
        %v1537 = vunpack.c.l.b16 %v1442
        %v1538 = vunpack.c.h.b16 %v1442
        %v1539 = vunpack.c.l.b16 %v1443
        %v1540 = vunpack.c.h.b16 %v1443
        %v1541 = vunpack.c.l.b16 %v1444
        %v1542 = vunpack.c.h.b16 %v1444
        %v1543 = vunpack.c.l.b16 %v1445
        %v1544 = vunpack.c.h.b16 %v1445
        %v1545 = vpack.c.b16 %v1485, %v1481
        %v1546 = vpack.c.b16 %v1486, %v1482
        %v1547 = vpack.c.b16 %v1487, %v1483
        %v1548 = vpack.c.b16 %v1488, %v1484
        %v1549 = vpack.c.b16 %v1493, %v1489
        %v1550 = vpack.c.b16 %v1494, %v1490
        %v1551 = vpack.c.b16 %v1495, %v1491
        %v1552 = vpack.c.b16 %v1496, %v1492
        %v1553 = vpack.c.b16 %v1501, %v1497
        %v1554 = vpack.c.b16 %v1502, %v1498
        %v1555 = vpack.c.b16 %v1503, %v1499
        %v1556 = vpack.c.b16 %v1504, %v1500
        %v1557 = vpack.c.b16 %v1509, %v1505
        %v1558 = vpack.c.b16 %v1510, %v1506
        %v1559 = vpack.c.b16 %v1511, %v1507
        %v1560 = vpack.c.b16 %v1512, %v1508
        %v1561 = vpack.c.b16 %v1517, %v1513
        %v1562 = vpack.c.b16 %v1518, %v1514
        %v1563 = vpack.c.b16 %v1519, %v1515
        %v1564 = vpack.c.b16 %v1520, %v1516
        %v1565 = vpack.c.b16 %v1525, %v1521
        %v1566 = vpack.c.b16 %v1526, %v1522
        %v1567 = vpack.c.b16 %v1527, %v1523
        %v1568 = vpack.c.b16 %v1528, %v1524
        %v1569 = vpack.c.b16 %v1533, %v1529
        %v1570 = vpack.c.b16 %v1534, %v1530
        %v1571 = vpack.c.b16 %v1535, %v1531
        %v1572 = vpack.c.b16 %v1536, %v1532
        %v1573 = vpack.c.b16 %v1541, %v1537
        %v1574 = vpack.c.b16 %v1542, %v1538
        %v1575 = vpack.c.b16 %v1543, %v1539
        %v1576 = vpack.c.b16 %v1544, %v1540
        %1609 = vmatprep.subr.bf16.mxu0 %v1546
        %1610 = vmatpush1.bf16.msra.mxu0 %v1545
        %1611 = vmatprep.subr.bf16.mxu0 %v1550
        %1612 = vmatpush1.bf16.msra.mxu0 %v1549
        %1613 = vmatprep.subr.bf16.mxu0 %v1554
        %1614 = vmatpush1.bf16.msra.mxu0 %v1553
        %1615 = vmatprep.subr.bf16.mxu0 %v1558
        %1616 = vmatpush1.bf16.msra.mxu0 %v1557
        %1617 = vmatprep.subr.bf16.mxu0 %v1562
        %1618 = vmatpush1.bf16.msra.mxu0 %v1561
        %1619 = vmatprep.subr.bf16.mxu0 %v1566
        %1620 = vmatpush1.bf16.msra.mxu0 %v1565
        %1621 = vmatprep.subr.bf16.mxu0 %v1570
        %1622 = vmatpush1.bf16.msra.mxu0 %v1569
        %1623 = vmatprep.subr.bf16.mxu0 %v1574
        %1624 = vmatpush1.bf16.msra.mxu0 %v1573
        %1625 = vmatprep.subr.bf16.mxu0 0
        %1626 = vmatpush1.bf16.msra.mxu0 0
        %1627 = vmatprep.subr.bf16.mxu0 0
        %1628 = vmatpush1.bf16.msra.mxu0 0
        %1629 = vmatprep.subr.bf16.mxu0 0
        %1630 = vmatpush1.bf16.msra.mxu0 0
        %1631 = vmatprep.subr.bf16.mxu0 0
        %1632 = vmatpush1.bf16.msra.mxu0 0
        %1633 = vmatprep.subr.bf16.mxu0 0
        %1634 = vmatpush1.bf16.msra.mxu0 0
        %1635 = vmatprep.subr.bf16.mxu0 0
        %1636 = vmatpush1.bf16.msra.mxu0 0
        %1637 = vmatprep.subr.bf16.mxu0 0
        %1638 = vmatpush1.bf16.msra.mxu0 0
        %1639 = vmatprep.subr.bf16.mxu0 0
        %1640 = vmatpush1.bf16.msra.mxu0 0
        %1641 = vmatprep.mubr.bf16.mxu0 0
        %1642 = vmatmul.mubr.bf16.gmra.mrb[0].mxu0 %v1447
        %v1643 = vpop.f32.mrb[0].mxu0
        %v1644 = vadd.f32 0.0, %v1643
        %v1645 = vpop.f32.mrb[0].mxu0
        %v1646 = vadd.f32 0.0, %v1645
        %v1647 = vpop.f32.mrb[0].mxu0
        %v1648 = vpop.f32.mrb[0].mxu0
        %1649 = vdwg.mxu0
        %1650 = vmatprep.subr.bf16.mxu0 %v1548
        %1651 = vmatpush1.bf16.msra.mxu0 %v1547
        %1652 = vmatprep.subr.bf16.mxu0 %v1552
        %1653 = vmatpush1.bf16.msra.mxu0 %v1551
        %1654 = vmatprep.subr.bf16.mxu0 %v1556
        %1655 = vmatpush1.bf16.msra.mxu0 %v1555
        %1656 = vmatprep.subr.bf16.mxu0 %v1560
        %1657 = vmatpush1.bf16.msra.mxu0 %v1559
        %1658 = vmatprep.subr.bf16.mxu0 %v1564
        %1659 = vmatpush1.bf16.msra.mxu0 %v1563
        %1660 = vmatprep.subr.bf16.mxu0 %v1568
        %1661 = vmatpush1.bf16.msra.mxu0 %v1567
        %1662 = vmatprep.subr.bf16.mxu0 %v1572
        %1663 = vmatpush1.bf16.msra.mxu0 %v1571
        %1664 = vmatprep.subr.bf16.mxu0 %v1576
        %1665 = vmatpush1.bf16.msra.mxu0 %v1575
        %1666 = vmatprep.subr.bf16.mxu0 0
        %1667 = vmatpush1.bf16.msra.mxu0 0
        %1668 = vmatprep.subr.bf16.mxu0 0
        %1669 = vmatpush1.bf16.msra.mxu0 0
        %1670 = vmatprep.subr.bf16.mxu0 0
        %1671 = vmatpush1.bf16.msra.mxu0 0
        %1672 = vmatprep.subr.bf16.mxu0 0
        %1673 = vmatpush1.bf16.msra.mxu0 0
        %1674 = vmatprep.subr.bf16.mxu0 0
        %1675 = vmatpush1.bf16.msra.mxu0 0
        %1676 = vmatprep.subr.bf16.mxu0 0
        %1677 = vmatpush1.bf16.msra.mxu0 0
        %1678 = vmatprep.subr.bf16.mxu0 0
        %1679 = vmatpush1.bf16.msra.mxu0 0
        %1680 = vmatprep.subr.bf16.mxu0 0
        %1681 = vmatpush1.bf16.msra.mxu0 0
        %1682 = vmatprep.mubr.bf16.mxu0 0
        %1683 = vmatmul.mubr.bf16.gmra.mrb[0].mxu0 %v1447
        %v1684 = vpop.f32.mrb[0].mxu0
        %v1685 = vadd.f32 0.0, %v1684
        %v1686 = vpop.f32.mrb[0].mxu0
        %v1687 = vadd.f32 0.0, %v1686
        %v1688 = vpop.f32.mrb[0].mxu0
        %v1689 = vpop.f32.mrb[0].mxu0
        %1690 = vdwg.mxu0
        %v1691 = vadd.f32 %v1365, %v1644
        %v1692 = vadd.f32 %v1367, %v1646
        %v1693 = vadd.f32 %v1406, %v1685
        %v1694 = vadd.f32 %v1408, %v1687
        %v1695 = vld [vmem:[#allocation2] sm:$0x8]
        %s1696 = scalar_lea.vmem %s403, 768 [#allocation10]
        %v1697 = vld [vmem:[%s1696] sm:$0xff]
        %v1698 = vld [vmem:[%s1696 + $0x8] sm:$0xff]
        %v1699 = vld [vmem:[%s1696 + $0x10] sm:$0xff]
        %v1700 = vld [vmem:[%s1696 + $0x18] sm:$0xff]
        %v1701 = vld [vmem:[%s1696 + $0x20] sm:$0xff]
        %v1702 = vld [vmem:[%s1696 + $0x28] sm:$0xff]
        %v1703 = vld [vmem:[%s1696 + $0x30] sm:$0xff]
        %v1704 = vld [vmem:[%s1696 + $0x38] sm:$0xff]
        %v1705 = vld [vmem:[%s1696 + $0x40] sm:$0xff]
        %v1706 = vld [vmem:[%s1696 + $0x48] sm:$0xff]
        %v1707 = vld [vmem:[%s1696 + $0x50] sm:$0xff]
        %v1708 = vld [vmem:[%s1696 + $0x58] sm:$0xff]
        %v1709 = vld [vmem:[%s1696 + $0x60] sm:$0xff]
        %v1710 = vld [vmem:[%s1696 + $0x68] sm:$0xff]
        %v1711 = vld [vmem:[%s1696 + $0x70] sm:$0xff]
        %v1712 = vld [vmem:[%s1696 + $0x78] sm:$0xff]
        %v1713 = vld [vmem:[%s1696 + $0x80] sm:$0xff]
        %v1714 = vld [vmem:[%s1696 + $0x88] sm:$0xff]
        %v1715 = vld [vmem:[%s1696 + $0x90] sm:$0xff]
        %v1716 = vld [vmem:[%s1696 + $0x98] sm:$0xff]
        %v1717 = vld [vmem:[%s1696 + $0xa0] sm:$0xff]
        %v1718 = vld [vmem:[%s1696 + $0xa8] sm:$0xff]
        %v1719 = vld [vmem:[%s1696 + $0xb0] sm:$0xff]
        %v1720 = vld [vmem:[%s1696 + $0xb8] sm:$0xff]
        %v1721 = vld [vmem:[%s1696 + $0xc0] sm:$0xff]
        %v1722 = vld [vmem:[%s1696 + $0xc8] sm:$0xff]
        %v1723 = vld [vmem:[%s1696 + $0xd0] sm:$0xff]
        %v1724 = vld [vmem:[%s1696 + $0xd8] sm:$0xff]
        %v1725 = vld [vmem:[%s1696 + $0xe0] sm:$0xff]
        %v1726 = vld [vmem:[%s1696 + $0xe8] sm:$0xff]
        %v1727 = vld [vmem:[%s1696 + $0xf0] sm:$0xff]
        %v1728 = vld [vmem:[%s1696 + $0xf8] sm:$0xff]
        %v1730 = vrot.slane %v1695, 3
        %v1764 = vunpack.c.l.b16 %v1697
        %v1765 = vunpack.c.h.b16 %v1697
        %v1766 = vunpack.c.l.b16 %v1698
        %v1767 = vunpack.c.h.b16 %v1698
        %v1768 = vunpack.c.l.b16 %v1699
        %v1769 = vunpack.c.h.b16 %v1699
        %v1770 = vunpack.c.l.b16 %v1700
        %v1771 = vunpack.c.h.b16 %v1700
        %v1772 = vunpack.c.l.b16 %v1701
        %v1773 = vunpack.c.h.b16 %v1701
        %v1774 = vunpack.c.l.b16 %v1702
        %v1775 = vunpack.c.h.b16 %v1702
        %v1776 = vunpack.c.l.b16 %v1703
        %v1777 = vunpack.c.h.b16 %v1703
        %v1778 = vunpack.c.l.b16 %v1704
        %v1779 = vunpack.c.h.b16 %v1704
        %v1780 = vunpack.c.l.b16 %v1705
        %v1781 = vunpack.c.h.b16 %v1705
        %v1782 = vunpack.c.l.b16 %v1706
        %v1783 = vunpack.c.h.b16 %v1706
        %v1784 = vunpack.c.l.b16 %v1707
        %v1785 = vunpack.c.h.b16 %v1707
        %v1786 = vunpack.c.l.b16 %v1708
        %v1787 = vunpack.c.h.b16 %v1708
        %v1788 = vunpack.c.l.b16 %v1709
        %v1789 = vunpack.c.h.b16 %v1709
        %v1790 = vunpack.c.l.b16 %v1710
        %v1791 = vunpack.c.h.b16 %v1710
        %v1792 = vunpack.c.l.b16 %v1711
        %v1793 = vunpack.c.h.b16 %v1711
        %v1794 = vunpack.c.l.b16 %v1712
        %v1795 = vunpack.c.h.b16 %v1712
        %v1796 = vunpack.c.l.b16 %v1713
        %v1797 = vunpack.c.h.b16 %v1713
        %v1798 = vunpack.c.l.b16 %v1714
        %v1799 = vunpack.c.h.b16 %v1714
        %v1800 = vunpack.c.l.b16 %v1715
        %v1801 = vunpack.c.h.b16 %v1715
        %v1802 = vunpack.c.l.b16 %v1716
        %v1803 = vunpack.c.h.b16 %v1716
        %v1804 = vunpack.c.l.b16 %v1717
        %v1805 = vunpack.c.h.b16 %v1717
        %v1806 = vunpack.c.l.b16 %v1718
        %v1807 = vunpack.c.h.b16 %v1718
        %v1808 = vunpack.c.l.b16 %v1719
        %v1809 = vunpack.c.h.b16 %v1719
        %v1810 = vunpack.c.l.b16 %v1720
        %v1811 = vunpack.c.h.b16 %v1720
        %v1812 = vunpack.c.l.b16 %v1721
        %v1813 = vunpack.c.h.b16 %v1721
        %v1814 = vunpack.c.l.b16 %v1722
        %v1815 = vunpack.c.h.b16 %v1722
        %v1816 = vunpack.c.l.b16 %v1723
        %v1817 = vunpack.c.h.b16 %v1723
        %v1818 = vunpack.c.l.b16 %v1724
        %v1819 = vunpack.c.h.b16 %v1724
        %v1820 = vunpack.c.l.b16 %v1725
        %v1821 = vunpack.c.h.b16 %v1725
        %v1822 = vunpack.c.l.b16 %v1726
        %v1823 = vunpack.c.h.b16 %v1726
        %v1824 = vunpack.c.l.b16 %v1727
        %v1825 = vunpack.c.h.b16 %v1727
        %v1826 = vunpack.c.l.b16 %v1728
        %v1827 = vunpack.c.h.b16 %v1728
        %v1828 = vpack.c.b16 %v1768, %v1764
        %v1829 = vpack.c.b16 %v1769, %v1765
        %v1830 = vpack.c.b16 %v1770, %v1766
        %v1831 = vpack.c.b16 %v1771, %v1767
        %v1832 = vpack.c.b16 %v1776, %v1772
        %v1833 = vpack.c.b16 %v1777, %v1773
        %v1834 = vpack.c.b16 %v1778, %v1774
        %v1835 = vpack.c.b16 %v1779, %v1775
        %v1836 = vpack.c.b16 %v1784, %v1780
        %v1837 = vpack.c.b16 %v1785, %v1781
        %v1838 = vpack.c.b16 %v1786, %v1782
        %v1839 = vpack.c.b16 %v1787, %v1783
        %v1840 = vpack.c.b16 %v1792, %v1788
        %v1841 = vpack.c.b16 %v1793, %v1789
        %v1842 = vpack.c.b16 %v1794, %v1790
        %v1843 = vpack.c.b16 %v1795, %v1791
        %v1844 = vpack.c.b16 %v1800, %v1796
        %v1845 = vpack.c.b16 %v1801, %v1797
        %v1846 = vpack.c.b16 %v1802, %v1798
        %v1847 = vpack.c.b16 %v1803, %v1799
        %v1848 = vpack.c.b16 %v1808, %v1804
        %v1849 = vpack.c.b16 %v1809, %v1805
        %v1850 = vpack.c.b16 %v1810, %v1806
        %v1851 = vpack.c.b16 %v1811, %v1807
        %v1852 = vpack.c.b16 %v1816, %v1812
        %v1853 = vpack.c.b16 %v1817, %v1813
        %v1854 = vpack.c.b16 %v1818, %v1814
        %v1855 = vpack.c.b16 %v1819, %v1815
        %v1856 = vpack.c.b16 %v1824, %v1820
        %v1857 = vpack.c.b16 %v1825, %v1821
        %v1858 = vpack.c.b16 %v1826, %v1822
        %v1859 = vpack.c.b16 %v1827, %v1823
        %1892 = vmatprep.subr.bf16.mxu0 %v1829
        %1893 = vmatpush1.bf16.msra.mxu0 %v1828
        %1894 = vmatprep.subr.bf16.mxu0 %v1833
        %1895 = vmatpush1.bf16.msra.mxu0 %v1832
        %1896 = vmatprep.subr.bf16.mxu0 %v1837
        %1897 = vmatpush1.bf16.msra.mxu0 %v1836
        %1898 = vmatprep.subr.bf16.mxu0 %v1841
        %1899 = vmatpush1.bf16.msra.mxu0 %v1840
        %1900 = vmatprep.subr.bf16.mxu0 %v1845
        %1901 = vmatpush1.bf16.msra.mxu0 %v1844
        %1902 = vmatprep.subr.bf16.mxu0 %v1849
        %1903 = vmatpush1.bf16.msra.mxu0 %v1848
        %1904 = vmatprep.subr.bf16.mxu0 %v1853
        %1905 = vmatpush1.bf16.msra.mxu0 %v1852
        %1906 = vmatprep.subr.bf16.mxu0 %v1857
        %1907 = vmatpush1.bf16.msra.mxu0 %v1856
        %1908 = vmatprep.subr.bf16.mxu0 0
        %1909 = vmatpush1.bf16.msra.mxu0 0
        %1910 = vmatprep.subr.bf16.mxu0 0
        %1911 = vmatpush1.bf16.msra.mxu0 0
        %1912 = vmatprep.subr.bf16.mxu0 0
        %1913 = vmatpush1.bf16.msra.mxu0 0
        %1914 = vmatprep.subr.bf16.mxu0 0
        %1915 = vmatpush1.bf16.msra.mxu0 0
        %1916 = vmatprep.subr.bf16.mxu0 0
        %1917 = vmatpush1.bf16.msra.mxu0 0
        %1918 = vmatprep.subr.bf16.mxu0 0
        %1919 = vmatpush1.bf16.msra.mxu0 0
        %1920 = vmatprep.subr.bf16.mxu0 0
        %1921 = vmatpush1.bf16.msra.mxu0 0
        %1922 = vmatprep.subr.bf16.mxu0 0
        %1923 = vmatpush1.bf16.msra.mxu0 0
        %1924 = vmatprep.mubr.bf16.mxu0 0
        %1925 = vmatmul.mubr.bf16.gmra.mrb[0].mxu0 %v1730
        %v1926 = vpop.f32.mrb[0].mxu0
        %v1927 = vadd.f32 0.0, %v1926
        %v1928 = vpop.f32.mrb[0].mxu0
        %v1929 = vadd.f32 0.0, %v1928
        %v1930 = vpop.f32.mrb[0].mxu0
        %v1931 = vpop.f32.mrb[0].mxu0
        %1932 = vdwg.mxu0
        %1933 = vmatprep.subr.bf16.mxu0 %v1831
        %1934 = vmatpush1.bf16.msra.mxu0 %v1830
        %1935 = vmatprep.subr.bf16.mxu0 %v1835
        %1936 = vmatpush1.bf16.msra.mxu0 %v1834
        %1937 = vmatprep.subr.bf16.mxu0 %v1839
        %1938 = vmatpush1.bf16.msra.mxu0 %v1838
        %1939 = vmatprep.subr.bf16.mxu0 %v1843
        %1940 = vmatpush1.bf16.msra.mxu0 %v1842
        %1941 = vmatprep.subr.bf16.mxu0 %v1847
        %1942 = vmatpush1.bf16.msra.mxu0 %v1846
        %1943 = vmatprep.subr.bf16.mxu0 %v1851
        %1944 = vmatpush1.bf16.msra.mxu0 %v1850
        %1945 = vmatprep.subr.bf16.mxu0 %v1855
        %1946 = vmatpush1.bf16.msra.mxu0 %v1854
        %1947 = vmatprep.subr.bf16.mxu0 %v1859
        %1948 = vmatpush1.bf16.msra.mxu0 %v1858
        %1949 = vmatprep.subr.bf16.mxu0 0
        %1950 = vmatpush1.bf16.msra.mxu0 0
        %1951 = vmatprep.subr.bf16.mxu0 0
        %1952 = vmatpush1.bf16.msra.mxu0 0
        %1953 = vmatprep.subr.bf16.mxu0 0
        %1954 = vmatpush1.bf16.msra.mxu0 0
        %1955 = vmatprep.subr.bf16.mxu0 0
        %1956 = vmatpush1.bf16.msra.mxu0 0
        %1957 = vmatprep.subr.bf16.mxu0 0
        %1958 = vmatpush1.bf16.msra.mxu0 0
        %1959 = vmatprep.subr.bf16.mxu0 0
        %1960 = vmatpush1.bf16.msra.mxu0 0
        %1961 = vmatprep.subr.bf16.mxu0 0
        %1962 = vmatpush1.bf16.msra.mxu0 0
        %1963 = vmatprep.subr.bf16.mxu0 0
        %1964 = vmatpush1.bf16.msra.mxu0 0
        %1965 = vmatprep.mubr.bf16.mxu0 0
        %1966 = vmatmul.mubr.bf16.gmra.mrb[0].mxu0 %v1730
        %v1967 = vpop.f32.mrb[0].mxu0
        %v1968 = vadd.f32 0.0, %v1967
        %v1969 = vpop.f32.mrb[0].mxu0
        %v1970 = vadd.f32 0.0, %v1969
        %v1971 = vpop.f32.mrb[0].mxu0
        %v1972 = vpop.f32.mrb[0].mxu0
        %1973 = vdwg.mxu0
        %v1974 = vadd.f32 %v1691, %v1927
        %v1975 = vadd.f32 %v1692, %v1929
        %v1976 = vadd.f32 %v1693, %v1968
        %v1977 = vadd.f32 %v1694, %v1970
        %v1978 = vld [vmem:[#allocation2] sm:$0x10]
        %s1979 = scalar_lea.vmem %s403, 1024 [#allocation10]
        %v1980 = vld [vmem:[%s1979] sm:$0xff]
        %v1981 = vld [vmem:[%s1979 + $0x8] sm:$0xff]
        %v1982 = vld [vmem:[%s1979 + $0x10] sm:$0xff]
        %v1983 = vld [vmem:[%s1979 + $0x18] sm:$0xff]
        %v1984 = vld [vmem:[%s1979 + $0x20] sm:$0xff]
        %v1985 = vld [vmem:[%s1979 + $0x28] sm:$0xff]
        %v1986 = vld [vmem:[%s1979 + $0x30] sm:$0xff]
        %v1987 = vld [vmem:[%s1979 + $0x38] sm:$0xff]
        %v1988 = vld [vmem:[%s1979 + $0x40] sm:$0xff]
        %v1989 = vld [vmem:[%s1979 + $0x48] sm:$0xff]
        %v1990 = vld [vmem:[%s1979 + $0x50] sm:$0xff]
        %v1991 = vld [vmem:[%s1979 + $0x58] sm:$0xff]
        %v1992 = vld [vmem:[%s1979 + $0x60] sm:$0xff]
        %v1993 = vld [vmem:[%s1979 + $0x68] sm:$0xff]
        %v1994 = vld [vmem:[%s1979 + $0x70] sm:$0xff]
        %v1995 = vld [vmem:[%s1979 + $0x78] sm:$0xff]
        %v1996 = vld [vmem:[%s1979 + $0x80] sm:$0xff]
        %v1997 = vld [vmem:[%s1979 + $0x88] sm:$0xff]
        %v1998 = vld [vmem:[%s1979 + $0x90] sm:$0xff]
        %v1999 = vld [vmem:[%s1979 + $0x98] sm:$0xff]
        %v2000 = vld [vmem:[%s1979 + $0xa0] sm:$0xff]
        %v2001 = vld [vmem:[%s1979 + $0xa8] sm:$0xff]
        %v2002 = vld [vmem:[%s1979 + $0xb0] sm:$0xff]
        %v2003 = vld [vmem:[%s1979 + $0xb8] sm:$0xff]
        %v2004 = vld [vmem:[%s1979 + $0xc0] sm:$0xff]
        %v2005 = vld [vmem:[%s1979 + $0xc8] sm:$0xff]
        %v2006 = vld [vmem:[%s1979 + $0xd0] sm:$0xff]
        %v2007 = vld [vmem:[%s1979 + $0xd8] sm:$0xff]
        %v2008 = vld [vmem:[%s1979 + $0xe0] sm:$0xff]
        %v2009 = vld [vmem:[%s1979 + $0xe8] sm:$0xff]
        %v2010 = vld [vmem:[%s1979 + $0xf0] sm:$0xff]
        %v2011 = vld [vmem:[%s1979 + $0xf8] sm:$0xff]
        %v2013 = vrot.slane %v1978, 4
        %v2047 = vunpack.c.l.b16 %v1980
        %v2048 = vunpack.c.h.b16 %v1980
        %v2049 = vunpack.c.l.b16 %v1981
        %v2050 = vunpack.c.h.b16 %v1981
        %v2051 = vunpack.c.l.b16 %v1982
        %v2052 = vunpack.c.h.b16 %v1982
        %v2053 = vunpack.c.l.b16 %v1983
        %v2054 = vunpack.c.h.b16 %v1983
        %v2055 = vunpack.c.l.b16 %v1984
        %v2056 = vunpack.c.h.b16 %v1984
        %v2057 = vunpack.c.l.b16 %v1985
        %v2058 = vunpack.c.h.b16 %v1985
        %v2059 = vunpack.c.l.b16 %v1986
        %v2060 = vunpack.c.h.b16 %v1986
        %v2061 = vunpack.c.l.b16 %v1987
        %v2062 = vunpack.c.h.b16 %v1987
        %v2063 = vunpack.c.l.b16 %v1988
        %v2064 = vunpack.c.h.b16 %v1988
        %v2065 = vunpack.c.l.b16 %v1989
        %v2066 = vunpack.c.h.b16 %v1989
        %v2067 = vunpack.c.l.b16 %v1990
        %v2068 = vunpack.c.h.b16 %v1990
        %v2069 = vunpack.c.l.b16 %v1991
        %v2070 = vunpack.c.h.b16 %v1991
        %v2071 = vunpack.c.l.b16 %v1992
        %v2072 = vunpack.c.h.b16 %v1992
        %v2073 = vunpack.c.l.b16 %v1993
        %v2074 = vunpack.c.h.b16 %v1993
        %v2075 = vunpack.c.l.b16 %v1994
        %v2076 = vunpack.c.h.b16 %v1994
        %v2077 = vunpack.c.l.b16 %v1995
        %v2078 = vunpack.c.h.b16 %v1995
        %v2079 = vunpack.c.l.b16 %v1996
        %v2080 = vunpack.c.h.b16 %v1996
        %v2081 = vunpack.c.l.b16 %v1997
        %v2082 = vunpack.c.h.b16 %v1997
        %v2083 = vunpack.c.l.b16 %v1998
        %v2084 = vunpack.c.h.b16 %v1998
        %v2085 = vunpack.c.l.b16 %v1999
        %v2086 = vunpack.c.h.b16 %v1999
        %v2087 = vunpack.c.l.b16 %v2000
        %v2088 = vunpack.c.h.b16 %v2000
        %v2089 = vunpack.c.l.b16 %v2001
        %v2090 = vunpack.c.h.b16 %v2001
        %v2091 = vunpack.c.l.b16 %v2002
        %v2092 = vunpack.c.h.b16 %v2002
        %v2093 = vunpack.c.l.b16 %v2003
        %v2094 = vunpack.c.h.b16 %v2003
        %v2095 = vunpack.c.l.b16 %v2004
        %v2096 = vunpack.c.h.b16 %v2004
        %v2097 = vunpack.c.l.b16 %v2005
        %v2098 = vunpack.c.h.b16 %v2005
        %v2099 = vunpack.c.l.b16 %v2006
        %v2100 = vunpack.c.h.b16 %v2006
        %v2101 = vunpack.c.l.b16 %v2007
        %v2102 = vunpack.c.h.b16 %v2007
        %v2103 = vunpack.c.l.b16 %v2008
        %v2104 = vunpack.c.h.b16 %v2008
        %v2105 = vunpack.c.l.b16 %v2009
        %v2106 = vunpack.c.h.b16 %v2009
        %v2107 = vunpack.c.l.b16 %v2010
        %v2108 = vunpack.c.h.b16 %v2010
        %v2109 = vunpack.c.l.b16 %v2011
        %v2110 = vunpack.c.h.b16 %v2011
        %v2111 = vpack.c.b16 %v2051, %v2047
        %v2112 = vpack.c.b16 %v2052, %v2048
        %v2113 = vpack.c.b16 %v2053, %v2049
        %v2114 = vpack.c.b16 %v2054, %v2050
        %v2115 = vpack.c.b16 %v2059, %v2055
        %v2116 = vpack.c.b16 %v2060, %v2056
        %v2117 = vpack.c.b16 %v2061, %v2057
        %v2118 = vpack.c.b16 %v2062, %v2058
        %v2119 = vpack.c.b16 %v2067, %v2063
        %v2120 = vpack.c.b16 %v2068, %v2064
        %v2121 = vpack.c.b16 %v2069, %v2065
        %v2122 = vpack.c.b16 %v2070, %v2066
        %v2123 = vpack.c.b16 %v2075, %v2071
        %v2124 = vpack.c.b16 %v2076, %v2072
        %v2125 = vpack.c.b16 %v2077, %v2073
        %v2126 = vpack.c.b16 %v2078, %v2074
        %v2127 = vpack.c.b16 %v2083, %v2079
        %v2128 = vpack.c.b16 %v2084, %v2080
        %v2129 = vpack.c.b16 %v2085, %v2081
        %v2130 = vpack.c.b16 %v2086, %v2082
        %v2131 = vpack.c.b16 %v2091, %v2087
        %v2132 = vpack.c.b16 %v2092, %v2088
        %v2133 = vpack.c.b16 %v2093, %v2089
        %v2134 = vpack.c.b16 %v2094, %v2090
        %v2135 = vpack.c.b16 %v2099, %v2095
        %v2136 = vpack.c.b16 %v2100, %v2096
        %v2137 = vpack.c.b16 %v2101, %v2097
        %v2138 = vpack.c.b16 %v2102, %v2098
        %v2139 = vpack.c.b16 %v2107, %v2103
        %v2140 = vpack.c.b16 %v2108, %v2104
        %v2141 = vpack.c.b16 %v2109, %v2105
        %v2142 = vpack.c.b16 %v2110, %v2106
        %2175 = vmatprep.subr.bf16.mxu0 %v2112
        %2176 = vmatpush1.bf16.msra.mxu0 %v2111
        %2177 = vmatprep.subr.bf16.mxu0 %v2116
        %2178 = vmatpush1.bf16.msra.mxu0 %v2115
        %2179 = vmatprep.subr.bf16.mxu0 %v2120
        %2180 = vmatpush1.bf16.msra.mxu0 %v2119
        %2181 = vmatprep.subr.bf16.mxu0 %v2124
        %2182 = vmatpush1.bf16.msra.mxu0 %v2123
        %2183 = vmatprep.subr.bf16.mxu0 %v2128
        %2184 = vmatpush1.bf16.msra.mxu0 %v2127
        %2185 = vmatprep.subr.bf16.mxu0 %v2132
        %2186 = vmatpush1.bf16.msra.mxu0 %v2131
        %2187 = vmatprep.subr.bf16.mxu0 %v2136
        %2188 = vmatpush1.bf16.msra.mxu0 %v2135
        %2189 = vmatprep.subr.bf16.mxu0 %v2140
        %2190 = vmatpush1.bf16.msra.mxu0 %v2139
        %2191 = vmatprep.subr.bf16.mxu0 0
        %2192 = vmatpush1.bf16.msra.mxu0 0
        %2193 = vmatprep.subr.bf16.mxu0 0
        %2194 = vmatpush1.bf16.msra.mxu0 0
        %2195 = vmatprep.subr.bf16.mxu0 0
        %2196 = vmatpush1.bf16.msra.mxu0 0
        %2197 = vmatprep.subr.bf16.mxu0 0
        %2198 = vmatpush1.bf16.msra.mxu0 0
        %2199 = vmatprep.subr.bf16.mxu0 0
        %2200 = vmatpush1.bf16.msra.mxu0 0
        %2201 = vmatprep.subr.bf16.mxu0 0
        %2202 = vmatpush1.bf16.msra.mxu0 0
        %2203 = vmatprep.subr.bf16.mxu0 0
        %2204 = vmatpush1.bf16.msra.mxu0 0
        %2205 = vmatprep.subr.bf16.mxu0 0
        %2206 = vmatpush1.bf16.msra.mxu0 0
        %2207 = vmatprep.mubr.bf16.mxu0 0
        %2208 = vmatmul.mubr.bf16.gmra.mrb[0].mxu0 %v2013
        %v2209 = vpop.f32.mrb[0].mxu0
        %v2210 = vadd.f32 0.0, %v2209
        %v2211 = vpop.f32.mrb[0].mxu0
        %v2212 = vadd.f32 0.0, %v2211
        %v2213 = vpop.f32.mrb[0].mxu0
        %v2214 = vpop.f32.mrb[0].mxu0
        %2215 = vdwg.mxu0
        %2216 = vmatprep.subr.bf16.mxu0 %v2114
        %2217 = vmatpush1.bf16.msra.mxu0 %v2113
        %2218 = vmatprep.subr.bf16.mxu0 %v2118
        %2219 = vmatpush1.bf16.msra.mxu0 %v2117
        %2220 = vmatprep.subr.bf16.mxu0 %v2122
        %2221 = vmatpush1.bf16.msra.mxu0 %v2121
        %2222 = vmatprep.subr.bf16.mxu0 %v2126
        %2223 = vmatpush1.bf16.msra.mxu0 %v2125
        %2224 = vmatprep.subr.bf16.mxu0 %v2130
        %2225 = vmatpush1.bf16.msra.mxu0 %v2129
        %2226 = vmatprep.subr.bf16.mxu0 %v2134
        %2227 = vmatpush1.bf16.msra.mxu0 %v2133
        %2228 = vmatprep.subr.bf16.mxu0 %v2138
        %2229 = vmatpush1.bf16.msra.mxu0 %v2137
        %2230 = vmatprep.subr.bf16.mxu0 %v2142
        %2231 = vmatpush1.bf16.msra.mxu0 %v2141
        %2232 = vmatprep.subr.bf16.mxu0 0
        %2233 = vmatpush1.bf16.msra.mxu0 0
        %2234 = vmatprep.subr.bf16.mxu0 0
        %2235 = vmatpush1.bf16.msra.mxu0 0
        %2236 = vmatprep.subr.bf16.mxu0 0
        %2237 = vmatpush1.bf16.msra.mxu0 0
        %2238 = vmatprep.subr.bf16.mxu0 0
        %2239 = vmatpush1.bf16.msra.mxu0 0
        %2240 = vmatprep.subr.bf16.mxu0 0
        %2241 = vmatpush1.bf16.msra.mxu0 0
        %2242 = vmatprep.subr.bf16.mxu0 0
        %2243 = vmatpush1.bf16.msra.mxu0 0
        %2244 = vmatprep.subr.bf16.mxu0 0
        %2245 = vmatpush1.bf16.msra.mxu0 0
        %2246 = vmatprep.subr.bf16.mxu0 0
        %2247 = vmatpush1.bf16.msra.mxu0 0
        %2248 = vmatprep.mubr.bf16.mxu0 0
        %2249 = vmatmul.mubr.bf16.gmra.mrb[0].mxu0 %v2013
        %v2250 = vpop.f32.mrb[0].mxu0
        %v2251 = vadd.f32 0.0, %v2250
        %v2252 = vpop.f32.mrb[0].mxu0
        %v2253 = vadd.f32 0.0, %v2252
        %v2254 = vpop.f32.mrb[0].mxu0
        %v2255 = vpop.f32.mrb[0].mxu0
        %2256 = vdwg.mxu0
        %v2257 = vadd.f32 %v1974, %v2210
        %v2258 = vadd.f32 %v1975, %v2212
        %v2259 = vadd.f32 %v1976, %v2251
        %v2260 = vadd.f32 %v1977, %v2253
        %v2261 = vld [vmem:[#allocation2] sm:$0x20]
        %s2262 = scalar_lea.vmem %s403, 1280 [#allocation10]
        %v2263 = vld [vmem:[%s2262] sm:$0xff]
        %v2264 = vld [vmem:[%s2262 + $0x8] sm:$0xff]
        %v2265 = vld [vmem:[%s2262 + $0x10] sm:$0xff]
        %v2266 = vld [vmem:[%s2262 + $0x18] sm:$0xff]
        %v2267 = vld [vmem:[%s2262 + $0x20] sm:$0xff]
        %v2268 = vld [vmem:[%s2262 + $0x28] sm:$0xff]
        %v2269 = vld [vmem:[%s2262 + $0x30] sm:$0xff]
        %v2270 = vld [vmem:[%s2262 + $0x38] sm:$0xff]
        %v2271 = vld [vmem:[%s2262 + $0x40] sm:$0xff]
        %v2272 = vld [vmem:[%s2262 + $0x48] sm:$0xff]
        %v2273 = vld [vmem:[%s2262 + $0x50] sm:$0xff]
        %v2274 = vld [vmem:[%s2262 + $0x58] sm:$0xff]
        %v2275 = vld [vmem:[%s2262 + $0x60] sm:$0xff]
        %v2276 = vld [vmem:[%s2262 + $0x68] sm:$0xff]
        %v2277 = vld [vmem:[%s2262 + $0x70] sm:$0xff]
        %v2278 = vld [vmem:[%s2262 + $0x78] sm:$0xff]
        %v2279 = vld [vmem:[%s2262 + $0x80] sm:$0xff]
        %v2280 = vld [vmem:[%s2262 + $0x88] sm:$0xff]
        %v2281 = vld [vmem:[%s2262 + $0x90] sm:$0xff]
        %v2282 = vld [vmem:[%s2262 + $0x98] sm:$0xff]
        %v2283 = vld [vmem:[%s2262 + $0xa0] sm:$0xff]
        %v2284 = vld [vmem:[%s2262 + $0xa8] sm:$0xff]
        %v2285 = vld [vmem:[%s2262 + $0xb0] sm:$0xff]
        %v2286 = vld [vmem:[%s2262 + $0xb8] sm:$0xff]
        %v2287 = vld [vmem:[%s2262 + $0xc0] sm:$0xff]
        %v2288 = vld [vmem:[%s2262 + $0xc8] sm:$0xff]
        %v2289 = vld [vmem:[%s2262 + $0xd0] sm:$0xff]
        %v2290 = vld [vmem:[%s2262 + $0xd8] sm:$0xff]
        %v2291 = vld [vmem:[%s2262 + $0xe0] sm:$0xff]
        %v2292 = vld [vmem:[%s2262 + $0xe8] sm:$0xff]
        %v2293 = vld [vmem:[%s2262 + $0xf0] sm:$0xff]
        %v2294 = vld [vmem:[%s2262 + $0xf8] sm:$0xff]
        %v2296 = vrot.slane %v2261, 5
        %v2330 = vunpack.c.l.b16 %v2263
        %v2331 = vunpack.c.h.b16 %v2263
        %v2332 = vunpack.c.l.b16 %v2264
        %v2333 = vunpack.c.h.b16 %v2264
        %v2334 = vunpack.c.l.b16 %v2265
        %v2335 = vunpack.c.h.b16 %v2265
        %v2336 = vunpack.c.l.b16 %v2266
        %v2337 = vunpack.c.h.b16 %v2266
        %v2338 = vunpack.c.l.b16 %v2267
        %v2339 = vunpack.c.h.b16 %v2267
        %v2340 = vunpack.c.l.b16 %v2268
        %v2341 = vunpack.c.h.b16 %v2268
        %v2342 = vunpack.c.l.b16 %v2269
        %v2343 = vunpack.c.h.b16 %v2269
        %v2344 = vunpack.c.l.b16 %v2270
        %v2345 = vunpack.c.h.b16 %v2270
        %v2346 = vunpack.c.l.b16 %v2271
        %v2347 = vunpack.c.h.b16 %v2271
        %v2348 = vunpack.c.l.b16 %v2272
        %v2349 = vunpack.c.h.b16 %v2272
        %v2350 = vunpack.c.l.b16 %v2273
        %v2351 = vunpack.c.h.b16 %v2273
        %v2352 = vunpack.c.l.b16 %v2274
        %v2353 = vunpack.c.h.b16 %v2274
        %v2354 = vunpack.c.l.b16 %v2275
        %v2355 = vunpack.c.h.b16 %v2275
        %v2356 = vunpack.c.l.b16 %v2276
        %v2357 = vunpack.c.h.b16 %v2276
        %v2358 = vunpack.c.l.b16 %v2277
        %v2359 = vunpack.c.h.b16 %v2277
        %v2360 = vunpack.c.l.b16 %v2278
        %v2361 = vunpack.c.h.b16 %v2278
        %v2362 = vunpack.c.l.b16 %v2279
        %v2363 = vunpack.c.h.b16 %v2279
        %v2364 = vunpack.c.l.b16 %v2280
        %v2365 = vunpack.c.h.b16 %v2280
        %v2366 = vunpack.c.l.b16 %v2281
        %v2367 = vunpack.c.h.b16 %v2281
        %v2368 = vunpack.c.l.b16 %v2282
        %v2369 = vunpack.c.h.b16 %v2282
        %v2370 = vunpack.c.l.b16 %v2283
        %v2371 = vunpack.c.h.b16 %v2283
        %v2372 = vunpack.c.l.b16 %v2284
        %v2373 = vunpack.c.h.b16 %v2284
        %v2374 = vunpack.c.l.b16 %v2285
        %v2375 = vunpack.c.h.b16 %v2285
        %v2376 = vunpack.c.l.b16 %v2286
        %v2377 = vunpack.c.h.b16 %v2286
        %v2378 = vunpack.c.l.b16 %v2287
        %v2379 = vunpack.c.h.b16 %v2287
        %v2380 = vunpack.c.l.b16 %v2288
        %v2381 = vunpack.c.h.b16 %v2288
        %v2382 = vunpack.c.l.b16 %v2289
        %v2383 = vunpack.c.h.b16 %v2289
        %v2384 = vunpack.c.l.b16 %v2290
        %v2385 = vunpack.c.h.b16 %v2290
        %v2386 = vunpack.c.l.b16 %v2291
        %v2387 = vunpack.c.h.b16 %v2291
        %v2388 = vunpack.c.l.b16 %v2292
        %v2389 = vunpack.c.h.b16 %v2292
        %v2390 = vunpack.c.l.b16 %v2293
        %v2391 = vunpack.c.h.b16 %v2293
        %v2392 = vunpack.c.l.b16 %v2294
        %v2393 = vunpack.c.h.b16 %v2294
        %v2394 = vpack.c.b16 %v2334, %v2330
        %v2395 = vpack.c.b16 %v2335, %v2331
        %v2396 = vpack.c.b16 %v2336, %v2332
        %v2397 = vpack.c.b16 %v2337, %v2333
        %v2398 = vpack.c.b16 %v2342, %v2338
        %v2399 = vpack.c.b16 %v2343, %v2339
        %v2400 = vpack.c.b16 %v2344, %v2340
        %v2401 = vpack.c.b16 %v2345, %v2341
        %v2402 = vpack.c.b16 %v2350, %v2346
        %v2403 = vpack.c.b16 %v2351, %v2347
        %v2404 = vpack.c.b16 %v2352, %v2348
        %v2405 = vpack.c.b16 %v2353, %v2349
        %v2406 = vpack.c.b16 %v2358, %v2354
        %v2407 = vpack.c.b16 %v2359, %v2355
        %v2408 = vpack.c.b16 %v2360, %v2356
        %v2409 = vpack.c.b16 %v2361, %v2357
        %v2410 = vpack.c.b16 %v2366, %v2362
        %v2411 = vpack.c.b16 %v2367, %v2363
        %v2412 = vpack.c.b16 %v2368, %v2364
        %v2413 = vpack.c.b16 %v2369, %v2365
        %v2414 = vpack.c.b16 %v2374, %v2370
        %v2415 = vpack.c.b16 %v2375, %v2371
        %v2416 = vpack.c.b16 %v2376, %v2372
        %v2417 = vpack.c.b16 %v2377, %v2373
        %v2418 = vpack.c.b16 %v2382, %v2378
        %v2419 = vpack.c.b16 %v2383, %v2379
        %v2420 = vpack.c.b16 %v2384, %v2380
        %v2421 = vpack.c.b16 %v2385, %v2381
        %v2422 = vpack.c.b16 %v2390, %v2386
        %v2423 = vpack.c.b16 %v2391, %v2387
        %v2424 = vpack.c.b16 %v2392, %v2388
        %v2425 = vpack.c.b16 %v2393, %v2389
        %2458 = vmatprep.subr.bf16.mxu0 %v2395
        %2459 = vmatpush1.bf16.msra.mxu0 %v2394
        %2460 = vmatprep.subr.bf16.mxu0 %v2399
        %2461 = vmatpush1.bf16.msra.mxu0 %v2398
        %2462 = vmatprep.subr.bf16.mxu0 %v2403
        %2463 = vmatpush1.bf16.msra.mxu0 %v2402
        %2464 = vmatprep.subr.bf16.mxu0 %v2407
        %2465 = vmatpush1.bf16.msra.mxu0 %v2406
        %2466 = vmatprep.subr.bf16.mxu0 %v2411
        %2467 = vmatpush1.bf16.msra.mxu0 %v2410
        %2468 = vmatprep.subr.bf16.mxu0 %v2415
        %2469 = vmatpush1.bf16.msra.mxu0 %v2414
        %2470 = vmatprep.subr.bf16.mxu0 %v2419
        %2471 = vmatpush1.bf16.msra.mxu0 %v2418
        %2472 = vmatprep.subr.bf16.mxu0 %v2423
        %2473 = vmatpush1.bf16.msra.mxu0 %v2422
        %2474 = vmatprep.subr.bf16.mxu0 0
        %2475 = vmatpush1.bf16.msra.mxu0 0
        %2476 = vmatprep.subr.bf16.mxu0 0
        %2477 = vmatpush1.bf16.msra.mxu0 0
        %2478 = vmatprep.subr.bf16.mxu0 0
        %2479 = vmatpush1.bf16.msra.mxu0 0
        %2480 = vmatprep.subr.bf16.mxu0 0
        %2481 = vmatpush1.bf16.msra.mxu0 0
        %2482 = vmatprep.subr.bf16.mxu0 0
        %2483 = vmatpush1.bf16.msra.mxu0 0
        %2484 = vmatprep.subr.bf16.mxu0 0
        %2485 = vmatpush1.bf16.msra.mxu0 0
        %2486 = vmatprep.subr.bf16.mxu0 0
        %2487 = vmatpush1.bf16.msra.mxu0 0
        %2488 = vmatprep.subr.bf16.mxu0 0
        %2489 = vmatpush1.bf16.msra.mxu0 0
        %2490 = vmatprep.mubr.bf16.mxu0 0
        %2491 = vmatmul.mubr.bf16.gmra.mrb[0].mxu0 %v2296
        %v2492 = vpop.f32.mrb[0].mxu0
        %v2493 = vadd.f32 0.0, %v2492
        %v2494 = vpop.f32.mrb[0].mxu0
        %v2495 = vadd.f32 0.0, %v2494
        %v2496 = vpop.f32.mrb[0].mxu0
        %v2497 = vpop.f32.mrb[0].mxu0
        %2498 = vdwg.mxu0
        %2499 = vmatprep.subr.bf16.mxu0 %v2397
        %2500 = vmatpush1.bf16.msra.mxu0 %v2396
        %2501 = vmatprep.subr.bf16.mxu0 %v2401
        %2502 = vmatpush1.bf16.msra.mxu0 %v2400
        %2503 = vmatprep.subr.bf16.mxu0 %v2405
        %2504 = vmatpush1.bf16.msra.mxu0 %v2404
        %2505 = vmatprep.subr.bf16.mxu0 %v2409
        %2506 = vmatpush1.bf16.msra.mxu0 %v2408
        %2507 = vmatprep.subr.bf16.mxu0 %v2413
        %2508 = vmatpush1.bf16.msra.mxu0 %v2412
        %2509 = vmatprep.subr.bf16.mxu0 %v2417
        %2510 = vmatpush1.bf16.msra.mxu0 %v2416
        %2511 = vmatprep.subr.bf16.mxu0 %v2421
        %2512 = vmatpush1.bf16.msra.mxu0 %v2420
        %2513 = vmatprep.subr.bf16.mxu0 %v2425
        %2514 = vmatpush1.bf16.msra.mxu0 %v2424
        %2515 = vmatprep.subr.bf16.mxu0 0
        %2516 = vmatpush1.bf16.msra.mxu0 0
        %2517 = vmatprep.subr.bf16.mxu0 0
        %2518 = vmatpush1.bf16.msra.mxu0 0
        %2519 = vmatprep.subr.bf16.mxu0 0
        %2520 = vmatpush1.bf16.msra.mxu0 0
        %2521 = vmatprep.subr.bf16.mxu0 0
        %2522 = vmatpush1.bf16.msra.mxu0 0
        %2523 = vmatprep.subr.bf16.mxu0 0
        %2524 = vmatpush1.bf16.msra.mxu0 0
        %2525 = vmatprep.subr.bf16.mxu0 0
        %2526 = vmatpush1.bf16.msra.mxu0 0
        %2527 = vmatprep.subr.bf16.mxu0 0
        %2528 = vmatpush1.bf16.msra.mxu0 0
        %2529 = vmatprep.subr.bf16.mxu0 0
        %2530 = vmatpush1.bf16.msra.mxu0 0
        %2531 = vmatprep.mubr.bf16.mxu0 0
        %2532 = vmatmul.mubr.bf16.gmra.mrb[0].mxu0 %v2296
        %v2533 = vpop.f32.mrb[0].mxu0
        %v2534 = vadd.f32 0.0, %v2533
        %v2535 = vpop.f32.mrb[0].mxu0
        %v2536 = vadd.f32 0.0, %v2535
        %v2537 = vpop.f32.mrb[0].mxu0
        %v2538 = vpop.f32.mrb[0].mxu0
        %2539 = vdwg.mxu0
        %v2540 = vadd.f32 %v2257, %v2493
        %v2541 = vadd.f32 %v2258, %v2495
        %v2542 = vadd.f32 %v2259, %v2534
        %v2543 = vadd.f32 %v2260, %v2536
        %v2544 = vld [vmem:[#allocation2] sm:$0x40]
        %s2545 = scalar_lea.vmem %s403, 1536 [#allocation10]
        %v2546 = vld [vmem:[%s2545] sm:$0xff]
        %v2547 = vld [vmem:[%s2545 + $0x8] sm:$0xff]
        %v2548 = vld [vmem:[%s2545 + $0x10] sm:$0xff]
        %v2549 = vld [vmem:[%s2545 + $0x18] sm:$0xff]
        %v2550 = vld [vmem:[%s2545 + $0x20] sm:$0xff]
        %v2551 = vld [vmem:[%s2545 + $0x28] sm:$0xff]
        %v2552 = vld [vmem:[%s2545 + $0x30] sm:$0xff]
        %v2553 = vld [vmem:[%s2545 + $0x38] sm:$0xff]
        %v2554 = vld [vmem:[%s2545 + $0x40] sm:$0xff]
        %v2555 = vld [vmem:[%s2545 + $0x48] sm:$0xff]
        %v2556 = vld [vmem:[%s2545 + $0x50] sm:$0xff]
        %v2557 = vld [vmem:[%s2545 + $0x58] sm:$0xff]
        %v2558 = vld [vmem:[%s2545 + $0x60] sm:$0xff]
        %v2559 = vld [vmem:[%s2545 + $0x68] sm:$0xff]
        %v2560 = vld [vmem:[%s2545 + $0x70] sm:$0xff]
        %v2561 = vld [vmem:[%s2545 + $0x78] sm:$0xff]
        %v2562 = vld [vmem:[%s2545 + $0x80] sm:$0xff]
        %v2563 = vld [vmem:[%s2545 + $0x88] sm:$0xff]
        %v2564 = vld [vmem:[%s2545 + $0x90] sm:$0xff]
        %v2565 = vld [vmem:[%s2545 + $0x98] sm:$0xff]
        %v2566 = vld [vmem:[%s2545 + $0xa0] sm:$0xff]
        %v2567 = vld [vmem:[%s2545 + $0xa8] sm:$0xff]
        %v2568 = vld [vmem:[%s2545 + $0xb0] sm:$0xff]
        %v2569 = vld [vmem:[%s2545 + $0xb8] sm:$0xff]
        %v2570 = vld [vmem:[%s2545 + $0xc0] sm:$0xff]
        %v2571 = vld [vmem:[%s2545 + $0xc8] sm:$0xff]
        %v2572 = vld [vmem:[%s2545 + $0xd0] sm:$0xff]
        %v2573 = vld [vmem:[%s2545 + $0xd8] sm:$0xff]
        %v2574 = vld [vmem:[%s2545 + $0xe0] sm:$0xff]
        %v2575 = vld [vmem:[%s2545 + $0xe8] sm:$0xff]
        %v2576 = vld [vmem:[%s2545 + $0xf0] sm:$0xff]
        %v2577 = vld [vmem:[%s2545 + $0xf8] sm:$0xff]
        %v2579 = vrot.slane %v2544, 6
        %v2613 = vunpack.c.l.b16 %v2546
        %v2614 = vunpack.c.h.b16 %v2546
        %v2615 = vunpack.c.l.b16 %v2547
        %v2616 = vunpack.c.h.b16 %v2547
        %v2617 = vunpack.c.l.b16 %v2548
        %v2618 = vunpack.c.h.b16 %v2548
        %v2619 = vunpack.c.l.b16 %v2549
        %v2620 = vunpack.c.h.b16 %v2549
        %v2621 = vunpack.c.l.b16 %v2550
        %v2622 = vunpack.c.h.b16 %v2550
        %v2623 = vunpack.c.l.b16 %v2551
        %v2624 = vunpack.c.h.b16 %v2551
        %v2625 = vunpack.c.l.b16 %v2552
        %v2626 = vunpack.c.h.b16 %v2552
        %v2627 = vunpack.c.l.b16 %v2553
        %v2628 = vunpack.c.h.b16 %v2553
        %v2629 = vunpack.c.l.b16 %v2554
        %v2630 = vunpack.c.h.b16 %v2554
        %v2631 = vunpack.c.l.b16 %v2555
        %v2632 = vunpack.c.h.b16 %v2555
        %v2633 = vunpack.c.l.b16 %v2556
        %v2634 = vunpack.c.h.b16 %v2556
        %v2635 = vunpack.c.l.b16 %v2557
        %v2636 = vunpack.c.h.b16 %v2557
        %v2637 = vunpack.c.l.b16 %v2558
        %v2638 = vunpack.c.h.b16 %v2558
        %v2639 = vunpack.c.l.b16 %v2559
        %v2640 = vunpack.c.h.b16 %v2559
        %v2641 = vunpack.c.l.b16 %v2560
        %v2642 = vunpack.c.h.b16 %v2560
        %v2643 = vunpack.c.l.b16 %v2561
        %v2644 = vunpack.c.h.b16 %v2561
        %v2645 = vunpack.c.l.b16 %v2562
        %v2646 = vunpack.c.h.b16 %v2562
        %v2647 = vunpack.c.l.b16 %v2563
        %v2648 = vunpack.c.h.b16 %v2563
        %v2649 = vunpack.c.l.b16 %v2564
        %v2650 = vunpack.c.h.b16 %v2564
        %v2651 = vunpack.c.l.b16 %v2565
        %v2652 = vunpack.c.h.b16 %v2565
        %v2653 = vunpack.c.l.b16 %v2566
        %v2654 = vunpack.c.h.b16 %v2566
        %v2655 = vunpack.c.l.b16 %v2567
        %v2656 = vunpack.c.h.b16 %v2567
        %v2657 = vunpack.c.l.b16 %v2568
        %v2658 = vunpack.c.h.b16 %v2568
        %v2659 = vunpack.c.l.b16 %v2569
        %v2660 = vunpack.c.h.b16 %v2569
        %v2661 = vunpack.c.l.b16 %v2570
        %v2662 = vunpack.c.h.b16 %v2570
        %v2663 = vunpack.c.l.b16 %v2571
        %v2664 = vunpack.c.h.b16 %v2571
        %v2665 = vunpack.c.l.b16 %v2572
        %v2666 = vunpack.c.h.b16 %v2572
        %v2667 = vunpack.c.l.b16 %v2573
        %v2668 = vunpack.c.h.b16 %v2573
        %v2669 = vunpack.c.l.b16 %v2574
        %v2670 = vunpack.c.h.b16 %v2574
        %v2671 = vunpack.c.l.b16 %v2575
        %v2672 = vunpack.c.h.b16 %v2575
        %v2673 = vunpack.c.l.b16 %v2576
        %v2674 = vunpack.c.h.b16 %v2576
        %v2675 = vunpack.c.l.b16 %v2577
        %v2676 = vunpack.c.h.b16 %v2577
        %v2677 = vpack.c.b16 %v2617, %v2613
        %v2678 = vpack.c.b16 %v2618, %v2614
        %v2679 = vpack.c.b16 %v2619, %v2615
        %v2680 = vpack.c.b16 %v2620, %v2616
        %v2681 = vpack.c.b16 %v2625, %v2621
        %v2682 = vpack.c.b16 %v2626, %v2622
        %v2683 = vpack.c.b16 %v2627, %v2623
        %v2684 = vpack.c.b16 %v2628, %v2624
        %v2685 = vpack.c.b16 %v2633, %v2629
        %v2686 = vpack.c.b16 %v2634, %v2630
        %v2687 = vpack.c.b16 %v2635, %v2631
        %v2688 = vpack.c.b16 %v2636, %v2632
        %v2689 = vpack.c.b16 %v2641, %v2637
        %v2690 = vpack.c.b16 %v2642, %v2638
        %v2691 = vpack.c.b16 %v2643, %v2639
        %v2692 = vpack.c.b16 %v2644, %v2640
        %v2693 = vpack.c.b16 %v2649, %v2645
        %v2694 = vpack.c.b16 %v2650, %v2646
        %v2695 = vpack.c.b16 %v2651, %v2647
        %v2696 = vpack.c.b16 %v2652, %v2648
        %v2697 = vpack.c.b16 %v2657, %v2653
        %v2698 = vpack.c.b16 %v2658, %v2654
        %v2699 = vpack.c.b16 %v2659, %v2655
        %v2700 = vpack.c.b16 %v2660, %v2656
        %v2701 = vpack.c.b16 %v2665, %v2661
        %v2702 = vpack.c.b16 %v2666, %v2662
        %v2703 = vpack.c.b16 %v2667, %v2663
        %v2704 = vpack.c.b16 %v2668, %v2664
        %v2705 = vpack.c.b16 %v2673, %v2669
        %v2706 = vpack.c.b16 %v2674, %v2670
        %v2707 = vpack.c.b16 %v2675, %v2671
        %v2708 = vpack.c.b16 %v2676, %v2672
        %2741 = vmatprep.subr.bf16.mxu0 %v2678
        %2742 = vmatpush1.bf16.msra.mxu0 %v2677
        %2743 = vmatprep.subr.bf16.mxu0 %v2682
        %2744 = vmatpush1.bf16.msra.mxu0 %v2681
        %2745 = vmatprep.subr.bf16.mxu0 %v2686
        %2746 = vmatpush1.bf16.msra.mxu0 %v2685
        %2747 = vmatprep.subr.bf16.mxu0 %v2690
        %2748 = vmatpush1.bf16.msra.mxu0 %v2689
        %2749 = vmatprep.subr.bf16.mxu0 %v2694
        %2750 = vmatpush1.bf16.msra.mxu0 %v2693
        %2751 = vmatprep.subr.bf16.mxu0 %v2698
        %2752 = vmatpush1.bf16.msra.mxu0 %v2697
        %2753 = vmatprep.subr.bf16.mxu0 %v2702
        %2754 = vmatpush1.bf16.msra.mxu0 %v2701
        %2755 = vmatprep.subr.bf16.mxu0 %v2706
        %2756 = vmatpush1.bf16.msra.mxu0 %v2705
        %2757 = vmatprep.subr.bf16.mxu0 0
        %2758 = vmatpush1.bf16.msra.mxu0 0
        %2759 = vmatprep.subr.bf16.mxu0 0
        %2760 = vmatpush1.bf16.msra.mxu0 0
        %2761 = vmatprep.subr.bf16.mxu0 0
        %2762 = vmatpush1.bf16.msra.mxu0 0
        %2763 = vmatprep.subr.bf16.mxu0 0
        %2764 = vmatpush1.bf16.msra.mxu0 0
        %2765 = vmatprep.subr.bf16.mxu0 0
        %2766 = vmatpush1.bf16.msra.mxu0 0
        %2767 = vmatprep.subr.bf16.mxu0 0
        %2768 = vmatpush1.bf16.msra.mxu0 0
        %2769 = vmatprep.subr.bf16.mxu0 0
        %2770 = vmatpush1.bf16.msra.mxu0 0
        %2771 = vmatprep.subr.bf16.mxu0 0
        %2772 = vmatpush1.bf16.msra.mxu0 0
        %2773 = vmatprep.mubr.bf16.mxu0 0
        %2774 = vmatmul.mubr.bf16.gmra.mrb[0].mxu0 %v2579
        %v2775 = vpop.f32.mrb[0].mxu0
        %v2776 = vadd.f32 0.0, %v2775
        %v2777 = vpop.f32.mrb[0].mxu0
        %v2778 = vadd.f32 0.0, %v2777
        %v2779 = vpop.f32.mrb[0].mxu0
        %v2780 = vpop.f32.mrb[0].mxu0
        %2781 = vdwg.mxu0
        %2782 = vmatprep.subr.bf16.mxu0 %v2680
        %2783 = vmatpush1.bf16.msra.mxu0 %v2679
        %2784 = vmatprep.subr.bf16.mxu0 %v2684
        %2785 = vmatpush1.bf16.msra.mxu0 %v2683
        %2786 = vmatprep.subr.bf16.mxu0 %v2688
        %2787 = vmatpush1.bf16.msra.mxu0 %v2687
        %2788 = vmatprep.subr.bf16.mxu0 %v2692
        %2789 = vmatpush1.bf16.msra.mxu0 %v2691
        %2790 = vmatprep.subr.bf16.mxu0 %v2696
        %2791 = vmatpush1.bf16.msra.mxu0 %v2695
        %2792 = vmatprep.subr.bf16.mxu0 %v2700
        %2793 = vmatpush1.bf16.msra.mxu0 %v2699
        %2794 = vmatprep.subr.bf16.mxu0 %v2704
        %2795 = vmatpush1.bf16.msra.mxu0 %v2703
        %2796 = vmatprep.subr.bf16.mxu0 %v2708
        %2797 = vmatpush1.bf16.msra.mxu0 %v2707
        %2798 = vmatprep.subr.bf16.mxu0 0
        %2799 = vmatpush1.bf16.msra.mxu0 0
        %2800 = vmatprep.subr.bf16.mxu0 0
        %2801 = vmatpush1.bf16.msra.mxu0 0
        %2802 = vmatprep.subr.bf16.mxu0 0
        %2803 = vmatpush1.bf16.msra.mxu0 0
        %2804 = vmatprep.subr.bf16.mxu0 0
        %2805 = vmatpush1.bf16.msra.mxu0 0
        %2806 = vmatprep.subr.bf16.mxu0 0
        %2807 = vmatpush1.bf16.msra.mxu0 0
        %2808 = vmatprep.subr.bf16.mxu0 0
        %2809 = vmatpush1.bf16.msra.mxu0 0
        %2810 = vmatprep.subr.bf16.mxu0 0
        %2811 = vmatpush1.bf16.msra.mxu0 0
        %2812 = vmatprep.subr.bf16.mxu0 0
        %2813 = vmatpush1.bf16.msra.mxu0 0
        %2814 = vmatprep.mubr.bf16.mxu0 0
        %2815 = vmatmul.mubr.bf16.gmra.mrb[0].mxu0 %v2579
        %v2816 = vpop.f32.mrb[0].mxu0
        %v2817 = vadd.f32 0.0, %v2816
        %v2818 = vpop.f32.mrb[0].mxu0
        %v2819 = vadd.f32 0.0, %v2818
        %v2820 = vpop.f32.mrb[0].mxu0
        %v2821 = vpop.f32.mrb[0].mxu0
        %2822 = vdwg.mxu0
        %v2823 = vadd.f32 %v2540, %v2776
        %v2824 = vadd.f32 %v2541, %v2778
        %v2825 = vadd.f32 %v2542, %v2817
        %v2826 = vadd.f32 %v2543, %v2819
        %v2827 = vld [vmem:[#allocation2] sm:$0x80]
        %s2828 = scalar_lea.vmem %s403, 1792 [#allocation10]
        %v2829 = vld [vmem:[%s2828] sm:$0xff]
        %v2830 = vld [vmem:[%s2828 + $0x8] sm:$0xff]
        %v2831 = vld [vmem:[%s2828 + $0x10] sm:$0xff]
        %v2832 = vld [vmem:[%s2828 + $0x18] sm:$0xff]
        %v2833 = vld [vmem:[%s2828 + $0x20] sm:$0xff]
        %v2834 = vld [vmem:[%s2828 + $0x28] sm:$0xff]
        %v2835 = vld [vmem:[%s2828 + $0x30] sm:$0xff]
        %v2836 = vld [vmem:[%s2828 + $0x38] sm:$0xff]
        %v2837 = vld [vmem:[%s2828 + $0x40] sm:$0xff]
        %v2838 = vld [vmem:[%s2828 + $0x48] sm:$0xff]
        %v2839 = vld [vmem:[%s2828 + $0x50] sm:$0xff]
        %v2840 = vld [vmem:[%s2828 + $0x58] sm:$0xff]
        %v2841 = vld [vmem:[%s2828 + $0x60] sm:$0xff]
        %v2842 = vld [vmem:[%s2828 + $0x68] sm:$0xff]
        %v2843 = vld [vmem:[%s2828 + $0x70] sm:$0xff]
        %v2844 = vld [vmem:[%s2828 + $0x78] sm:$0xff]
        %v2845 = vld [vmem:[%s2828 + $0x80] sm:$0xff]
        %v2846 = vld [vmem:[%s2828 + $0x88] sm:$0xff]
        %v2847 = vld [vmem:[%s2828 + $0x90] sm:$0xff]
        %v2848 = vld [vmem:[%s2828 + $0x98] sm:$0xff]
        %v2849 = vld [vmem:[%s2828 + $0xa0] sm:$0xff]
        %v2850 = vld [vmem:[%s2828 + $0xa8] sm:$0xff]
        %v2851 = vld [vmem:[%s2828 + $0xb0] sm:$0xff]
        %v2852 = vld [vmem:[%s2828 + $0xb8] sm:$0xff]
        %v2853 = vld [vmem:[%s2828 + $0xc0] sm:$0xff]
        %v2854 = vld [vmem:[%s2828 + $0xc8] sm:$0xff]
        %v2855 = vld [vmem:[%s2828 + $0xd0] sm:$0xff]
        %v2856 = vld [vmem:[%s2828 + $0xd8] sm:$0xff]
        %v2857 = vld [vmem:[%s2828 + $0xe0] sm:$0xff]
        %v2858 = vld [vmem:[%s2828 + $0xe8] sm:$0xff]
        %v2859 = vld [vmem:[%s2828 + $0xf0] sm:$0xff]
        %v2860 = vld [vmem:[%s2828 + $0xf8] sm:$0xff]
        %v2862 = vrot.slane %v2827, 7
        %v2896 = vunpack.c.l.b16 %v2829
        %v2897 = vunpack.c.h.b16 %v2829
        %v2898 = vunpack.c.l.b16 %v2830
        %v2899 = vunpack.c.h.b16 %v2830
        %v2900 = vunpack.c.l.b16 %v2831
        %v2901 = vunpack.c.h.b16 %v2831
        %v2902 = vunpack.c.l.b16 %v2832
        %v2903 = vunpack.c.h.b16 %v2832
        %v2904 = vunpack.c.l.b16 %v2833
        %v2905 = vunpack.c.h.b16 %v2833
        %v2906 = vunpack.c.l.b16 %v2834
        %v2907 = vunpack.c.h.b16 %v2834
        %v2908 = vunpack.c.l.b16 %v2835
        %v2909 = vunpack.c.h.b16 %v2835
        %v2910 = vunpack.c.l.b16 %v2836
        %v2911 = vunpack.c.h.b16 %v2836
        %v2912 = vunpack.c.l.b16 %v2837
        %v2913 = vunpack.c.h.b16 %v2837
        %v2914 = vunpack.c.l.b16 %v2838
        %v2915 = vunpack.c.h.b16 %v2838
        %v2916 = vunpack.c.l.b16 %v2839
        %v2917 = vunpack.c.h.b16 %v2839
        %v2918 = vunpack.c.l.b16 %v2840
        %v2919 = vunpack.c.h.b16 %v2840
        %v2920 = vunpack.c.l.b16 %v2841
        %v2921 = vunpack.c.h.b16 %v2841
        %v2922 = vunpack.c.l.b16 %v2842
        %v2923 = vunpack.c.h.b16 %v2842
        %v2924 = vunpack.c.l.b16 %v2843
        %v2925 = vunpack.c.h.b16 %v2843
        %v2926 = vunpack.c.l.b16 %v2844
        %v2927 = vunpack.c.h.b16 %v2844
        %v2928 = vunpack.c.l.b16 %v2845
        %v2929 = vunpack.c.h.b16 %v2845
        %v2930 = vunpack.c.l.b16 %v2846
        %v2931 = vunpack.c.h.b16 %v2846
        %v2932 = vunpack.c.l.b16 %v2847
        %v2933 = vunpack.c.h.b16 %v2847
        %v2934 = vunpack.c.l.b16 %v2848
        %v2935 = vunpack.c.h.b16 %v2848
        %v2936 = vunpack.c.l.b16 %v2849
        %v2937 = vunpack.c.h.b16 %v2849
        %v2938 = vunpack.c.l.b16 %v2850
        %v2939 = vunpack.c.h.b16 %v2850
        %v2940 = vunpack.c.l.b16 %v2851
        %v2941 = vunpack.c.h.b16 %v2851
        %v2942 = vunpack.c.l.b16 %v2852
        %v2943 = vunpack.c.h.b16 %v2852
        %v2944 = vunpack.c.l.b16 %v2853
        %v2945 = vunpack.c.h.b16 %v2853
        %v2946 = vunpack.c.l.b16 %v2854
        %v2947 = vunpack.c.h.b16 %v2854
        %v2948 = vunpack.c.l.b16 %v2855
        %v2949 = vunpack.c.h.b16 %v2855
        %v2950 = vunpack.c.l.b16 %v2856
        %v2951 = vunpack.c.h.b16 %v2856
        %v2952 = vunpack.c.l.b16 %v2857
        %v2953 = vunpack.c.h.b16 %v2857
        %v2954 = vunpack.c.l.b16 %v2858
        %v2955 = vunpack.c.h.b16 %v2858
        %v2956 = vunpack.c.l.b16 %v2859
        %v2957 = vunpack.c.h.b16 %v2859
        %v2958 = vunpack.c.l.b16 %v2860
        %v2959 = vunpack.c.h.b16 %v2860
        %v2960 = vpack.c.b16 %v2900, %v2896
        %v2961 = vpack.c.b16 %v2901, %v2897
        %v2962 = vpack.c.b16 %v2902, %v2898
        %v2963 = vpack.c.b16 %v2903, %v2899
        %v2964 = vpack.c.b16 %v2908, %v2904
        %v2965 = vpack.c.b16 %v2909, %v2905
        %v2966 = vpack.c.b16 %v2910, %v2906
        %v2967 = vpack.c.b16 %v2911, %v2907
        %v2968 = vpack.c.b16 %v2916, %v2912
        %v2969 = vpack.c.b16 %v2917, %v2913
        %v2970 = vpack.c.b16 %v2918, %v2914
        %v2971 = vpack.c.b16 %v2919, %v2915
        %v2972 = vpack.c.b16 %v2924, %v2920
        %v2973 = vpack.c.b16 %v2925, %v2921
        %v2974 = vpack.c.b16 %v2926, %v2922
        %v2975 = vpack.c.b16 %v2927, %v2923
        %v2976 = vpack.c.b16 %v2932, %v2928
        %v2977 = vpack.c.b16 %v2933, %v2929
        %v2978 = vpack.c.b16 %v2934, %v2930
        %v2979 = vpack.c.b16 %v2935, %v2931
        %v2980 = vpack.c.b16 %v2940, %v2936
        %v2981 = vpack.c.b16 %v2941, %v2937
        %v2982 = vpack.c.b16 %v2942, %v2938
        %v2983 = vpack.c.b16 %v2943, %v2939
        %v2984 = vpack.c.b16 %v2948, %v2944
        %v2985 = vpack.c.b16 %v2949, %v2945
        %v2986 = vpack.c.b16 %v2950, %v2946
        %v2987 = vpack.c.b16 %v2951, %v2947
        %v2988 = vpack.c.b16 %v2956, %v2952
        %v2989 = vpack.c.b16 %v2957, %v2953
        %v2990 = vpack.c.b16 %v2958, %v2954
        %v2991 = vpack.c.b16 %v2959, %v2955
        %3024 = vmatprep.subr.bf16.mxu0 %v2961
        %3025 = vmatpush1.bf16.msra.mxu0 %v2960
        %3026 = vmatprep.subr.bf16.mxu0 %v2965
        %3027 = vmatpush1.bf16.msra.mxu0 %v2964
        %3028 = vmatprep.subr.bf16.mxu0 %v2969
        %3029 = vmatpush1.bf16.msra.mxu0 %v2968
        %3030 = vmatprep.subr.bf16.mxu0 %v2973
        %3031 = vmatpush1.bf16.msra.mxu0 %v2972
        %3032 = vmatprep.subr.bf16.mxu0 %v2977
        %3033 = vmatpush1.bf16.msra.mxu0 %v2976
        %3034 = vmatprep.subr.bf16.mxu0 %v2981
        %3035 = vmatpush1.bf16.msra.mxu0 %v2980
        %3036 = vmatprep.subr.bf16.mxu0 %v2985
        %3037 = vmatpush1.bf16.msra.mxu0 %v2984
        %3038 = vmatprep.subr.bf16.mxu0 %v2989
        %3039 = vmatpush1.bf16.msra.mxu0 %v2988
        %3040 = vmatprep.subr.bf16.mxu0 0
        %3041 = vmatpush1.bf16.msra.mxu0 0
        %3042 = vmatprep.subr.bf16.mxu0 0
        %3043 = vmatpush1.bf16.msra.mxu0 0
        %3044 = vmatprep.subr.bf16.mxu0 0
        %3045 = vmatpush1.bf16.msra.mxu0 0
        %3046 = vmatprep.subr.bf16.mxu0 0
        %3047 = vmatpush1.bf16.msra.mxu0 0
        %3048 = vmatprep.subr.bf16.mxu0 0
        %3049 = vmatpush1.bf16.msra.mxu0 0
        %3050 = vmatprep.subr.bf16.mxu0 0
        %3051 = vmatpush1.bf16.msra.mxu0 0
        %3052 = vmatprep.subr.bf16.mxu0 0
        %3053 = vmatpush1.bf16.msra.mxu0 0
        %3054 = vmatprep.subr.bf16.mxu0 0
        %3055 = vmatpush1.bf16.msra.mxu0 0
        %3056 = vmatprep.mubr.bf16.mxu0 0
        %3057 = vmatmul.mubr.bf16.gmra.mrb[0].mxu0 %v2862
        %v3058 = vpop.f32.mrb[0].mxu0
        %v3059 = vadd.f32 0.0, %v3058
        %v3060 = vpop.f32.mrb[0].mxu0
        %v3061 = vadd.f32 0.0, %v3060
        %v3062 = vpop.f32.mrb[0].mxu0
        %v3063 = vpop.f32.mrb[0].mxu0
        %3064 = vdwg.mxu0
        %3065 = vmatprep.subr.bf16.mxu0 %v2963
        %3066 = vmatpush1.bf16.msra.mxu0 %v2962
        %3067 = vmatprep.subr.bf16.mxu0 %v2967
        %3068 = vmatpush1.bf16.msra.mxu0 %v2966
        %3069 = vmatprep.subr.bf16.mxu0 %v2971
        %3070 = vmatpush1.bf16.msra.mxu0 %v2970
        %3071 = vmatprep.subr.bf16.mxu0 %v2975
        %3072 = vmatpush1.bf16.msra.mxu0 %v2974
        %3073 = vmatprep.subr.bf16.mxu0 %v2979
        %3074 = vmatpush1.bf16.msra.mxu0 %v2978
        %3075 = vmatprep.subr.bf16.mxu0 %v2983
        %3076 = vmatpush1.bf16.msra.mxu0 %v2982
        %3077 = vmatprep.subr.bf16.mxu0 %v2987
        %3078 = vmatpush1.bf16.msra.mxu0 %v2986
        %3079 = vmatprep.subr.bf16.mxu0 %v2991
        %3080 = vmatpush1.bf16.msra.mxu0 %v2990
        %3081 = vmatprep.subr.bf16.mxu0 0
        %3082 = vmatpush1.bf16.msra.mxu0 0
        %3083 = vmatprep.subr.bf16.mxu0 0
        %3084 = vmatpush1.bf16.msra.mxu0 0
        %3085 = vmatprep.subr.bf16.mxu0 0
        %3086 = vmatpush1.bf16.msra.mxu0 0
        %3087 = vmatprep.subr.bf16.mxu0 0
        %3088 = vmatpush1.bf16.msra.mxu0 0
        %3089 = vmatprep.subr.bf16.mxu0 0
        %3090 = vmatpush1.bf16.msra.mxu0 0
        %3091 = vmatprep.subr.bf16.mxu0 0
        %3092 = vmatpush1.bf16.msra.mxu0 0
        %3093 = vmatprep.subr.bf16.mxu0 0
        %3094 = vmatpush1.bf16.msra.mxu0 0
        %3095 = vmatprep.subr.bf16.mxu0 0
        %3096 = vmatpush1.bf16.msra.mxu0 0
        %3097 = vmatprep.mubr.bf16.mxu0 0
        %3098 = vmatmul.mubr.bf16.gmra.mrb[0].mxu0 %v2862
        %v3099 = vpop.f32.mrb[0].mxu0
        %v3100 = vadd.f32 0.0, %v3099
        %v3101 = vpop.f32.mrb[0].mxu0
        %v3102 = vadd.f32 0.0, %v3101
        %v3103 = vpop.f32.mrb[0].mxu0
        %v3104 = vpop.f32.mrb[0].mxu0
        %3105 = vdwg.mxu0
        %v3106 = vadd.f32 %v2823, %v3059
        %v3107 = vadd.f32 %v2824, %v3061
        %v3108 = vadd.f32 %v2825, %v3100
        %v3109 = vadd.f32 %v2826, %v3102
        %v3110 = vld [vmem:[#allocation2 + $0x8] sm:$0x1]
        %s3111 = scalar_lea.vmem %s403, 2048 [#allocation10]
        %v3112 = vld [vmem:[%s3111] sm:$0xff]
        %v3113 = vld [vmem:[%s3111 + $0x8] sm:$0xff]
        %v3114 = vld [vmem:[%s3111 + $0x10] sm:$0xff]
        %v3115 = vld [vmem:[%s3111 + $0x18] sm:$0xff]
        %v3116 = vld [vmem:[%s3111 + $0x20] sm:$0xff]
        %v3117 = vld [vmem:[%s3111 + $0x28] sm:$0xff]
        %v3118 = vld [vmem:[%s3111 + $0x30] sm:$0xff]
        %v3119 = vld [vmem:[%s3111 + $0x38] sm:$0xff]
        %v3120 = vld [vmem:[%s3111 + $0x40] sm:$0xff]
        %v3121 = vld [vmem:[%s3111 + $0x48] sm:$0xff]
        %v3122 = vld [vmem:[%s3111 + $0x50] sm:$0xff]
        %v3123 = vld [vmem:[%s3111 + $0x58] sm:$0xff]
        %v3124 = vld [vmem:[%s3111 + $0x60] sm:$0xff]
        %v3125 = vld [vmem:[%s3111 + $0x68] sm:$0xff]
        %v3126 = vld [vmem:[%s3111 + $0x70] sm:$0xff]
        %v3127 = vld [vmem:[%s3111 + $0x78] sm:$0xff]
        %v3128 = vld [vmem:[%s3111 + $0x80] sm:$0xff]
        %v3129 = vld [vmem:[%s3111 + $0x88] sm:$0xff]
        %v3130 = vld [vmem:[%s3111 + $0x90] sm:$0xff]
        %v3131 = vld [vmem:[%s3111 + $0x98] sm:$0xff]
        %v3132 = vld [vmem:[%s3111 + $0xa0] sm:$0xff]
        %v3133 = vld [vmem:[%s3111 + $0xa8] sm:$0xff]
        %v3134 = vld [vmem:[%s3111 + $0xb0] sm:$0xff]
        %v3135 = vld [vmem:[%s3111 + $0xb8] sm:$0xff]
        %v3136 = vld [vmem:[%s3111 + $0xc0] sm:$0xff]
        %v3137 = vld [vmem:[%s3111 + $0xc8] sm:$0xff]
        %v3138 = vld [vmem:[%s3111 + $0xd0] sm:$0xff]
        %v3139 = vld [vmem:[%s3111 + $0xd8] sm:$0xff]
        %v3140 = vld [vmem:[%s3111 + $0xe0] sm:$0xff]
        %v3141 = vld [vmem:[%s3111 + $0xe8] sm:$0xff]
        %v3142 = vld [vmem:[%s3111 + $0xf0] sm:$0xff]
        %v3143 = vld [vmem:[%s3111 + $0xf8] sm:$0xff]
        %v3176 = vunpack.c.l.b16 %v3112
        %v3177 = vunpack.c.h.b16 %v3112
        %v3178 = vunpack.c.l.b16 %v3113
        %v3179 = vunpack.c.h.b16 %v3113
        %v3180 = vunpack.c.l.b16 %v3114
        %v3181 = vunpack.c.h.b16 %v3114
        %v3182 = vunpack.c.l.b16 %v3115
        %v3183 = vunpack.c.h.b16 %v3115
        %v3184 = vunpack.c.l.b16 %v3116
        %v3185 = vunpack.c.h.b16 %v3116
        %v3186 = vunpack.c.l.b16 %v3117
        %v3187 = vunpack.c.h.b16 %v3117
        %v3188 = vunpack.c.l.b16 %v3118
        %v3189 = vunpack.c.h.b16 %v3118
        %v3190 = vunpack.c.l.b16 %v3119
        %v3191 = vunpack.c.h.b16 %v3119
        %v3192 = vunpack.c.l.b16 %v3120
        %v3193 = vunpack.c.h.b16 %v3120
        %v3194 = vunpack.c.l.b16 %v3121
        %v3195 = vunpack.c.h.b16 %v3121
        %v3196 = vunpack.c.l.b16 %v3122
        %v3197 = vunpack.c.h.b16 %v3122
        %v3198 = vunpack.c.l.b16 %v3123
        %v3199 = vunpack.c.h.b16 %v3123
        %v3200 = vunpack.c.l.b16 %v3124
        %v3201 = vunpack.c.h.b16 %v3124
        %v3202 = vunpack.c.l.b16 %v3125
        %v3203 = vunpack.c.h.b16 %v3125
        %v3204 = vunpack.c.l.b16 %v3126
        %v3205 = vunpack.c.h.b16 %v3126
        %v3206 = vunpack.c.l.b16 %v3127
        %v3207 = vunpack.c.h.b16 %v3127
        %v3208 = vunpack.c.l.b16 %v3128
        %v3209 = vunpack.c.h.b16 %v3128
        %v3210 = vunpack.c.l.b16 %v3129
        %v3211 = vunpack.c.h.b16 %v3129
        %v3212 = vunpack.c.l.b16 %v3130
        %v3213 = vunpack.c.h.b16 %v3130
        %v3214 = vunpack.c.l.b16 %v3131
        %v3215 = vunpack.c.h.b16 %v3131
        %v3216 = vunpack.c.l.b16 %v3132
        %v3217 = vunpack.c.h.b16 %v3132
        %v3218 = vunpack.c.l.b16 %v3133
        %v3219 = vunpack.c.h.b16 %v3133
        %v3220 = vunpack.c.l.b16 %v3134
        %v3221 = vunpack.c.h.b16 %v3134
        %v3222 = vunpack.c.l.b16 %v3135
        %v3223 = vunpack.c.h.b16 %v3135
        %v3224 = vunpack.c.l.b16 %v3136
        %v3225 = vunpack.c.h.b16 %v3136
        %v3226 = vunpack.c.l.b16 %v3137
        %v3227 = vunpack.c.h.b16 %v3137
        %v3228 = vunpack.c.l.b16 %v3138
        %v3229 = vunpack.c.h.b16 %v3138
        %v3230 = vunpack.c.l.b16 %v3139
        %v3231 = vunpack.c.h.b16 %v3139
        %v3232 = vunpack.c.l.b16 %v3140
        %v3233 = vunpack.c.h.b16 %v3140
        %v3234 = vunpack.c.l.b16 %v3141
        %v3235 = vunpack.c.h.b16 %v3141
        %v3236 = vunpack.c.l.b16 %v3142
        %v3237 = vunpack.c.h.b16 %v3142
        %v3238 = vunpack.c.l.b16 %v3143
        %v3239 = vunpack.c.h.b16 %v3143
        %v3240 = vpack.c.b16 %v3180, %v3176
        %v3241 = vpack.c.b16 %v3181, %v3177
        %v3242 = vpack.c.b16 %v3182, %v3178
        %v3243 = vpack.c.b16 %v3183, %v3179
        %v3244 = vpack.c.b16 %v3188, %v3184
        %v3245 = vpack.c.b16 %v3189, %v3185
        %v3246 = vpack.c.b16 %v3190, %v3186
        %v3247 = vpack.c.b16 %v3191, %v3187
        %v3248 = vpack.c.b16 %v3196, %v3192
        %v3249 = vpack.c.b16 %v3197, %v3193
        %v3250 = vpack.c.b16 %v3198, %v3194
        %v3251 = vpack.c.b16 %v3199, %v3195
        %v3252 = vpack.c.b16 %v3204, %v3200
        %v3253 = vpack.c.b16 %v3205, %v3201
        %v3254 = vpack.c.b16 %v3206, %v3202
        %v3255 = vpack.c.b16 %v3207, %v3203
        %v3256 = vpack.c.b16 %v3212, %v3208
        %v3257 = vpack.c.b16 %v3213, %v3209
        %v3258 = vpack.c.b16 %v3214, %v3210
        %v3259 = vpack.c.b16 %v3215, %v3211
        %v3260 = vpack.c.b16 %v3220, %v3216
        %v3261 = vpack.c.b16 %v3221, %v3217
        %v3262 = vpack.c.b16 %v3222, %v3218
        %v3263 = vpack.c.b16 %v3223, %v3219
        %v3264 = vpack.c.b16 %v3228, %v3224
        %v3265 = vpack.c.b16 %v3229, %v3225
        %v3266 = vpack.c.b16 %v3230, %v3226
        %v3267 = vpack.c.b16 %v3231, %v3227
        %v3268 = vpack.c.b16 %v3236, %v3232
        %v3269 = vpack.c.b16 %v3237, %v3233
        %v3270 = vpack.c.b16 %v3238, %v3234
        %v3271 = vpack.c.b16 %v3239, %v3235
        %3304 = vmatprep.subr.bf16.mxu0 %v3241
        %3305 = vmatpush1.bf16.msra.mxu0 %v3240
        %3306 = vmatprep.subr.bf16.mxu0 %v3245
        %3307 = vmatpush1.bf16.msra.mxu0 %v3244
        %3308 = vmatprep.subr.bf16.mxu0 %v3249
        %3309 = vmatpush1.bf16.msra.mxu0 %v3248
        %3310 = vmatprep.subr.bf16.mxu0 %v3253
        %3311 = vmatpush1.bf16.msra.mxu0 %v3252
        %3312 = vmatprep.subr.bf16.mxu0 %v3257
        %3313 = vmatpush1.bf16.msra.mxu0 %v3256
        %3314 = vmatprep.subr.bf16.mxu0 %v3261
        %3315 = vmatpush1.bf16.msra.mxu0 %v3260
        %3316 = vmatprep.subr.bf16.mxu0 %v3265
        %3317 = vmatpush1.bf16.msra.mxu0 %v3264
        %3318 = vmatprep.subr.bf16.mxu0 %v3269
        %3319 = vmatpush1.bf16.msra.mxu0 %v3268
        %3320 = vmatprep.subr.bf16.mxu0 0
        %3321 = vmatpush1.bf16.msra.mxu0 0
        %3322 = vmatprep.subr.bf16.mxu0 0
        %3323 = vmatpush1.bf16.msra.mxu0 0
        %3324 = vmatprep.subr.bf16.mxu0 0
        %3325 = vmatpush1.bf16.msra.mxu0 0
        %3326 = vmatprep.subr.bf16.mxu0 0
        %3327 = vmatpush1.bf16.msra.mxu0 0
        %3328 = vmatprep.subr.bf16.mxu0 0
        %3329 = vmatpush1.bf16.msra.mxu0 0
        %3330 = vmatprep.subr.bf16.mxu0 0
        %3331 = vmatpush1.bf16.msra.mxu0 0
        %3332 = vmatprep.subr.bf16.mxu0 0
        %3333 = vmatpush1.bf16.msra.mxu0 0
        %3334 = vmatprep.subr.bf16.mxu0 0
        %3335 = vmatpush1.bf16.msra.mxu0 0
        %3336 = vmatprep.mubr.bf16.mxu0 0
        %3337 = vmatmul.mubr.bf16.gmra.mrb[0].mxu0 %v3110
        %v3338 = vpop.f32.mrb[0].mxu0
        %v3339 = vadd.f32 0.0, %v3338
        %v3340 = vpop.f32.mrb[0].mxu0
        %v3341 = vadd.f32 0.0, %v3340
        %v3342 = vpop.f32.mrb[0].mxu0
        %v3343 = vpop.f32.mrb[0].mxu0
        %3344 = vdwg.mxu0
        %3345 = vmatprep.subr.bf16.mxu0 %v3243
        %3346 = vmatpush1.bf16.msra.mxu0 %v3242
        %3347 = vmatprep.subr.bf16.mxu0 %v3247
        %3348 = vmatpush1.bf16.msra.mxu0 %v3246
        %3349 = vmatprep.subr.bf16.mxu0 %v3251
        %3350 = vmatpush1.bf16.msra.mxu0 %v3250
        %3351 = vmatprep.subr.bf16.mxu0 %v3255
        %3352 = vmatpush1.bf16.msra.mxu0 %v3254
        %3353 = vmatprep.subr.bf16.mxu0 %v3259
        %3354 = vmatpush1.bf16.msra.mxu0 %v3258
        %3355 = vmatprep.subr.bf16.mxu0 %v3263
        %3356 = vmatpush1.bf16.msra.mxu0 %v3262
        %3357 = vmatprep.subr.bf16.mxu0 %v3267
        %3358 = vmatpush1.bf16.msra.mxu0 %v3266
        %3359 = vmatprep.subr.bf16.mxu0 %v3271
        %3360 = vmatpush1.bf16.msra.mxu0 %v3270
        %3361 = vmatprep.subr.bf16.mxu0 0
        %3362 = vmatpush1.bf16.msra.mxu0 0
        %3363 = vmatprep.subr.bf16.mxu0 0
        %3364 = vmatpush1.bf16.msra.mxu0 0
        %3365 = vmatprep.subr.bf16.mxu0 0
        %3366 = vmatpush1.bf16.msra.mxu0 0
        %3367 = vmatprep.subr.bf16.mxu0 0
        %3368 = vmatpush1.bf16.msra.mxu0 0
        %3369 = vmatprep.subr.bf16.mxu0 0
        %3370 = vmatpush1.bf16.msra.mxu0 0
        %3371 = vmatprep.subr.bf16.mxu0 0
        %3372 = vmatpush1.bf16.msra.mxu0 0
        %3373 = vmatprep.subr.bf16.mxu0 0
        %3374 = vmatpush1.bf16.msra.mxu0 0
        %3375 = vmatprep.subr.bf16.mxu0 0
        %3376 = vmatpush1.bf16.msra.mxu0 0
        %3377 = vmatprep.mubr.bf16.mxu0 0
        %3378 = vmatmul.mubr.bf16.gmra.mrb[0].mxu0 %v3110
        %v3379 = vpop.f32.mrb[0].mxu0
        %v3380 = vadd.f32 0.0, %v3379
        %v3381 = vpop.f32.mrb[0].mxu0
        %v3382 = vadd.f32 0.0, %v3381
        %v3383 = vpop.f32.mrb[0].mxu0
        %v3384 = vpop.f32.mrb[0].mxu0
        %3385 = vdwg.mxu0
        %v3386 = vadd.f32 %v3106, %v3339
        %v3387 = vadd.f32 %v3107, %v3341
        %v3388 = vadd.f32 %v3108, %v3380
        %v3389 = vadd.f32 %v3109, %v3382
        %v3390 = vld [vmem:[#allocation2 + $0x8] sm:$0x2]
        %s3391 = scalar_lea.vmem %s403, 2304 [#allocation10]
        %v3392 = vld [vmem:[%s3391] sm:$0xff]
        %v3393 = vld [vmem:[%s3391 + $0x8] sm:$0xff]
        %v3394 = vld [vmem:[%s3391 + $0x10] sm:$0xff]
        %v3395 = vld [vmem:[%s3391 + $0x18] sm:$0xff]
        %v3396 = vld [vmem:[%s3391 + $0x20] sm:$0xff]
        %v3397 = vld [vmem:[%s3391 + $0x28] sm:$0xff]
        %v3398 = vld [vmem:[%s3391 + $0x30] sm:$0xff]
        %v3399 = vld [vmem:[%s3391 + $0x38] sm:$0xff]
        %v3400 = vld [vmem:[%s3391 + $0x40] sm:$0xff]
        %v3401 = vld [vmem:[%s3391 + $0x48] sm:$0xff]
        %v3402 = vld [vmem:[%s3391 + $0x50] sm:$0xff]
        %v3403 = vld [vmem:[%s3391 + $0x58] sm:$0xff]
        %v3404 = vld [vmem:[%s3391 + $0x60] sm:$0xff]
        %v3405 = vld [vmem:[%s3391 + $0x68] sm:$0xff]
        %v3406 = vld [vmem:[%s3391 + $0x70] sm:$0xff]
        %v3407 = vld [vmem:[%s3391 + $0x78] sm:$0xff]
        %v3408 = vld [vmem:[%s3391 + $0x80] sm:$0xff]
        %v3409 = vld [vmem:[%s3391 + $0x88] sm:$0xff]
        %v3410 = vld [vmem:[%s3391 + $0x90] sm:$0xff]
        %v3411 = vld [vmem:[%s3391 + $0x98] sm:$0xff]
        %v3412 = vld [vmem:[%s3391 + $0xa0] sm:$0xff]
        %v3413 = vld [vmem:[%s3391 + $0xa8] sm:$0xff]
        %v3414 = vld [vmem:[%s3391 + $0xb0] sm:$0xff]
        %v3415 = vld [vmem:[%s3391 + $0xb8] sm:$0xff]
        %v3416 = vld [vmem:[%s3391 + $0xc0] sm:$0xff]
        %v3417 = vld [vmem:[%s3391 + $0xc8] sm:$0xff]
        %v3418 = vld [vmem:[%s3391 + $0xd0] sm:$0xff]
        %v3419 = vld [vmem:[%s3391 + $0xd8] sm:$0xff]
        %v3420 = vld [vmem:[%s3391 + $0xe0] sm:$0xff]
        %v3421 = vld [vmem:[%s3391 + $0xe8] sm:$0xff]
        %v3422 = vld [vmem:[%s3391 + $0xf0] sm:$0xff]
        %v3423 = vld [vmem:[%s3391 + $0xf8] sm:$0xff]
        %v3425 = vrot.slane %v3390, 1
        %v3459 = vunpack.c.l.b16 %v3392
        %v3460 = vunpack.c.h.b16 %v3392
        %v3461 = vunpack.c.l.b16 %v3393
        %v3462 = vunpack.c.h.b16 %v3393
        %v3463 = vunpack.c.l.b16 %v3394
        %v3464 = vunpack.c.h.b16 %v3394
        %v3465 = vunpack.c.l.b16 %v3395
        %v3466 = vunpack.c.h.b16 %v3395
        %v3467 = vunpack.c.l.b16 %v3396
        %v3468 = vunpack.c.h.b16 %v3396
        %v3469 = vunpack.c.l.b16 %v3397
        %v3470 = vunpack.c.h.b16 %v3397
        %v3471 = vunpack.c.l.b16 %v3398
        %v3472 = vunpack.c.h.b16 %v3398
        %v3473 = vunpack.c.l.b16 %v3399
        %v3474 = vunpack.c.h.b16 %v3399
        %v3475 = vunpack.c.l.b16 %v3400
        %v3476 = vunpack.c.h.b16 %v3400
        %v3477 = vunpack.c.l.b16 %v3401
        %v3478 = vunpack.c.h.b16 %v3401
        %v3479 = vunpack.c.l.b16 %v3402
        %v3480 = vunpack.c.h.b16 %v3402
        %v3481 = vunpack.c.l.b16 %v3403
        %v3482 = vunpack.c.h.b16 %v3403
        %v3483 = vunpack.c.l.b16 %v3404
        %v3484 = vunpack.c.h.b16 %v3404
        %v3485 = vunpack.c.l.b16 %v3405
        %v3486 = vunpack.c.h.b16 %v3405
        %v3487 = vunpack.c.l.b16 %v3406
        %v3488 = vunpack.c.h.b16 %v3406
        %v3489 = vunpack.c.l.b16 %v3407
        %v3490 = vunpack.c.h.b16 %v3407
        %v3491 = vunpack.c.l.b16 %v3408
        %v3492 = vunpack.c.h.b16 %v3408
        %v3493 = vunpack.c.l.b16 %v3409
        %v3494 = vunpack.c.h.b16 %v3409
        %v3495 = vunpack.c.l.b16 %v3410
        %v3496 = vunpack.c.h.b16 %v3410
        %v3497 = vunpack.c.l.b16 %v3411
        %v3498 = vunpack.c.h.b16 %v3411
        %v3499 = vunpack.c.l.b16 %v3412
        %v3500 = vunpack.c.h.b16 %v3412
        %v3501 = vunpack.c.l.b16 %v3413
        %v3502 = vunpack.c.h.b16 %v3413
        %v3503 = vunpack.c.l.b16 %v3414
        %v3504 = vunpack.c.h.b16 %v3414
        %v3505 = vunpack.c.l.b16 %v3415
        %v3506 = vunpack.c.h.b16 %v3415
        %v3507 = vunpack.c.l.b16 %v3416
        %v3508 = vunpack.c.h.b16 %v3416
        %v3509 = vunpack.c.l.b16 %v3417
        %v3510 = vunpack.c.h.b16 %v3417
        %v3511 = vunpack.c.l.b16 %v3418
        %v3512 = vunpack.c.h.b16 %v3418
        %v3513 = vunpack.c.l.b16 %v3419
        %v3514 = vunpack.c.h.b16 %v3419
        %v3515 = vunpack.c.l.b16 %v3420
        %v3516 = vunpack.c.h.b16 %v3420
        %v3517 = vunpack.c.l.b16 %v3421
        %v3518 = vunpack.c.h.b16 %v3421
        %v3519 = vunpack.c.l.b16 %v3422
        %v3520 = vunpack.c.h.b16 %v3422
        %v3521 = vunpack.c.l.b16 %v3423
        %v3522 = vunpack.c.h.b16 %v3423
        %v3523 = vpack.c.b16 %v3463, %v3459
        %v3524 = vpack.c.b16 %v3464, %v3460
        %v3525 = vpack.c.b16 %v3465, %v3461
        %v3526 = vpack.c.b16 %v3466, %v3462
        %v3527 = vpack.c.b16 %v3471, %v3467
        %v3528 = vpack.c.b16 %v3472, %v3468
        %v3529 = vpack.c.b16 %v3473, %v3469
        %v3530 = vpack.c.b16 %v3474, %v3470
        %v3531 = vpack.c.b16 %v3479, %v3475
        %v3532 = vpack.c.b16 %v3480, %v3476
        %v3533 = vpack.c.b16 %v3481, %v3477
        %v3534 = vpack.c.b16 %v3482, %v3478
        %v3535 = vpack.c.b16 %v3487, %v3483
        %v3536 = vpack.c.b16 %v3488, %v3484
        %v3537 = vpack.c.b16 %v3489, %v3485
        %v3538 = vpack.c.b16 %v3490, %v3486
        %v3539 = vpack.c.b16 %v3495, %v3491
        %v3540 = vpack.c.b16 %v3496, %v3492
        %v3541 = vpack.c.b16 %v3497, %v3493
        %v3542 = vpack.c.b16 %v3498, %v3494
        %v3543 = vpack.c.b16 %v3503, %v3499
        %v3544 = vpack.c.b16 %v3504, %v3500
        %v3545 = vpack.c.b16 %v3505, %v3501
        %v3546 = vpack.c.b16 %v3506, %v3502
        %v3547 = vpack.c.b16 %v3511, %v3507
        %v3548 = vpack.c.b16 %v3512, %v3508
        %v3549 = vpack.c.b16 %v3513, %v3509
        %v3550 = vpack.c.b16 %v3514, %v3510
        %v3551 = vpack.c.b16 %v3519, %v3515
        %v3552 = vpack.c.b16 %v3520, %v3516
        %v3553 = vpack.c.b16 %v3521, %v3517
        %v3554 = vpack.c.b16 %v3522, %v3518
        %3587 = vmatprep.subr.bf16.mxu0 %v3524
        %3588 = vmatpush1.bf16.msra.mxu0 %v3523
        %3589 = vmatprep.subr.bf16.mxu0 %v3528
        %3590 = vmatpush1.bf16.msra.mxu0 %v3527
        %3591 = vmatprep.subr.bf16.mxu0 %v3532
        %3592 = vmatpush1.bf16.msra.mxu0 %v3531
        %3593 = vmatprep.subr.bf16.mxu0 %v3536
        %3594 = vmatpush1.bf16.msra.mxu0 %v3535
        %3595 = vmatprep.subr.bf16.mxu0 %v3540
        %3596 = vmatpush1.bf16.msra.mxu0 %v3539
        %3597 = vmatprep.subr.bf16.mxu0 %v3544
        %3598 = vmatpush1.bf16.msra.mxu0 %v3543
        %3599 = vmatprep.subr.bf16.mxu0 %v3548
        %3600 = vmatpush1.bf16.msra.mxu0 %v3547
        %3601 = vmatprep.subr.bf16.mxu0 %v3552
        %3602 = vmatpush1.bf16.msra.mxu0 %v3551
        %3603 = vmatprep.subr.bf16.mxu0 0
        %3604 = vmatpush1.bf16.msra.mxu0 0
        %3605 = vmatprep.subr.bf16.mxu0 0
        %3606 = vmatpush1.bf16.msra.mxu0 0
        %3607 = vmatprep.subr.bf16.mxu0 0
        %3608 = vmatpush1.bf16.msra.mxu0 0
        %3609 = vmatprep.subr.bf16.mxu0 0
        %3610 = vmatpush1.bf16.msra.mxu0 0
        %3611 = vmatprep.subr.bf16.mxu0 0
        %3612 = vmatpush1.bf16.msra.mxu0 0
        %3613 = vmatprep.subr.bf16.mxu0 0
        %3614 = vmatpush1.bf16.msra.mxu0 0
        %3615 = vmatprep.subr.bf16.mxu0 0
        %3616 = vmatpush1.bf16.msra.mxu0 0
        %3617 = vmatprep.subr.bf16.mxu0 0
        %3618 = vmatpush1.bf16.msra.mxu0 0
        %3619 = vmatprep.mubr.bf16.mxu0 0
        %3620 = vmatmul.mubr.bf16.gmra.mrb[0].mxu0 %v3425
        %v3621 = vpop.f32.mrb[0].mxu0
        %v3622 = vadd.f32 0.0, %v3621
        %v3623 = vpop.f32.mrb[0].mxu0
        %v3624 = vadd.f32 0.0, %v3623
        %v3625 = vpop.f32.mrb[0].mxu0
        %v3626 = vpop.f32.mrb[0].mxu0
        %3627 = vdwg.mxu0
        %3628 = vmatprep.subr.bf16.mxu0 %v3526
        %3629 = vmatpush1.bf16.msra.mxu0 %v3525
        %3630 = vmatprep.subr.bf16.mxu0 %v3530
        %3631 = vmatpush1.bf16.msra.mxu0 %v3529
        %3632 = vmatprep.subr.bf16.mxu0 %v3534
        %3633 = vmatpush1.bf16.msra.mxu0 %v3533
        %3634 = vmatprep.subr.bf16.mxu0 %v3538
        %3635 = vmatpush1.bf16.msra.mxu0 %v3537
        %3636 = vmatprep.subr.bf16.mxu0 %v3542
        %3637 = vmatpush1.bf16.msra.mxu0 %v3541
        %3638 = vmatprep.subr.bf16.mxu0 %v3546
        %3639 = vmatpush1.bf16.msra.mxu0 %v3545
        %3640 = vmatprep.subr.bf16.mxu0 %v3550
        %3641 = vmatpush1.bf16.msra.mxu0 %v3549
        %3642 = vmatprep.subr.bf16.mxu0 %v3554
        %3643 = vmatpush1.bf16.msra.mxu0 %v3553
        %3644 = vmatprep.subr.bf16.mxu0 0
        %3645 = vmatpush1.bf16.msra.mxu0 0
        %3646 = vmatprep.subr.bf16.mxu0 0
        %3647 = vmatpush1.bf16.msra.mxu0 0
        %3648 = vmatprep.subr.bf16.mxu0 0
        %3649 = vmatpush1.bf16.msra.mxu0 0
        %3650 = vmatprep.subr.bf16.mxu0 0
        %3651 = vmatpush1.bf16.msra.mxu0 0
        %3652 = vmatprep.subr.bf16.mxu0 0
        %3653 = vmatpush1.bf16.msra.mxu0 0
        %3654 = vmatprep.subr.bf16.mxu0 0
        %3655 = vmatpush1.bf16.msra.mxu0 0
        %3656 = vmatprep.subr.bf16.mxu0 0
        %3657 = vmatpush1.bf16.msra.mxu0 0
        %3658 = vmatprep.subr.bf16.mxu0 0
        %3659 = vmatpush1.bf16.msra.mxu0 0
        %3660 = vmatprep.mubr.bf16.mxu0 0
        %3661 = vmatmul.mubr.bf16.gmra.mrb[0].mxu0 %v3425
        %v3662 = vpop.f32.mrb[0].mxu0
        %v3663 = vadd.f32 0.0, %v3662
        %v3664 = vpop.f32.mrb[0].mxu0
        %v3665 = vadd.f32 0.0, %v3664
        %v3666 = vpop.f32.mrb[0].mxu0
        %v3667 = vpop.f32.mrb[0].mxu0
        %3668 = vdwg.mxu0
        %v3669 = vadd.f32 %v3386, %v3622
        %v3670 = vadd.f32 %v3387, %v3624
        %v3671 = vadd.f32 %v3388, %v3663
        %v3672 = vadd.f32 %v3389, %v3665
        %v3673 = vld [vmem:[#allocation2 + $0x8] sm:$0x4]
        %s3674 = scalar_lea.vmem %s403, 2560 [#allocation10]
        %v3675 = vld [vmem:[%s3674] sm:$0xff]
        %v3676 = vld [vmem:[%s3674 + $0x8] sm:$0xff]
        %v3677 = vld [vmem:[%s3674 + $0x10] sm:$0xff]
        %v3678 = vld [vmem:[%s3674 + $0x18] sm:$0xff]
        %v3679 = vld [vmem:[%s3674 + $0x20] sm:$0xff]
        %v3680 = vld [vmem:[%s3674 + $0x28] sm:$0xff]
        %v3681 = vld [vmem:[%s3674 + $0x30] sm:$0xff]
        %v3682 = vld [vmem:[%s3674 + $0x38] sm:$0xff]
        %v3683 = vld [vmem:[%s3674 + $0x40] sm:$0xff]
        %v3684 = vld [vmem:[%s3674 + $0x48] sm:$0xff]
        %v3685 = vld [vmem:[%s3674 + $0x50] sm:$0xff]
        %v3686 = vld [vmem:[%s3674 + $0x58] sm:$0xff]
        %v3687 = vld [vmem:[%s3674 + $0x60] sm:$0xff]
        %v3688 = vld [vmem:[%s3674 + $0x68] sm:$0xff]
        %v3689 = vld [vmem:[%s3674 + $0x70] sm:$0xff]
        %v3690 = vld [vmem:[%s3674 + $0x78] sm:$0xff]
        %v3691 = vld [vmem:[%s3674 + $0x80] sm:$0xff]
        %v3692 = vld [vmem:[%s3674 + $0x88] sm:$0xff]
        %v3693 = vld [vmem:[%s3674 + $0x90] sm:$0xff]
        %v3694 = vld [vmem:[%s3674 + $0x98] sm:$0xff]
        %v3695 = vld [vmem:[%s3674 + $0xa0] sm:$0xff]
        %v3696 = vld [vmem:[%s3674 + $0xa8] sm:$0xff]
        %v3697 = vld [vmem:[%s3674 + $0xb0] sm:$0xff]
        %v3698 = vld [vmem:[%s3674 + $0xb8] sm:$0xff]
        %v3699 = vld [vmem:[%s3674 + $0xc0] sm:$0xff]
        %v3700 = vld [vmem:[%s3674 + $0xc8] sm:$0xff]
        %v3701 = vld [vmem:[%s3674 + $0xd0] sm:$0xff]
        %v3702 = vld [vmem:[%s3674 + $0xd8] sm:$0xff]
        %v3703 = vld [vmem:[%s3674 + $0xe0] sm:$0xff]
        %v3704 = vld [vmem:[%s3674 + $0xe8] sm:$0xff]
        %v3705 = vld [vmem:[%s3674 + $0xf0] sm:$0xff]
        %v3706 = vld [vmem:[%s3674 + $0xf8] sm:$0xff]
        %v3708 = vrot.slane %v3673, 2
        %v3742 = vunpack.c.l.b16 %v3675
        %v3743 = vunpack.c.h.b16 %v3675
        %v3744 = vunpack.c.l.b16 %v3676
        %v3745 = vunpack.c.h.b16 %v3676
        %v3746 = vunpack.c.l.b16 %v3677
        %v3747 = vunpack.c.h.b16 %v3677
        %v3748 = vunpack.c.l.b16 %v3678
        %v3749 = vunpack.c.h.b16 %v3678
        %v3750 = vunpack.c.l.b16 %v3679
        %v3751 = vunpack.c.h.b16 %v3679
        %v3752 = vunpack.c.l.b16 %v3680
        %v3753 = vunpack.c.h.b16 %v3680
        %v3754 = vunpack.c.l.b16 %v3681
        %v3755 = vunpack.c.h.b16 %v3681
        %v3756 = vunpack.c.l.b16 %v3682
        %v3757 = vunpack.c.h.b16 %v3682
        %v3758 = vunpack.c.l.b16 %v3683
        %v3759 = vunpack.c.h.b16 %v3683
        %v3760 = vunpack.c.l.b16 %v3684
        %v3761 = vunpack.c.h.b16 %v3684
        %v3762 = vunpack.c.l.b16 %v3685
        %v3763 = vunpack.c.h.b16 %v3685
        %v3764 = vunpack.c.l.b16 %v3686
        %v3765 = vunpack.c.h.b16 %v3686
        %v3766 = vunpack.c.l.b16 %v3687
        %v3767 = vunpack.c.h.b16 %v3687
        %v3768 = vunpack.c.l.b16 %v3688
        %v3769 = vunpack.c.h.b16 %v3688
        %v3770 = vunpack.c.l.b16 %v3689
        %v3771 = vunpack.c.h.b16 %v3689
        %v3772 = vunpack.c.l.b16 %v3690
        %v3773 = vunpack.c.h.b16 %v3690
        %v3774 = vunpack.c.l.b16 %v3691
        %v3775 = vunpack.c.h.b16 %v3691
        %v3776 = vunpack.c.l.b16 %v3692
        %v3777 = vunpack.c.h.b16 %v3692
        %v3778 = vunpack.c.l.b16 %v3693
        %v3779 = vunpack.c.h.b16 %v3693
        %v3780 = vunpack.c.l.b16 %v3694
        %v3781 = vunpack.c.h.b16 %v3694
        %v3782 = vunpack.c.l.b16 %v3695
        %v3783 = vunpack.c.h.b16 %v3695
        %v3784 = vunpack.c.l.b16 %v3696
        %v3785 = vunpack.c.h.b16 %v3696
        %v3786 = vunpack.c.l.b16 %v3697
        %v3787 = vunpack.c.h.b16 %v3697
        %v3788 = vunpack.c.l.b16 %v3698
        %v3789 = vunpack.c.h.b16 %v3698
        %v3790 = vunpack.c.l.b16 %v3699
        %v3791 = vunpack.c.h.b16 %v3699
        %v3792 = vunpack.c.l.b16 %v3700
        %v3793 = vunpack.c.h.b16 %v3700
        %v3794 = vunpack.c.l.b16 %v3701
        %v3795 = vunpack.c.h.b16 %v3701
        %v3796 = vunpack.c.l.b16 %v3702
        %v3797 = vunpack.c.h.b16 %v3702
        %v3798 = vunpack.c.l.b16 %v3703
        %v3799 = vunpack.c.h.b16 %v3703
        %v3800 = vunpack.c.l.b16 %v3704
        %v3801 = vunpack.c.h.b16 %v3704
        %v3802 = vunpack.c.l.b16 %v3705
        %v3803 = vunpack.c.h.b16 %v3705
        %v3804 = vunpack.c.l.b16 %v3706
        %v3805 = vunpack.c.h.b16 %v3706
        %v3806 = vpack.c.b16 %v3746, %v3742
        %v3807 = vpack.c.b16 %v3747, %v3743
        %v3808 = vpack.c.b16 %v3748, %v3744
        %v3809 = vpack.c.b16 %v3749, %v3745
        %v3810 = vpack.c.b16 %v3754, %v3750
        %v3811 = vpack.c.b16 %v3755, %v3751
        %v3812 = vpack.c.b16 %v3756, %v3752
        %v3813 = vpack.c.b16 %v3757, %v3753
        %v3814 = vpack.c.b16 %v3762, %v3758
        %v3815 = vpack.c.b16 %v3763, %v3759
        %v3816 = vpack.c.b16 %v3764, %v3760
        %v3817 = vpack.c.b16 %v3765, %v3761
        %v3818 = vpack.c.b16 %v3770, %v3766
        %v3819 = vpack.c.b16 %v3771, %v3767
        %v3820 = vpack.c.b16 %v3772, %v3768
        %v3821 = vpack.c.b16 %v3773, %v3769
        %v3822 = vpack.c.b16 %v3778, %v3774
        %v3823 = vpack.c.b16 %v3779, %v3775
        %v3824 = vpack.c.b16 %v3780, %v3776
        %v3825 = vpack.c.b16 %v3781, %v3777
        %v3826 = vpack.c.b16 %v3786, %v3782
        %v3827 = vpack.c.b16 %v3787, %v3783
        %v3828 = vpack.c.b16 %v3788, %v3784
        %v3829 = vpack.c.b16 %v3789, %v3785
        %v3830 = vpack.c.b16 %v3794, %v3790
        %v3831 = vpack.c.b16 %v3795, %v3791
        %v3832 = vpack.c.b16 %v3796, %v3792
        %v3833 = vpack.c.b16 %v3797, %v3793
        %v3834 = vpack.c.b16 %v3802, %v3798
        %v3835 = vpack.c.b16 %v3803, %v3799
        %v3836 = vpack.c.b16 %v3804, %v3800
        %v3837 = vpack.c.b16 %v3805, %v3801
        %3870 = vmatprep.subr.bf16.mxu0 %v3807
        %3871 = vmatpush1.bf16.msra.mxu0 %v3806
        %3872 = vmatprep.subr.bf16.mxu0 %v3811
        %3873 = vmatpush1.bf16.msra.mxu0 %v3810
        %3874 = vmatprep.subr.bf16.mxu0 %v3815
        %3875 = vmatpush1.bf16.msra.mxu0 %v3814
        %3876 = vmatprep.subr.bf16.mxu0 %v3819
        %3877 = vmatpush1.bf16.msra.mxu0 %v3818
        %3878 = vmatprep.subr.bf16.mxu0 %v3823
        %3879 = vmatpush1.bf16.msra.mxu0 %v3822
        %3880 = vmatprep.subr.bf16.mxu0 %v3827
        %3881 = vmatpush1.bf16.msra.mxu0 %v3826
        %3882 = vmatprep.subr.bf16.mxu0 %v3831
        %3883 = vmatpush1.bf16.msra.mxu0 %v3830
        %3884 = vmatprep.subr.bf16.mxu0 %v3835
        %3885 = vmatpush1.bf16.msra.mxu0 %v3834
        %3886 = vmatprep.subr.bf16.mxu0 0
        %3887 = vmatpush1.bf16.msra.mxu0 0
        %3888 = vmatprep.subr.bf16.mxu0 0
        %3889 = vmatpush1.bf16.msra.mxu0 0
        %3890 = vmatprep.subr.bf16.mxu0 0
        %3891 = vmatpush1.bf16.msra.mxu0 0
        %3892 = vmatprep.subr.bf16.mxu0 0
        %3893 = vmatpush1.bf16.msra.mxu0 0
        %3894 = vmatprep.subr.bf16.mxu0 0
        %3895 = vmatpush1.bf16.msra.mxu0 0
        %3896 = vmatprep.subr.bf16.mxu0 0
        %3897 = vmatpush1.bf16.msra.mxu0 0
        %3898 = vmatprep.subr.bf16.mxu0 0
        %3899 = vmatpush1.bf16.msra.mxu0 0
        %3900 = vmatprep.subr.bf16.mxu0 0
        %3901 = vmatpush1.bf16.msra.mxu0 0
        %3902 = vmatprep.mubr.bf16.mxu0 0
        %3903 = vmatmul.mubr.bf16.gmra.mrb[0].mxu0 %v3708
        %v3904 = vpop.f32.mrb[0].mxu0
        %v3905 = vadd.f32 0.0, %v3904
        %v3906 = vpop.f32.mrb[0].mxu0
        %v3907 = vadd.f32 0.0, %v3906
        %v3908 = vpop.f32.mrb[0].mxu0
        %v3909 = vpop.f32.mrb[0].mxu0
        %3910 = vdwg.mxu0
        %3911 = vmatprep.subr.bf16.mxu0 %v3809
        %3912 = vmatpush1.bf16.msra.mxu0 %v3808
        %3913 = vmatprep.subr.bf16.mxu0 %v3813
        %3914 = vmatpush1.bf16.msra.mxu0 %v3812
        %3915 = vmatprep.subr.bf16.mxu0 %v3817
        %3916 = vmatpush1.bf16.msra.mxu0 %v3816
        %3917 = vmatprep.subr.bf16.mxu0 %v3821
        %3918 = vmatpush1.bf16.msra.mxu0 %v3820
        %3919 = vmatprep.subr.bf16.mxu0 %v3825
        %3920 = vmatpush1.bf16.msra.mxu0 %v3824
        %3921 = vmatprep.subr.bf16.mxu0 %v3829
        %3922 = vmatpush1.bf16.msra.mxu0 %v3828
        %3923 = vmatprep.subr.bf16.mxu0 %v3833
        %3924 = vmatpush1.bf16.msra.mxu0 %v3832
        %3925 = vmatprep.subr.bf16.mxu0 %v3837
        %3926 = vmatpush1.bf16.msra.mxu0 %v3836
        %3927 = vmatprep.subr.bf16.mxu0 0
        %3928 = vmatpush1.bf16.msra.mxu0 0
        %3929 = vmatprep.subr.bf16.mxu0 0
        %3930 = vmatpush1.bf16.msra.mxu0 0
        %3931 = vmatprep.subr.bf16.mxu0 0
        %3932 = vmatpush1.bf16.msra.mxu0 0
        %3933 = vmatprep.subr.bf16.mxu0 0
        %3934 = vmatpush1.bf16.msra.mxu0 0
        %3935 = vmatprep.subr.bf16.mxu0 0
        %3936 = vmatpush1.bf16.msra.mxu0 0
        %3937 = vmatprep.subr.bf16.mxu0 0
        %3938 = vmatpush1.bf16.msra.mxu0 0
        %3939 = vmatprep.subr.bf16.mxu0 0
        %3940 = vmatpush1.bf16.msra.mxu0 0
        %3941 = vmatprep.subr.bf16.mxu0 0
        %3942 = vmatpush1.bf16.msra.mxu0 0
        %3943 = vmatprep.mubr.bf16.mxu0 0
        %3944 = vmatmul.mubr.bf16.gmra.mrb[0].mxu0 %v3708
        %v3945 = vpop.f32.mrb[0].mxu0
        %v3946 = vadd.f32 0.0, %v3945
        %v3947 = vpop.f32.mrb[0].mxu0
        %v3948 = vadd.f32 0.0, %v3947
        %v3949 = vpop.f32.mrb[0].mxu0
        %v3950 = vpop.f32.mrb[0].mxu0
        %3951 = vdwg.mxu0
        %v3952 = vadd.f32 %v3669, %v3905
        %v3953 = vadd.f32 %v3670, %v3907
        %v3954 = vadd.f32 %v3671, %v3946
        %v3955 = vadd.f32 %v3672, %v3948
        %v3956 = vld [vmem:[#allocation2 + $0x8] sm:$0x8]
        %s3957 = scalar_lea.vmem %s403, 2816 [#allocation10]
        %v3958 = vld [vmem:[%s3957] sm:$0xff]
        %v3959 = vld [vmem:[%s3957 + $0x8] sm:$0xff]
        %v3960 = vld [vmem:[%s3957 + $0x10] sm:$0xff]
        %v3961 = vld [vmem:[%s3957 + $0x18] sm:$0xff]
        %v3962 = vld [vmem:[%s3957 + $0x20] sm:$0xff]
        %v3963 = vld [vmem:[%s3957 + $0x28] sm:$0xff]
        %v3964 = vld [vmem:[%s3957 + $0x30] sm:$0xff]
        %v3965 = vld [vmem:[%s3957 + $0x38] sm:$0xff]
        %v3966 = vld [vmem:[%s3957 + $0x40] sm:$0xff]
        %v3967 = vld [vmem:[%s3957 + $0x48] sm:$0xff]
        %v3968 = vld [vmem:[%s3957 + $0x50] sm:$0xff]
        %v3969 = vld [vmem:[%s3957 + $0x58] sm:$0xff]
        %v3970 = vld [vmem:[%s3957 + $0x60] sm:$0xff]
        %v3971 = vld [vmem:[%s3957 + $0x68] sm:$0xff]
        %v3972 = vld [vmem:[%s3957 + $0x70] sm:$0xff]
        %v3973 = vld [vmem:[%s3957 + $0x78] sm:$0xff]
        %v3974 = vld [vmem:[%s3957 + $0x80] sm:$0xff]
        %v3975 = vld [vmem:[%s3957 + $0x88] sm:$0xff]
        %v3976 = vld [vmem:[%s3957 + $0x90] sm:$0xff]
        %v3977 = vld [vmem:[%s3957 + $0x98] sm:$0xff]
        %v3978 = vld [vmem:[%s3957 + $0xa0] sm:$0xff]
        %v3979 = vld [vmem:[%s3957 + $0xa8] sm:$0xff]
        %v3980 = vld [vmem:[%s3957 + $0xb0] sm:$0xff]
        %v3981 = vld [vmem:[%s3957 + $0xb8] sm:$0xff]
        %v3982 = vld [vmem:[%s3957 + $0xc0] sm:$0xff]
        %v3983 = vld [vmem:[%s3957 + $0xc8] sm:$0xff]
        %v3984 = vld [vmem:[%s3957 + $0xd0] sm:$0xff]
        %v3985 = vld [vmem:[%s3957 + $0xd8] sm:$0xff]
        %v3986 = vld [vmem:[%s3957 + $0xe0] sm:$0xff]
        %v3987 = vld [vmem:[%s3957 + $0xe8] sm:$0xff]
        %v3988 = vld [vmem:[%s3957 + $0xf0] sm:$0xff]
        %v3989 = vld [vmem:[%s3957 + $0xf8] sm:$0xff]
        %v3991 = vrot.slane %v3956, 3
        %v4025 = vunpack.c.l.b16 %v3958
        %v4026 = vunpack.c.h.b16 %v3958
        %v4027 = vunpack.c.l.b16 %v3959
        %v4028 = vunpack.c.h.b16 %v3959
        %v4029 = vunpack.c.l.b16 %v3960
        %v4030 = vunpack.c.h.b16 %v3960
        %v4031 = vunpack.c.l.b16 %v3961
        %v4032 = vunpack.c.h.b16 %v3961
        %v4033 = vunpack.c.l.b16 %v3962
        %v4034 = vunpack.c.h.b16 %v3962
        %v4035 = vunpack.c.l.b16 %v3963
        %v4036 = vunpack.c.h.b16 %v3963
        %v4037 = vunpack.c.l.b16 %v3964
        %v4038 = vunpack.c.h.b16 %v3964
        %v4039 = vunpack.c.l.b16 %v3965
        %v4040 = vunpack.c.h.b16 %v3965
        %v4041 = vunpack.c.l.b16 %v3966
        %v4042 = vunpack.c.h.b16 %v3966
        %v4043 = vunpack.c.l.b16 %v3967
        %v4044 = vunpack.c.h.b16 %v3967
        %v4045 = vunpack.c.l.b16 %v3968
        %v4046 = vunpack.c.h.b16 %v3968
        %v4047 = vunpack.c.l.b16 %v3969
        %v4048 = vunpack.c.h.b16 %v3969
        %v4049 = vunpack.c.l.b16 %v3970
        %v4050 = vunpack.c.h.b16 %v3970
        %v4051 = vunpack.c.l.b16 %v3971
        %v4052 = vunpack.c.h.b16 %v3971
        %v4053 = vunpack.c.l.b16 %v3972
        %v4054 = vunpack.c.h.b16 %v3972
        %v4055 = vunpack.c.l.b16 %v3973
        %v4056 = vunpack.c.h.b16 %v3973
        %v4057 = vunpack.c.l.b16 %v3974
        %v4058 = vunpack.c.h.b16 %v3974
        %v4059 = vunpack.c.l.b16 %v3975
        %v4060 = vunpack.c.h.b16 %v3975
        %v4061 = vunpack.c.l.b16 %v3976
        %v4062 = vunpack.c.h.b16 %v3976
        %v4063 = vunpack.c.l.b16 %v3977
        %v4064 = vunpack.c.h.b16 %v3977
        %v4065 = vunpack.c.l.b16 %v3978
        %v4066 = vunpack.c.h.b16 %v3978
        %v4067 = vunpack.c.l.b16 %v3979
        %v4068 = vunpack.c.h.b16 %v3979
        %v4069 = vunpack.c.l.b16 %v3980
        %v4070 = vunpack.c.h.b16 %v3980
        %v4071 = vunpack.c.l.b16 %v3981
        %v4072 = vunpack.c.h.b16 %v3981
        %v4073 = vunpack.c.l.b16 %v3982
        %v4074 = vunpack.c.h.b16 %v3982
        %v4075 = vunpack.c.l.b16 %v3983
        %v4076 = vunpack.c.h.b16 %v3983
        %v4077 = vunpack.c.l.b16 %v3984
        %v4078 = vunpack.c.h.b16 %v3984
        %v4079 = vunpack.c.l.b16 %v3985
        %v4080 = vunpack.c.h.b16 %v3985
        %v4081 = vunpack.c.l.b16 %v3986
        %v4082 = vunpack.c.h.b16 %v3986
        %v4083 = vunpack.c.l.b16 %v3987
        %v4084 = vunpack.c.h.b16 %v3987
        %v4085 = vunpack.c.l.b16 %v3988
        %v4086 = vunpack.c.h.b16 %v3988
        %v4087 = vunpack.c.l.b16 %v3989
        %v4088 = vunpack.c.h.b16 %v3989
        %v4089 = vpack.c.b16 %v4029, %v4025
        %v4090 = vpack.c.b16 %v4030, %v4026
        %v4091 = vpack.c.b16 %v4031, %v4027
        %v4092 = vpack.c.b16 %v4032, %v4028
        %v4093 = vpack.c.b16 %v4037, %v4033
        %v4094 = vpack.c.b16 %v4038, %v4034
        %v4095 = vpack.c.b16 %v4039, %v4035
        %v4096 = vpack.c.b16 %v4040, %v4036
        %v4097 = vpack.c.b16 %v4045, %v4041
        %v4098 = vpack.c.b16 %v4046, %v4042
        %v4099 = vpack.c.b16 %v4047, %v4043
        %v4100 = vpack.c.b16 %v4048, %v4044
        %v4101 = vpack.c.b16 %v4053, %v4049
        %v4102 = vpack.c.b16 %v4054, %v4050
        %v4103 = vpack.c.b16 %v4055, %v4051
        %v4104 = vpack.c.b16 %v4056, %v4052
        %v4105 = vpack.c.b16 %v4061, %v4057
        %v4106 = vpack.c.b16 %v4062, %v4058
        %v4107 = vpack.c.b16 %v4063, %v4059
        %v4108 = vpack.c.b16 %v4064, %v4060
        %v4109 = vpack.c.b16 %v4069, %v4065
        %v4110 = vpack.c.b16 %v4070, %v4066
        %v4111 = vpack.c.b16 %v4071, %v4067
        %v4112 = vpack.c.b16 %v4072, %v4068
        %v4113 = vpack.c.b16 %v4077, %v4073
        %v4114 = vpack.c.b16 %v4078, %v4074
        %v4115 = vpack.c.b16 %v4079, %v4075
        %v4116 = vpack.c.b16 %v4080, %v4076
        %v4117 = vpack.c.b16 %v4085, %v4081
        %v4118 = vpack.c.b16 %v4086, %v4082
        %v4119 = vpack.c.b16 %v4087, %v4083
        %v4120 = vpack.c.b16 %v4088, %v4084
        %4153 = vmatprep.subr.bf16.mxu0 %v4090
        %4154 = vmatpush1.bf16.msra.mxu0 %v4089
        %4155 = vmatprep.subr.bf16.mxu0 %v4094
        %4156 = vmatpush1.bf16.msra.mxu0 %v4093
        %4157 = vmatprep.subr.bf16.mxu0 %v4098
        %4158 = vmatpush1.bf16.msra.mxu0 %v4097
        %4159 = vmatprep.subr.bf16.mxu0 %v4102
        %4160 = vmatpush1.bf16.msra.mxu0 %v4101
        %4161 = vmatprep.subr.bf16.mxu0 %v4106
        %4162 = vmatpush1.bf16.msra.mxu0 %v4105
        %4163 = vmatprep.subr.bf16.mxu0 %v4110
        %4164 = vmatpush1.bf16.msra.mxu0 %v4109
        %4165 = vmatprep.subr.bf16.mxu0 %v4114
        %4166 = vmatpush1.bf16.msra.mxu0 %v4113
        %4167 = vmatprep.subr.bf16.mxu0 %v4118
        %4168 = vmatpush1.bf16.msra.mxu0 %v4117
        %4169 = vmatprep.subr.bf16.mxu0 0
        %4170 = vmatpush1.bf16.msra.mxu0 0
        %4171 = vmatprep.subr.bf16.mxu0 0
        %4172 = vmatpush1.bf16.msra.mxu0 0
        %4173 = vmatprep.subr.bf16.mxu0 0
        %4174 = vmatpush1.bf16.msra.mxu0 0
        %4175 = vmatprep.subr.bf16.mxu0 0
        %4176 = vmatpush1.bf16.msra.mxu0 0
        %4177 = vmatprep.subr.bf16.mxu0 0
        %4178 = vmatpush1.bf16.msra.mxu0 0
        %4179 = vmatprep.subr.bf16.mxu0 0
        %4180 = vmatpush1.bf16.msra.mxu0 0
        %4181 = vmatprep.subr.bf16.mxu0 0
        %4182 = vmatpush1.bf16.msra.mxu0 0
        %4183 = vmatprep.subr.bf16.mxu0 0
        %4184 = vmatpush1.bf16.msra.mxu0 0
        %4185 = vmatprep.mubr.bf16.mxu0 0
        %4186 = vmatmul.mubr.bf16.gmra.mrb[0].mxu0 %v3991
        %v4187 = vpop.f32.mrb[0].mxu0
        %v4188 = vadd.f32 0.0, %v4187
        %v4189 = vpop.f32.mrb[0].mxu0
        %v4190 = vadd.f32 0.0, %v4189
        %v4191 = vpop.f32.mrb[0].mxu0
        %v4192 = vpop.f32.mrb[0].mxu0
        %4193 = vdwg.mxu0
        %4194 = vmatprep.subr.bf16.mxu0 %v4092
        %4195 = vmatpush1.bf16.msra.mxu0 %v4091
        %4196 = vmatprep.subr.bf16.mxu0 %v4096
        %4197 = vmatpush1.bf16.msra.mxu0 %v4095
        %4198 = vmatprep.subr.bf16.mxu0 %v4100
        %4199 = vmatpush1.bf16.msra.mxu0 %v4099
        %4200 = vmatprep.subr.bf16.mxu0 %v4104
        %4201 = vmatpush1.bf16.msra.mxu0 %v4103
        %4202 = vmatprep.subr.bf16.mxu0 %v4108
        %4203 = vmatpush1.bf16.msra.mxu0 %v4107
        %4204 = vmatprep.subr.bf16.mxu0 %v4112
        %4205 = vmatpush1.bf16.msra.mxu0 %v4111
        %4206 = vmatprep.subr.bf16.mxu0 %v4116
        %4207 = vmatpush1.bf16.msra.mxu0 %v4115
        %4208 = vmatprep.subr.bf16.mxu0 %v4120
        %4209 = vmatpush1.bf16.msra.mxu0 %v4119
        %4210 = vmatprep.subr.bf16.mxu0 0
        %4211 = vmatpush1.bf16.msra.mxu0 0
        %4212 = vmatprep.subr.bf16.mxu0 0
        %4213 = vmatpush1.bf16.msra.mxu0 0
        %4214 = vmatprep.subr.bf16.mxu0 0
        %4215 = vmatpush1.bf16.msra.mxu0 0
        %4216 = vmatprep.subr.bf16.mxu0 0
        %4217 = vmatpush1.bf16.msra.mxu0 0
        %4218 = vmatprep.subr.bf16.mxu0 0
        %4219 = vmatpush1.bf16.msra.mxu0 0
        %4220 = vmatprep.subr.bf16.mxu0 0
        %4221 = vmatpush1.bf16.msra.mxu0 0
        %4222 = vmatprep.subr.bf16.mxu0 0
        %4223 = vmatpush1.bf16.msra.mxu0 0
        %4224 = vmatprep.subr.bf16.mxu0 0
        %4225 = vmatpush1.bf16.msra.mxu0 0
        %4226 = vmatprep.mubr.bf16.mxu0 0
        %4227 = vmatmul.mubr.bf16.gmra.mrb[0].mxu0 %v3991
        %v4228 = vpop.f32.mrb[0].mxu0
        %v4229 = vadd.f32 0.0, %v4228
        %v4230 = vpop.f32.mrb[0].mxu0
        %v4231 = vadd.f32 0.0, %v4230
        %v4232 = vpop.f32.mrb[0].mxu0
        %v4233 = vpop.f32.mrb[0].mxu0
        %4234 = vdwg.mxu0
        %v4235 = vadd.f32 %v3952, %v4188
        %v4236 = vadd.f32 %v3953, %v4190
        %v4237 = vadd.f32 %v3954, %v4229
        %v4238 = vadd.f32 %v3955, %v4231
        %v4239 = vld [vmem:[#allocation2 + $0x8] sm:$0x10]
        %s4240 = scalar_lea.vmem %s403, 3072 [#allocation10]
        %v4241 = vld [vmem:[%s4240] sm:$0xff]
        %v4242 = vld [vmem:[%s4240 + $0x8] sm:$0xff]
        %v4243 = vld [vmem:[%s4240 + $0x10] sm:$0xff]
        %v4244 = vld [vmem:[%s4240 + $0x18] sm:$0xff]
        %v4245 = vld [vmem:[%s4240 + $0x20] sm:$0xff]
        %v4246 = vld [vmem:[%s4240 + $0x28] sm:$0xff]
        %v4247 = vld [vmem:[%s4240 + $0x30] sm:$0xff]
        %v4248 = vld [vmem:[%s4240 + $0x38] sm:$0xff]
        %v4249 = vld [vmem:[%s4240 + $0x40] sm:$0xff]
        %v4250 = vld [vmem:[%s4240 + $0x48] sm:$0xff]
        %v4251 = vld [vmem:[%s4240 + $0x50] sm:$0xff]
        %v4252 = vld [vmem:[%s4240 + $0x58] sm:$0xff]
        %v4253 = vld [vmem:[%s4240 + $0x60] sm:$0xff]
        %v4254 = vld [vmem:[%s4240 + $0x68] sm:$0xff]
        %v4255 = vld [vmem:[%s4240 + $0x70] sm:$0xff]
        %v4256 = vld [vmem:[%s4240 + $0x78] sm:$0xff]
        %v4257 = vld [vmem:[%s4240 + $0x80] sm:$0xff]
        %v4258 = vld [vmem:[%s4240 + $0x88] sm:$0xff]
        %v4259 = vld [vmem:[%s4240 + $0x90] sm:$0xff]
        %v4260 = vld [vmem:[%s4240 + $0x98] sm:$0xff]
        %v4261 = vld [vmem:[%s4240 + $0xa0] sm:$0xff]
        %v4262 = vld [vmem:[%s4240 + $0xa8] sm:$0xff]
        %v4263 = vld [vmem:[%s4240 + $0xb0] sm:$0xff]
        %v4264 = vld [vmem:[%s4240 + $0xb8] sm:$0xff]
        %v4265 = vld [vmem:[%s4240 + $0xc0] sm:$0xff]
        %v4266 = vld [vmem:[%s4240 + $0xc8] sm:$0xff]
        %v4267 = vld [vmem:[%s4240 + $0xd0] sm:$0xff]
        %v4268 = vld [vmem:[%s4240 + $0xd8] sm:$0xff]
        %v4269 = vld [vmem:[%s4240 + $0xe0] sm:$0xff]
        %v4270 = vld [vmem:[%s4240 + $0xe8] sm:$0xff]
        %v4271 = vld [vmem:[%s4240 + $0xf0] sm:$0xff]
        %v4272 = vld [vmem:[%s4240 + $0xf8] sm:$0xff]
        %v4274 = vrot.slane %v4239, 4
        %v4308 = vunpack.c.l.b16 %v4241
        %v4309 = vunpack.c.h.b16 %v4241
        %v4310 = vunpack.c.l.b16 %v4242
        %v4311 = vunpack.c.h.b16 %v4242
        %v4312 = vunpack.c.l.b16 %v4243
        %v4313 = vunpack.c.h.b16 %v4243
        %v4314 = vunpack.c.l.b16 %v4244
        %v4315 = vunpack.c.h.b16 %v4244
        %v4316 = vunpack.c.l.b16 %v4245
        %v4317 = vunpack.c.h.b16 %v4245
        %v4318 = vunpack.c.l.b16 %v4246
        %v4319 = vunpack.c.h.b16 %v4246
        %v4320 = vunpack.c.l.b16 %v4247
        %v4321 = vunpack.c.h.b16 %v4247
        %v4322 = vunpack.c.l.b16 %v4248
        %v4323 = vunpack.c.h.b16 %v4248
        %v4324 = vunpack.c.l.b16 %v4249
        %v4325 = vunpack.c.h.b16 %v4249
        %v4326 = vunpack.c.l.b16 %v4250
        %v4327 = vunpack.c.h.b16 %v4250
        %v4328 = vunpack.c.l.b16 %v4251
        %v4329 = vunpack.c.h.b16 %v4251
        %v4330 = vunpack.c.l.b16 %v4252
        %v4331 = vunpack.c.h.b16 %v4252
        %v4332 = vunpack.c.l.b16 %v4253
        %v4333 = vunpack.c.h.b16 %v4253
        %v4334 = vunpack.c.l.b16 %v4254
        %v4335 = vunpack.c.h.b16 %v4254
        %v4336 = vunpack.c.l.b16 %v4255
        %v4337 = vunpack.c.h.b16 %v4255
        %v4338 = vunpack.c.l.b16 %v4256
        %v4339 = vunpack.c.h.b16 %v4256
        %v4340 = vunpack.c.l.b16 %v4257
        %v4341 = vunpack.c.h.b16 %v4257
        %v4342 = vunpack.c.l.b16 %v4258
        %v4343 = vunpack.c.h.b16 %v4258
        %v4344 = vunpack.c.l.b16 %v4259
        %v4345 = vunpack.c.h.b16 %v4259
        %v4346 = vunpack.c.l.b16 %v4260
        %v4347 = vunpack.c.h.b16 %v4260
        %v4348 = vunpack.c.l.b16 %v4261
        %v4349 = vunpack.c.h.b16 %v4261
        %v4350 = vunpack.c.l.b16 %v4262
        %v4351 = vunpack.c.h.b16 %v4262
        %v4352 = vunpack.c.l.b16 %v4263
        %v4353 = vunpack.c.h.b16 %v4263
        %v4354 = vunpack.c.l.b16 %v4264
        %v4355 = vunpack.c.h.b16 %v4264
        %v4356 = vunpack.c.l.b16 %v4265
        %v4357 = vunpack.c.h.b16 %v4265
        %v4358 = vunpack.c.l.b16 %v4266
        %v4359 = vunpack.c.h.b16 %v4266
        %v4360 = vunpack.c.l.b16 %v4267
        %v4361 = vunpack.c.h.b16 %v4267
        %v4362 = vunpack.c.l.b16 %v4268
        %v4363 = vunpack.c.h.b16 %v4268
        %v4364 = vunpack.c.l.b16 %v4269
        %v4365 = vunpack.c.h.b16 %v4269
        %v4366 = vunpack.c.l.b16 %v4270
        %v4367 = vunpack.c.h.b16 %v4270
        %v4368 = vunpack.c.l.b16 %v4271
        %v4369 = vunpack.c.h.b16 %v4271
        %v4370 = vunpack.c.l.b16 %v4272
        %v4371 = vunpack.c.h.b16 %v4272
        %v4372 = vpack.c.b16 %v4312, %v4308
        %v4373 = vpack.c.b16 %v4313, %v4309
        %v4374 = vpack.c.b16 %v4314, %v4310
        %v4375 = vpack.c.b16 %v4315, %v4311
        %v4376 = vpack.c.b16 %v4320, %v4316
        %v4377 = vpack.c.b16 %v4321, %v4317
        %v4378 = vpack.c.b16 %v4322, %v4318
        %v4379 = vpack.c.b16 %v4323, %v4319
        %v4380 = vpack.c.b16 %v4328, %v4324
        %v4381 = vpack.c.b16 %v4329, %v4325
        %v4382 = vpack.c.b16 %v4330, %v4326
        %v4383 = vpack.c.b16 %v4331, %v4327
        %v4384 = vpack.c.b16 %v4336, %v4332
        %v4385 = vpack.c.b16 %v4337, %v4333
        %v4386 = vpack.c.b16 %v4338, %v4334
        %v4387 = vpack.c.b16 %v4339, %v4335
        %v4388 = vpack.c.b16 %v4344, %v4340
        %v4389 = vpack.c.b16 %v4345, %v4341
        %v4390 = vpack.c.b16 %v4346, %v4342
        %v4391 = vpack.c.b16 %v4347, %v4343
        %v4392 = vpack.c.b16 %v4352, %v4348
        %v4393 = vpack.c.b16 %v4353, %v4349
        %v4394 = vpack.c.b16 %v4354, %v4350
        %v4395 = vpack.c.b16 %v4355, %v4351
        %v4396 = vpack.c.b16 %v4360, %v4356
        %v4397 = vpack.c.b16 %v4361, %v4357
        %v4398 = vpack.c.b16 %v4362, %v4358
        %v4399 = vpack.c.b16 %v4363, %v4359
        %v4400 = vpack.c.b16 %v4368, %v4364
        %v4401 = vpack.c.b16 %v4369, %v4365
        %v4402 = vpack.c.b16 %v4370, %v4366
        %v4403 = vpack.c.b16 %v4371, %v4367
        %4436 = vmatprep.subr.bf16.mxu0 %v4373
        %4437 = vmatpush1.bf16.msra.mxu0 %v4372
        %4438 = vmatprep.subr.bf16.mxu0 %v4377
        %4439 = vmatpush1.bf16.msra.mxu0 %v4376
        %4440 = vmatprep.subr.bf16.mxu0 %v4381
        %4441 = vmatpush1.bf16.msra.mxu0 %v4380
        %4442 = vmatprep.subr.bf16.mxu0 %v4385
        %4443 = vmatpush1.bf16.msra.mxu0 %v4384
        %4444 = vmatprep.subr.bf16.mxu0 %v4389
        %4445 = vmatpush1.bf16.msra.mxu0 %v4388
        %4446 = vmatprep.subr.bf16.mxu0 %v4393
        %4447 = vmatpush1.bf16.msra.mxu0 %v4392
        %4448 = vmatprep.subr.bf16.mxu0 %v4397
        %4449 = vmatpush1.bf16.msra.mxu0 %v4396
        %4450 = vmatprep.subr.bf16.mxu0 %v4401
        %4451 = vmatpush1.bf16.msra.mxu0 %v4400
        %4452 = vmatprep.subr.bf16.mxu0 0
        %4453 = vmatpush1.bf16.msra.mxu0 0
        %4454 = vmatprep.subr.bf16.mxu0 0
        %4455 = vmatpush1.bf16.msra.mxu0 0
        %4456 = vmatprep.subr.bf16.mxu0 0
        %4457 = vmatpush1.bf16.msra.mxu0 0
        %4458 = vmatprep.subr.bf16.mxu0 0
        %4459 = vmatpush1.bf16.msra.mxu0 0
        %4460 = vmatprep.subr.bf16.mxu0 0
        %4461 = vmatpush1.bf16.msra.mxu0 0
        %4462 = vmatprep.subr.bf16.mxu0 0
        %4463 = vmatpush1.bf16.msra.mxu0 0
        %4464 = vmatprep.subr.bf16.mxu0 0
        %4465 = vmatpush1.bf16.msra.mxu0 0
        %4466 = vmatprep.subr.bf16.mxu0 0
        %4467 = vmatpush1.bf16.msra.mxu0 0
        %4468 = vmatprep.mubr.bf16.mxu0 0
        %4469 = vmatmul.mubr.bf16.gmra.mrb[0].mxu0 %v4274
        %v4470 = vpop.f32.mrb[0].mxu0
        %v4471 = vadd.f32 0.0, %v4470
        %v4472 = vpop.f32.mrb[0].mxu0
        %v4473 = vadd.f32 0.0, %v4472
        %v4474 = vpop.f32.mrb[0].mxu0
        %v4475 = vpop.f32.mrb[0].mxu0
        %4476 = vdwg.mxu0
        %4477 = vmatprep.subr.bf16.mxu0 %v4375
        %4478 = vmatpush1.bf16.msra.mxu0 %v4374
        %4479 = vmatprep.subr.bf16.mxu0 %v4379
        %4480 = vmatpush1.bf16.msra.mxu0 %v4378
        %4481 = vmatprep.subr.bf16.mxu0 %v4383
        %4482 = vmatpush1.bf16.msra.mxu0 %v4382
        %4483 = vmatprep.subr.bf16.mxu0 %v4387
        %4484 = vmatpush1.bf16.msra.mxu0 %v4386
        %4485 = vmatprep.subr.bf16.mxu0 %v4391
        %4486 = vmatpush1.bf16.msra.mxu0 %v4390
        %4487 = vmatprep.subr.bf16.mxu0 %v4395
        %4488 = vmatpush1.bf16.msra.mxu0 %v4394
        %4489 = vmatprep.subr.bf16.mxu0 %v4399
        %4490 = vmatpush1.bf16.msra.mxu0 %v4398
        %4491 = vmatprep.subr.bf16.mxu0 %v4403
        %4492 = vmatpush1.bf16.msra.mxu0 %v4402
        %4493 = vmatprep.subr.bf16.mxu0 0
        %4494 = vmatpush1.bf16.msra.mxu0 0
        %4495 = vmatprep.subr.bf16.mxu0 0
        %4496 = vmatpush1.bf16.msra.mxu0 0
        %4497 = vmatprep.subr.bf16.mxu0 0
        %4498 = vmatpush1.bf16.msra.mxu0 0
        %4499 = vmatprep.subr.bf16.mxu0 0
        %4500 = vmatpush1.bf16.msra.mxu0 0
        %4501 = vmatprep.subr.bf16.mxu0 0
        %4502 = vmatpush1.bf16.msra.mxu0 0
        %4503 = vmatprep.subr.bf16.mxu0 0
        %4504 = vmatpush1.bf16.msra.mxu0 0
        %4505 = vmatprep.subr.bf16.mxu0 0
        %4506 = vmatpush1.bf16.msra.mxu0 0
        %4507 = vmatprep.subr.bf16.mxu0 0
        %4508 = vmatpush1.bf16.msra.mxu0 0
        %4509 = vmatprep.mubr.bf16.mxu0 0
        %4510 = vmatmul.mubr.bf16.gmra.mrb[0].mxu0 %v4274
        %v4511 = vpop.f32.mrb[0].mxu0
        %v4512 = vadd.f32 0.0, %v4511
        %v4513 = vpop.f32.mrb[0].mxu0
        %v4514 = vadd.f32 0.0, %v4513
        %v4515 = vpop.f32.mrb[0].mxu0
        %v4516 = vpop.f32.mrb[0].mxu0
        %4517 = vdwg.mxu0
        %v4518 = vadd.f32 %v4235, %v4471
        %v4519 = vadd.f32 %v4236, %v4473
        %v4520 = vadd.f32 %v4237, %v4512
        %v4521 = vadd.f32 %v4238, %v4514
        %v4522 = vld [vmem:[#allocation2 + $0x8] sm:$0x20]
        %s4523 = scalar_lea.vmem %s403, 3328 [#allocation10]
        %v4524 = vld [vmem:[%s4523] sm:$0xff]
        %v4525 = vld [vmem:[%s4523 + $0x8] sm:$0xff]
        %v4526 = vld [vmem:[%s4523 + $0x10] sm:$0xff]
        %v4527 = vld [vmem:[%s4523 + $0x18] sm:$0xff]
        %v4528 = vld [vmem:[%s4523 + $0x20] sm:$0xff]
        %v4529 = vld [vmem:[%s4523 + $0x28] sm:$0xff]
        %v4530 = vld [vmem:[%s4523 + $0x30] sm:$0xff]
        %v4531 = vld [vmem:[%s4523 + $0x38] sm:$0xff]
        %v4532 = vld [vmem:[%s4523 + $0x40] sm:$0xff]
        %v4533 = vld [vmem:[%s4523 + $0x48] sm:$0xff]
        %v4534 = vld [vmem:[%s4523 + $0x50] sm:$0xff]
        %v4535 = vld [vmem:[%s4523 + $0x58] sm:$0xff]
        %v4536 = vld [vmem:[%s4523 + $0x60] sm:$0xff]
        %v4537 = vld [vmem:[%s4523 + $0x68] sm:$0xff]
        %v4538 = vld [vmem:[%s4523 + $0x70] sm:$0xff]
        %v4539 = vld [vmem:[%s4523 + $0x78] sm:$0xff]
        %v4540 = vld [vmem:[%s4523 + $0x80] sm:$0xff]
        %v4541 = vld [vmem:[%s4523 + $0x88] sm:$0xff]
        %v4542 = vld [vmem:[%s4523 + $0x90] sm:$0xff]
        %v4543 = vld [vmem:[%s4523 + $0x98] sm:$0xff]
        %v4544 = vld [vmem:[%s4523 + $0xa0] sm:$0xff]
        %v4545 = vld [vmem:[%s4523 + $0xa8] sm:$0xff]
        %v4546 = vld [vmem:[%s4523 + $0xb0] sm:$0xff]
        %v4547 = vld [vmem:[%s4523 + $0xb8] sm:$0xff]
        %v4548 = vld [vmem:[%s4523 + $0xc0] sm:$0xff]
        %v4549 = vld [vmem:[%s4523 + $0xc8] sm:$0xff]
        %v4550 = vld [vmem:[%s4523 + $0xd0] sm:$0xff]
        %v4551 = vld [vmem:[%s4523 + $0xd8] sm:$0xff]
        %v4552 = vld [vmem:[%s4523 + $0xe0] sm:$0xff]
        %v4553 = vld [vmem:[%s4523 + $0xe8] sm:$0xff]
        %v4554 = vld [vmem:[%s4523 + $0xf0] sm:$0xff]
        %v4555 = vld [vmem:[%s4523 + $0xf8] sm:$0xff]
        %v4557 = vrot.slane %v4522, 5
        %v4591 = vunpack.c.l.b16 %v4524
        %v4592 = vunpack.c.h.b16 %v4524
        %v4593 = vunpack.c.l.b16 %v4525
        %v4594 = vunpack.c.h.b16 %v4525
        %v4595 = vunpack.c.l.b16 %v4526
        %v4596 = vunpack.c.h.b16 %v4526
        %v4597 = vunpack.c.l.b16 %v4527
        %v4598 = vunpack.c.h.b16 %v4527
        %v4599 = vunpack.c.l.b16 %v4528
        %v4600 = vunpack.c.h.b16 %v4528
        %v4601 = vunpack.c.l.b16 %v4529
        %v4602 = vunpack.c.h.b16 %v4529
        %v4603 = vunpack.c.l.b16 %v4530
        %v4604 = vunpack.c.h.b16 %v4530
        %v4605 = vunpack.c.l.b16 %v4531
        %v4606 = vunpack.c.h.b16 %v4531
        %v4607 = vunpack.c.l.b16 %v4532
        %v4608 = vunpack.c.h.b16 %v4532
        %v4609 = vunpack.c.l.b16 %v4533
        %v4610 = vunpack.c.h.b16 %v4533
        %v4611 = vunpack.c.l.b16 %v4534
        %v4612 = vunpack.c.h.b16 %v4534
        %v4613 = vunpack.c.l.b16 %v4535
        %v4614 = vunpack.c.h.b16 %v4535
        %v4615 = vunpack.c.l.b16 %v4536
        %v4616 = vunpack.c.h.b16 %v4536
        %v4617 = vunpack.c.l.b16 %v4537
        %v4618 = vunpack.c.h.b16 %v4537
        %v4619 = vunpack.c.l.b16 %v4538
        %v4620 = vunpack.c.h.b16 %v4538
        %v4621 = vunpack.c.l.b16 %v4539
        %v4622 = vunpack.c.h.b16 %v4539
        %v4623 = vunpack.c.l.b16 %v4540
        %v4624 = vunpack.c.h.b16 %v4540
        %v4625 = vunpack.c.l.b16 %v4541
        %v4626 = vunpack.c.h.b16 %v4541
        %v4627 = vunpack.c.l.b16 %v4542
        %v4628 = vunpack.c.h.b16 %v4542
        %v4629 = vunpack.c.l.b16 %v4543
        %v4630 = vunpack.c.h.b16 %v4543
        %v4631 = vunpack.c.l.b16 %v4544
        %v4632 = vunpack.c.h.b16 %v4544
        %v4633 = vunpack.c.l.b16 %v4545
        %v4634 = vunpack.c.h.b16 %v4545
        %v4635 = vunpack.c.l.b16 %v4546
        %v4636 = vunpack.c.h.b16 %v4546
        %v4637 = vunpack.c.l.b16 %v4547
        %v4638 = vunpack.c.h.b16 %v4547
        %v4639 = vunpack.c.l.b16 %v4548
        %v4640 = vunpack.c.h.b16 %v4548
        %v4641 = vunpack.c.l.b16 %v4549
        %v4642 = vunpack.c.h.b16 %v4549
        %v4643 = vunpack.c.l.b16 %v4550
        %v4644 = vunpack.c.h.b16 %v4550
        %v4645 = vunpack.c.l.b16 %v4551
        %v4646 = vunpack.c.h.b16 %v4551
        %v4647 = vunpack.c.l.b16 %v4552
        %v4648 = vunpack.c.h.b16 %v4552
        %v4649 = vunpack.c.l.b16 %v4553
        %v4650 = vunpack.c.h.b16 %v4553
        %v4651 = vunpack.c.l.b16 %v4554
        %v4652 = vunpack.c.h.b16 %v4554
        %v4653 = vunpack.c.l.b16 %v4555
        %v4654 = vunpack.c.h.b16 %v4555
        %v4655 = vpack.c.b16 %v4595, %v4591
        %v4656 = vpack.c.b16 %v4596, %v4592
        %v4657 = vpack.c.b16 %v4597, %v4593
        %v4658 = vpack.c.b16 %v4598, %v4594
        %v4659 = vpack.c.b16 %v4603, %v4599
        %v4660 = vpack.c.b16 %v4604, %v4600
        %v4661 = vpack.c.b16 %v4605, %v4601
        %v4662 = vpack.c.b16 %v4606, %v4602
        %v4663 = vpack.c.b16 %v4611, %v4607
        %v4664 = vpack.c.b16 %v4612, %v4608
        %v4665 = vpack.c.b16 %v4613, %v4609
        %v4666 = vpack.c.b16 %v4614, %v4610
        %v4667 = vpack.c.b16 %v4619, %v4615
        %v4668 = vpack.c.b16 %v4620, %v4616
        %v4669 = vpack.c.b16 %v4621, %v4617
        %v4670 = vpack.c.b16 %v4622, %v4618
        %v4671 = vpack.c.b16 %v4627, %v4623
        %v4672 = vpack.c.b16 %v4628, %v4624
        %v4673 = vpack.c.b16 %v4629, %v4625
        %v4674 = vpack.c.b16 %v4630, %v4626
        %v4675 = vpack.c.b16 %v4635, %v4631
        %v4676 = vpack.c.b16 %v4636, %v4632
        %v4677 = vpack.c.b16 %v4637, %v4633
        %v4678 = vpack.c.b16 %v4638, %v4634
        %v4679 = vpack.c.b16 %v4643, %v4639
        %v4680 = vpack.c.b16 %v4644, %v4640
        %v4681 = vpack.c.b16 %v4645, %v4641
        %v4682 = vpack.c.b16 %v4646, %v4642
        %v4683 = vpack.c.b16 %v4651, %v4647
        %v4684 = vpack.c.b16 %v4652, %v4648
        %v4685 = vpack.c.b16 %v4653, %v4649
        %v4686 = vpack.c.b16 %v4654, %v4650
        %4719 = vmatprep.subr.bf16.mxu0 %v4656
        %4720 = vmatpush1.bf16.msra.mxu0 %v4655
        %4721 = vmatprep.subr.bf16.mxu0 %v4660
        %4722 = vmatpush1.bf16.msra.mxu0 %v4659
        %4723 = vmatprep.subr.bf16.mxu0 %v4664
        %4724 = vmatpush1.bf16.msra.mxu0 %v4663
        %4725 = vmatprep.subr.bf16.mxu0 %v4668
        %4726 = vmatpush1.bf16.msra.mxu0 %v4667
        %4727 = vmatprep.subr.bf16.mxu0 %v4672
        %4728 = vmatpush1.bf16.msra.mxu0 %v4671
        %4729 = vmatprep.subr.bf16.mxu0 %v4676
        %4730 = vmatpush1.bf16.msra.mxu0 %v4675
        %4731 = vmatprep.subr.bf16.mxu0 %v4680
        %4732 = vmatpush1.bf16.msra.mxu0 %v4679
        %4733 = vmatprep.subr.bf16.mxu0 %v4684
        %4734 = vmatpush1.bf16.msra.mxu0 %v4683
        %4735 = vmatprep.subr.bf16.mxu0 0
        %4736 = vmatpush1.bf16.msra.mxu0 0
        %4737 = vmatprep.subr.bf16.mxu0 0
        %4738 = vmatpush1.bf16.msra.mxu0 0
        %4739 = vmatprep.subr.bf16.mxu0 0
        %4740 = vmatpush1.bf16.msra.mxu0 0
        %4741 = vmatprep.subr.bf16.mxu0 0
        %4742 = vmatpush1.bf16.msra.mxu0 0
        %4743 = vmatprep.subr.bf16.mxu0 0
        %4744 = vmatpush1.bf16.msra.mxu0 0
        %4745 = vmatprep.subr.bf16.mxu0 0
        %4746 = vmatpush1.bf16.msra.mxu0 0
        %4747 = vmatprep.subr.bf16.mxu0 0
        %4748 = vmatpush1.bf16.msra.mxu0 0
        %4749 = vmatprep.subr.bf16.mxu0 0
        %4750 = vmatpush1.bf16.msra.mxu0 0
        %4751 = vmatprep.mubr.bf16.mxu0 0
        %4752 = vmatmul.mubr.bf16.gmra.mrb[0].mxu0 %v4557
        %v4753 = vpop.f32.mrb[0].mxu0
        %v4754 = vadd.f32 0.0, %v4753
        %v4755 = vpop.f32.mrb[0].mxu0
        %v4756 = vadd.f32 0.0, %v4755
        %v4757 = vpop.f32.mrb[0].mxu0
        %v4758 = vpop.f32.mrb[0].mxu0
        %4759 = vdwg.mxu0
        %4760 = vmatprep.subr.bf16.mxu0 %v4658
        %4761 = vmatpush1.bf16.msra.mxu0 %v4657
        %4762 = vmatprep.subr.bf16.mxu0 %v4662
        %4763 = vmatpush1.bf16.msra.mxu0 %v4661
        %4764 = vmatprep.subr.bf16.mxu0 %v4666
        %4765 = vmatpush1.bf16.msra.mxu0 %v4665
        %4766 = vmatprep.subr.bf16.mxu0 %v4670
        %4767 = vmatpush1.bf16.msra.mxu0 %v4669
        %4768 = vmatprep.subr.bf16.mxu0 %v4674
        %4769 = vmatpush1.bf16.msra.mxu0 %v4673
        %4770 = vmatprep.subr.bf16.mxu0 %v4678
        %4771 = vmatpush1.bf16.msra.mxu0 %v4677
        %4772 = vmatprep.subr.bf16.mxu0 %v4682
        %4773 = vmatpush1.bf16.msra.mxu0 %v4681
        %4774 = vmatprep.subr.bf16.mxu0 %v4686
        %4775 = vmatpush1.bf16.msra.mxu0 %v4685
        %4776 = vmatprep.subr.bf16.mxu0 0
        %4777 = vmatpush1.bf16.msra.mxu0 0
        %4778 = vmatprep.subr.bf16.mxu0 0
        %4779 = vmatpush1.bf16.msra.mxu0 0
        %4780 = vmatprep.subr.bf16.mxu0 0
        %4781 = vmatpush1.bf16.msra.mxu0 0
        %4782 = vmatprep.subr.bf16.mxu0 0
        %4783 = vmatpush1.bf16.msra.mxu0 0
        %4784 = vmatprep.subr.bf16.mxu0 0
        %4785 = vmatpush1.bf16.msra.mxu0 0
        %4786 = vmatprep.subr.bf16.mxu0 0
        %4787 = vmatpush1.bf16.msra.mxu0 0
        %4788 = vmatprep.subr.bf16.mxu0 0
        %4789 = vmatpush1.bf16.msra.mxu0 0
        %4790 = vmatprep.subr.bf16.mxu0 0
        %4791 = vmatpush1.bf16.msra.mxu0 0
        %4792 = vmatprep.mubr.bf16.mxu0 0
        %4793 = vmatmul.mubr.bf16.gmra.mrb[0].mxu0 %v4557
        %v4794 = vpop.f32.mrb[0].mxu0
        %v4795 = vadd.f32 0.0, %v4794
        %v4796 = vpop.f32.mrb[0].mxu0
        %v4797 = vadd.f32 0.0, %v4796
        %v4798 = vpop.f32.mrb[0].mxu0
        %v4799 = vpop.f32.mrb[0].mxu0
        %4800 = vdwg.mxu0
        %v4801 = vadd.f32 %v4518, %v4754
        %v4802 = vadd.f32 %v4519, %v4756
        %v4803 = vadd.f32 %v4520, %v4795
        %v4804 = vadd.f32 %v4521, %v4797
        %v4805 = vld [vmem:[#allocation2 + $0x8] sm:$0x40]
        %s4806 = scalar_lea.vmem %s403, 3584 [#allocation10]
        %v4807 = vld [vmem:[%s4806] sm:$0xff]
        %v4808 = vld [vmem:[%s4806 + $0x8] sm:$0xff]
        %v4809 = vld [vmem:[%s4806 + $0x10] sm:$0xff]
        %v4810 = vld [vmem:[%s4806 + $0x18] sm:$0xff]
        %v4811 = vld [vmem:[%s4806 + $0x20] sm:$0xff]
        %v4812 = vld [vmem:[%s4806 + $0x28] sm:$0xff]
        %v4813 = vld [vmem:[%s4806 + $0x30] sm:$0xff]
        %v4814 = vld [vmem:[%s4806 + $0x38] sm:$0xff]
        %v4815 = vld [vmem:[%s4806 + $0x40] sm:$0xff]
        %v4816 = vld [vmem:[%s4806 + $0x48] sm:$0xff]
        %v4817 = vld [vmem:[%s4806 + $0x50] sm:$0xff]
        %v4818 = vld [vmem:[%s4806 + $0x58] sm:$0xff]
        %v4819 = vld [vmem:[%s4806 + $0x60] sm:$0xff]
        %v4820 = vld [vmem:[%s4806 + $0x68] sm:$0xff]
        %v4821 = vld [vmem:[%s4806 + $0x70] sm:$0xff]
        %v4822 = vld [vmem:[%s4806 + $0x78] sm:$0xff]
        %v4823 = vld [vmem:[%s4806 + $0x80] sm:$0xff]
        %v4824 = vld [vmem:[%s4806 + $0x88] sm:$0xff]
        %v4825 = vld [vmem:[%s4806 + $0x90] sm:$0xff]
        %v4826 = vld [vmem:[%s4806 + $0x98] sm:$0xff]
        %v4827 = vld [vmem:[%s4806 + $0xa0] sm:$0xff]
        %v4828 = vld [vmem:[%s4806 + $0xa8] sm:$0xff]
        %v4829 = vld [vmem:[%s4806 + $0xb0] sm:$0xff]
        %v4830 = vld [vmem:[%s4806 + $0xb8] sm:$0xff]
        %v4831 = vld [vmem:[%s4806 + $0xc0] sm:$0xff]
        %v4832 = vld [vmem:[%s4806 + $0xc8] sm:$0xff]
        %v4833 = vld [vmem:[%s4806 + $0xd0] sm:$0xff]
        %v4834 = vld [vmem:[%s4806 + $0xd8] sm:$0xff]
        %v4835 = vld [vmem:[%s4806 + $0xe0] sm:$0xff]
        %v4836 = vld [vmem:[%s4806 + $0xe8] sm:$0xff]
        %v4837 = vld [vmem:[%s4806 + $0xf0] sm:$0xff]
        %v4838 = vld [vmem:[%s4806 + $0xf8] sm:$0xff]
        %v4840 = vrot.slane %v4805, 6
        %v4874 = vunpack.c.l.b16 %v4807
        %v4875 = vunpack.c.h.b16 %v4807
        %v4876 = vunpack.c.l.b16 %v4808
        %v4877 = vunpack.c.h.b16 %v4808
        %v4878 = vunpack.c.l.b16 %v4809
        %v4879 = vunpack.c.h.b16 %v4809
        %v4880 = vunpack.c.l.b16 %v4810
        %v4881 = vunpack.c.h.b16 %v4810
        %v4882 = vunpack.c.l.b16 %v4811
        %v4883 = vunpack.c.h.b16 %v4811
        %v4884 = vunpack.c.l.b16 %v4812
        %v4885 = vunpack.c.h.b16 %v4812
        %v4886 = vunpack.c.l.b16 %v4813
        %v4887 = vunpack.c.h.b16 %v4813
        %v4888 = vunpack.c.l.b16 %v4814
        %v4889 = vunpack.c.h.b16 %v4814
        %v4890 = vunpack.c.l.b16 %v4815
        %v4891 = vunpack.c.h.b16 %v4815
        %v4892 = vunpack.c.l.b16 %v4816
        %v4893 = vunpack.c.h.b16 %v4816
        %v4894 = vunpack.c.l.b16 %v4817
        %v4895 = vunpack.c.h.b16 %v4817
        %v4896 = vunpack.c.l.b16 %v4818
        %v4897 = vunpack.c.h.b16 %v4818
        %v4898 = vunpack.c.l.b16 %v4819
        %v4899 = vunpack.c.h.b16 %v4819
        %v4900 = vunpack.c.l.b16 %v4820
        %v4901 = vunpack.c.h.b16 %v4820
        %v4902 = vunpack.c.l.b16 %v4821
        %v4903 = vunpack.c.h.b16 %v4821
        %v4904 = vunpack.c.l.b16 %v4822
        %v4905 = vunpack.c.h.b16 %v4822
        %v4906 = vunpack.c.l.b16 %v4823
        %v4907 = vunpack.c.h.b16 %v4823
        %v4908 = vunpack.c.l.b16 %v4824
        %v4909 = vunpack.c.h.b16 %v4824
        %v4910 = vunpack.c.l.b16 %v4825
        %v4911 = vunpack.c.h.b16 %v4825
        %v4912 = vunpack.c.l.b16 %v4826
        %v4913 = vunpack.c.h.b16 %v4826
        %v4914 = vunpack.c.l.b16 %v4827
        %v4915 = vunpack.c.h.b16 %v4827
        %v4916 = vunpack.c.l.b16 %v4828
        %v4917 = vunpack.c.h.b16 %v4828
        %v4918 = vunpack.c.l.b16 %v4829
        %v4919 = vunpack.c.h.b16 %v4829
        %v4920 = vunpack.c.l.b16 %v4830
        %v4921 = vunpack.c.h.b16 %v4830
        %v4922 = vunpack.c.l.b16 %v4831
        %v4923 = vunpack.c.h.b16 %v4831
        %v4924 = vunpack.c.l.b16 %v4832
        %v4925 = vunpack.c.h.b16 %v4832
        %v4926 = vunpack.c.l.b16 %v4833
        %v4927 = vunpack.c.h.b16 %v4833
        %v4928 = vunpack.c.l.b16 %v4834
        %v4929 = vunpack.c.h.b16 %v4834
        %v4930 = vunpack.c.l.b16 %v4835
        %v4931 = vunpack.c.h.b16 %v4835
        %v4932 = vunpack.c.l.b16 %v4836
        %v4933 = vunpack.c.h.b16 %v4836
        %v4934 = vunpack.c.l.b16 %v4837
        %v4935 = vunpack.c.h.b16 %v4837
        %v4936 = vunpack.c.l.b16 %v4838
        %v4937 = vunpack.c.h.b16 %v4838
        %v4938 = vpack.c.b16 %v4878, %v4874
        %v4939 = vpack.c.b16 %v4879, %v4875
        %v4940 = vpack.c.b16 %v4880, %v4876
        %v4941 = vpack.c.b16 %v4881, %v4877
        %v4942 = vpack.c.b16 %v4886, %v4882
        %v4943 = vpack.c.b16 %v4887, %v4883
        %v4944 = vpack.c.b16 %v4888, %v4884
        %v4945 = vpack.c.b16 %v4889, %v4885
        %v4946 = vpack.c.b16 %v4894, %v4890
        %v4947 = vpack.c.b16 %v4895, %v4891
        %v4948 = vpack.c.b16 %v4896, %v4892
        %v4949 = vpack.c.b16 %v4897, %v4893
        %v4950 = vpack.c.b16 %v4902, %v4898
        %v4951 = vpack.c.b16 %v4903, %v4899
        %v4952 = vpack.c.b16 %v4904, %v4900
        %v4953 = vpack.c.b16 %v4905, %v4901
        %v4954 = vpack.c.b16 %v4910, %v4906
        %v4955 = vpack.c.b16 %v4911, %v4907
        %v4956 = vpack.c.b16 %v4912, %v4908
        %v4957 = vpack.c.b16 %v4913, %v4909
        %v4958 = vpack.c.b16 %v4918, %v4914
        %v4959 = vpack.c.b16 %v4919, %v4915
        %v4960 = vpack.c.b16 %v4920, %v4916
        %v4961 = vpack.c.b16 %v4921, %v4917
        %v4962 = vpack.c.b16 %v4926, %v4922
        %v4963 = vpack.c.b16 %v4927, %v4923
        %v4964 = vpack.c.b16 %v4928, %v4924
        %v4965 = vpack.c.b16 %v4929, %v4925
        %v4966 = vpack.c.b16 %v4934, %v4930
        %v4967 = vpack.c.b16 %v4935, %v4931
        %v4968 = vpack.c.b16 %v4936, %v4932
        %v4969 = vpack.c.b16 %v4937, %v4933
        %5002 = vmatprep.subr.bf16.mxu0 %v4939
        %5003 = vmatpush1.bf16.msra.mxu0 %v4938
        %5004 = vmatprep.subr.bf16.mxu0 %v4943
        %5005 = vmatpush1.bf16.msra.mxu0 %v4942
        %5006 = vmatprep.subr.bf16.mxu0 %v4947
        %5007 = vmatpush1.bf16.msra.mxu0 %v4946
        %5008 = vmatprep.subr.bf16.mxu0 %v4951
        %5009 = vmatpush1.bf16.msra.mxu0 %v4950
        %5010 = vmatprep.subr.bf16.mxu0 %v4955
        %5011 = vmatpush1.bf16.msra.mxu0 %v4954
        %5012 = vmatprep.subr.bf16.mxu0 %v4959
        %5013 = vmatpush1.bf16.msra.mxu0 %v4958
        %5014 = vmatprep.subr.bf16.mxu0 %v4963
        %5015 = vmatpush1.bf16.msra.mxu0 %v4962
        %5016 = vmatprep.subr.bf16.mxu0 %v4967
        %5017 = vmatpush1.bf16.msra.mxu0 %v4966
        %5018 = vmatprep.subr.bf16.mxu0 0
        %5019 = vmatpush1.bf16.msra.mxu0 0
        %5020 = vmatprep.subr.bf16.mxu0 0
        %5021 = vmatpush1.bf16.msra.mxu0 0
        %5022 = vmatprep.subr.bf16.mxu0 0
        %5023 = vmatpush1.bf16.msra.mxu0 0
        %5024 = vmatprep.subr.bf16.mxu0 0
        %5025 = vmatpush1.bf16.msra.mxu0 0
        %5026 = vmatprep.subr.bf16.mxu0 0
        %5027 = vmatpush1.bf16.msra.mxu0 0
        %5028 = vmatprep.subr.bf16.mxu0 0
        %5029 = vmatpush1.bf16.msra.mxu0 0
        %5030 = vmatprep.subr.bf16.mxu0 0
        %5031 = vmatpush1.bf16.msra.mxu0 0
        %5032 = vmatprep.subr.bf16.mxu0 0
        %5033 = vmatpush1.bf16.msra.mxu0 0
        %5034 = vmatprep.mubr.bf16.mxu0 0
        %5035 = vmatmul.mubr.bf16.gmra.mrb[0].mxu0 %v4840
        %v5036 = vpop.f32.mrb[0].mxu0
        %v5037 = vadd.f32 0.0, %v5036
        %v5038 = vpop.f32.mrb[0].mxu0
        %v5039 = vadd.f32 0.0, %v5038
        %v5040 = vpop.f32.mrb[0].mxu0
        %v5041 = vpop.f32.mrb[0].mxu0
        %5042 = vdwg.mxu0
        %5043 = vmatprep.subr.bf16.mxu0 %v4941
        %5044 = vmatpush1.bf16.msra.mxu0 %v4940
        %5045 = vmatprep.subr.bf16.mxu0 %v4945
        %5046 = vmatpush1.bf16.msra.mxu0 %v4944
        %5047 = vmatprep.subr.bf16.mxu0 %v4949
        %5048 = vmatpush1.bf16.msra.mxu0 %v4948
        %5049 = vmatprep.subr.bf16.mxu0 %v4953
        %5050 = vmatpush1.bf16.msra.mxu0 %v4952
        %5051 = vmatprep.subr.bf16.mxu0 %v4957
        %5052 = vmatpush1.bf16.msra.mxu0 %v4956
        %5053 = vmatprep.subr.bf16.mxu0 %v4961
        %5054 = vmatpush1.bf16.msra.mxu0 %v4960
        %5055 = vmatprep.subr.bf16.mxu0 %v4965
        %5056 = vmatpush1.bf16.msra.mxu0 %v4964
        %5057 = vmatprep.subr.bf16.mxu0 %v4969
        %5058 = vmatpush1.bf16.msra.mxu0 %v4968
        %5059 = vmatprep.subr.bf16.mxu0 0
        %5060 = vmatpush1.bf16.msra.mxu0 0
        %5061 = vmatprep.subr.bf16.mxu0 0
        %5062 = vmatpush1.bf16.msra.mxu0 0
        %5063 = vmatprep.subr.bf16.mxu0 0
        %5064 = vmatpush1.bf16.msra.mxu0 0
        %5065 = vmatprep.subr.bf16.mxu0 0
        %5066 = vmatpush1.bf16.msra.mxu0 0
        %5067 = vmatprep.subr.bf16.mxu0 0
        %5068 = vmatpush1.bf16.msra.mxu0 0
        %5069 = vmatprep.subr.bf16.mxu0 0
        %5070 = vmatpush1.bf16.msra.mxu0 0
        %5071 = vmatprep.subr.bf16.mxu0 0
        %5072 = vmatpush1.bf16.msra.mxu0 0
        %5073 = vmatprep.subr.bf16.mxu0 0
        %5074 = vmatpush1.bf16.msra.mxu0 0
        %5075 = vmatprep.mubr.bf16.mxu0 0
        %5076 = vmatmul.mubr.bf16.gmra.mrb[0].mxu0 %v4840
        %v5077 = vpop.f32.mrb[0].mxu0
        %v5078 = vadd.f32 0.0, %v5077
        %v5079 = vpop.f32.mrb[0].mxu0
        %v5080 = vadd.f32 0.0, %v5079
        %v5081 = vpop.f32.mrb[0].mxu0
        %v5082 = vpop.f32.mrb[0].mxu0
        %5083 = vdwg.mxu0
        %v5084 = vadd.f32 %v4801, %v5037
        %v5085 = vadd.f32 %v4802, %v5039
        %v5086 = vadd.f32 %v4803, %v5078
        %v5087 = vadd.f32 %v4804, %v5080
        %v5088 = vld [vmem:[#allocation2 + $0x8] sm:$0x80]
        %s5089 = scalar_lea.vmem %s403, 3840 [#allocation10]
        %v5090 = vld [vmem:[%s5089] sm:$0xff]
        %v5091 = vld [vmem:[%s5089 + $0x8] sm:$0xff]
        %v5092 = vld [vmem:[%s5089 + $0x10] sm:$0xff]
        %v5093 = vld [vmem:[%s5089 + $0x18] sm:$0xff]
        %v5094 = vld [vmem:[%s5089 + $0x20] sm:$0xff]
        %v5095 = vld [vmem:[%s5089 + $0x28] sm:$0xff]
        %v5096 = vld [vmem:[%s5089 + $0x30] sm:$0xff]
        %v5097 = vld [vmem:[%s5089 + $0x38] sm:$0xff]
        %v5098 = vld [vmem:[%s5089 + $0x40] sm:$0xff]
        %v5099 = vld [vmem:[%s5089 + $0x48] sm:$0xff]
        %v5100 = vld [vmem:[%s5089 + $0x50] sm:$0xff]
        %v5101 = vld [vmem:[%s5089 + $0x58] sm:$0xff]
        %v5102 = vld [vmem:[%s5089 + $0x60] sm:$0xff]
        %v5103 = vld [vmem:[%s5089 + $0x68] sm:$0xff]
        %v5104 = vld [vmem:[%s5089 + $0x70] sm:$0xff]
        %v5105 = vld [vmem:[%s5089 + $0x78] sm:$0xff]
        %v5106 = vld [vmem:[%s5089 + $0x80] sm:$0xff]
        %v5107 = vld [vmem:[%s5089 + $0x88] sm:$0xff]
        %v5108 = vld [vmem:[%s5089 + $0x90] sm:$0xff]
        %v5109 = vld [vmem:[%s5089 + $0x98] sm:$0xff]
        %v5110 = vld [vmem:[%s5089 + $0xa0] sm:$0xff]
        %v5111 = vld [vmem:[%s5089 + $0xa8] sm:$0xff]
        %v5112 = vld [vmem:[%s5089 + $0xb0] sm:$0xff]
        %v5113 = vld [vmem:[%s5089 + $0xb8] sm:$0xff]
        %v5114 = vld [vmem:[%s5089 + $0xc0] sm:$0xff]
        %v5115 = vld [vmem:[%s5089 + $0xc8] sm:$0xff]
        %v5116 = vld [vmem:[%s5089 + $0xd0] sm:$0xff]
        %v5117 = vld [vmem:[%s5089 + $0xd8] sm:$0xff]
        %v5118 = vld [vmem:[%s5089 + $0xe0] sm:$0xff]
        %v5119 = vld [vmem:[%s5089 + $0xe8] sm:$0xff]
        %v5120 = vld [vmem:[%s5089 + $0xf0] sm:$0xff]
        %v5121 = vld [vmem:[%s5089 + $0xf8] sm:$0xff]
        %v5123 = vrot.slane %v5088, 7
        %v5157 = vunpack.c.l.b16 %v5090
        %v5158 = vunpack.c.h.b16 %v5090
        %v5159 = vunpack.c.l.b16 %v5091
        %v5160 = vunpack.c.h.b16 %v5091
        %v5161 = vunpack.c.l.b16 %v5092
        %v5162 = vunpack.c.h.b16 %v5092
        %v5163 = vunpack.c.l.b16 %v5093
        %v5164 = vunpack.c.h.b16 %v5093
        %v5165 = vunpack.c.l.b16 %v5094
        %v5166 = vunpack.c.h.b16 %v5094
        %v5167 = vunpack.c.l.b16 %v5095
        %v5168 = vunpack.c.h.b16 %v5095
        %v5169 = vunpack.c.l.b16 %v5096
        %v5170 = vunpack.c.h.b16 %v5096
        %v5171 = vunpack.c.l.b16 %v5097
        %v5172 = vunpack.c.h.b16 %v5097
        %v5173 = vunpack.c.l.b16 %v5098
        %v5174 = vunpack.c.h.b16 %v5098
        %v5175 = vunpack.c.l.b16 %v5099
        %v5176 = vunpack.c.h.b16 %v5099
        %v5177 = vunpack.c.l.b16 %v5100
        %v5178 = vunpack.c.h.b16 %v5100
        %v5179 = vunpack.c.l.b16 %v5101
        %v5180 = vunpack.c.h.b16 %v5101
        %v5181 = vunpack.c.l.b16 %v5102
        %v5182 = vunpack.c.h.b16 %v5102
        %v5183 = vunpack.c.l.b16 %v5103
        %v5184 = vunpack.c.h.b16 %v5103
        %v5185 = vunpack.c.l.b16 %v5104
        %v5186 = vunpack.c.h.b16 %v5104
        %v5187 = vunpack.c.l.b16 %v5105
        %v5188 = vunpack.c.h.b16 %v5105
        %v5189 = vunpack.c.l.b16 %v5106
        %v5190 = vunpack.c.h.b16 %v5106
        %v5191 = vunpack.c.l.b16 %v5107
        %v5192 = vunpack.c.h.b16 %v5107
        %v5193 = vunpack.c.l.b16 %v5108
        %v5194 = vunpack.c.h.b16 %v5108
        %v5195 = vunpack.c.l.b16 %v5109
        %v5196 = vunpack.c.h.b16 %v5109
        %v5197 = vunpack.c.l.b16 %v5110
        %v5198 = vunpack.c.h.b16 %v5110
        %v5199 = vunpack.c.l.b16 %v5111
        %v5200 = vunpack.c.h.b16 %v5111
        %v5201 = vunpack.c.l.b16 %v5112
        %v5202 = vunpack.c.h.b16 %v5112
        %v5203 = vunpack.c.l.b16 %v5113
        %v5204 = vunpack.c.h.b16 %v5113
        %v5205 = vunpack.c.l.b16 %v5114
        %v5206 = vunpack.c.h.b16 %v5114
        %v5207 = vunpack.c.l.b16 %v5115
        %v5208 = vunpack.c.h.b16 %v5115
        %v5209 = vunpack.c.l.b16 %v5116
        %v5210 = vunpack.c.h.b16 %v5116
        %v5211 = vunpack.c.l.b16 %v5117
        %v5212 = vunpack.c.h.b16 %v5117
        %v5213 = vunpack.c.l.b16 %v5118
        %v5214 = vunpack.c.h.b16 %v5118
        %v5215 = vunpack.c.l.b16 %v5119
        %v5216 = vunpack.c.h.b16 %v5119
        %v5217 = vunpack.c.l.b16 %v5120
        %v5218 = vunpack.c.h.b16 %v5120
        %v5219 = vunpack.c.l.b16 %v5121
        %v5220 = vunpack.c.h.b16 %v5121
        %v5221 = vpack.c.b16 %v5161, %v5157
        %v5222 = vpack.c.b16 %v5162, %v5158
        %v5223 = vpack.c.b16 %v5163, %v5159
        %v5224 = vpack.c.b16 %v5164, %v5160
        %v5225 = vpack.c.b16 %v5169, %v5165
        %v5226 = vpack.c.b16 %v5170, %v5166
        %v5227 = vpack.c.b16 %v5171, %v5167
        %v5228 = vpack.c.b16 %v5172, %v5168
        %v5229 = vpack.c.b16 %v5177, %v5173
        %v5230 = vpack.c.b16 %v5178, %v5174
        %v5231 = vpack.c.b16 %v5179, %v5175
        %v5232 = vpack.c.b16 %v5180, %v5176
        %v5233 = vpack.c.b16 %v5185, %v5181
        %v5234 = vpack.c.b16 %v5186, %v5182
        %v5235 = vpack.c.b16 %v5187, %v5183
        %v5236 = vpack.c.b16 %v5188, %v5184
        %v5237 = vpack.c.b16 %v5193, %v5189
        %v5238 = vpack.c.b16 %v5194, %v5190
        %v5239 = vpack.c.b16 %v5195, %v5191
        %v5240 = vpack.c.b16 %v5196, %v5192
        %v5241 = vpack.c.b16 %v5201, %v5197
        %v5242 = vpack.c.b16 %v5202, %v5198
        %v5243 = vpack.c.b16 %v5203, %v5199
        %v5244 = vpack.c.b16 %v5204, %v5200
        %v5245 = vpack.c.b16 %v5209, %v5205
        %v5246 = vpack.c.b16 %v5210, %v5206
        %v5247 = vpack.c.b16 %v5211, %v5207
        %v5248 = vpack.c.b16 %v5212, %v5208
        %v5249 = vpack.c.b16 %v5217, %v5213
        %v5250 = vpack.c.b16 %v5218, %v5214
        %v5251 = vpack.c.b16 %v5219, %v5215
        %v5252 = vpack.c.b16 %v5220, %v5216
        %5285 = vmatprep.subr.bf16.mxu0 %v5222
        %5286 = vmatpush1.bf16.msra.mxu0 %v5221
        %5287 = vmatprep.subr.bf16.mxu0 %v5226
        %5288 = vmatpush1.bf16.msra.mxu0 %v5225
        %5289 = vmatprep.subr.bf16.mxu0 %v5230
        %5290 = vmatpush1.bf16.msra.mxu0 %v5229
        %5291 = vmatprep.subr.bf16.mxu0 %v5234
        %5292 = vmatpush1.bf16.msra.mxu0 %v5233
        %5293 = vmatprep.subr.bf16.mxu0 %v5238
        %5294 = vmatpush1.bf16.msra.mxu0 %v5237
        %5295 = vmatprep.subr.bf16.mxu0 %v5242
        %5296 = vmatpush1.bf16.msra.mxu0 %v5241
        %5297 = vmatprep.subr.bf16.mxu0 %v5246
        %5298 = vmatpush1.bf16.msra.mxu0 %v5245
        %5299 = vmatprep.subr.bf16.mxu0 %v5250
        %5300 = vmatpush1.bf16.msra.mxu0 %v5249
        %5301 = vmatprep.subr.bf16.mxu0 0
        %5302 = vmatpush1.bf16.msra.mxu0 0
        %5303 = vmatprep.subr.bf16.mxu0 0
        %5304 = vmatpush1.bf16.msra.mxu0 0
        %5305 = vmatprep.subr.bf16.mxu0 0
        %5306 = vmatpush1.bf16.msra.mxu0 0
        %5307 = vmatprep.subr.bf16.mxu0 0
        %5308 = vmatpush1.bf16.msra.mxu0 0
        %5309 = vmatprep.subr.bf16.mxu0 0
        %5310 = vmatpush1.bf16.msra.mxu0 0
        %5311 = vmatprep.subr.bf16.mxu0 0
        %5312 = vmatpush1.bf16.msra.mxu0 0
        %5313 = vmatprep.subr.bf16.mxu0 0
        %5314 = vmatpush1.bf16.msra.mxu0 0
        %5315 = vmatprep.subr.bf16.mxu0 0
        %5316 = vmatpush1.bf16.msra.mxu0 0
        %5317 = vmatprep.mubr.bf16.mxu0 0
        %5318 = vmatmul.mubr.bf16.gmra.mrb[0].mxu0 %v5123
        %v5319 = vpop.f32.mrb[0].mxu0
        %v5320 = vadd.f32 0.0, %v5319
        %v5321 = vpop.f32.mrb[0].mxu0
        %v5322 = vadd.f32 0.0, %v5321
        %v5323 = vpop.f32.mrb[0].mxu0
        %v5324 = vpop.f32.mrb[0].mxu0
        %5325 = vdwg.mxu0
        %5326 = vmatprep.subr.bf16.mxu0 %v5224
        %5327 = vmatpush1.bf16.msra.mxu0 %v5223
        %5328 = vmatprep.subr.bf16.mxu0 %v5228
        %5329 = vmatpush1.bf16.msra.mxu0 %v5227
        %5330 = vmatprep.subr.bf16.mxu0 %v5232
        %5331 = vmatpush1.bf16.msra.mxu0 %v5231
        %5332 = vmatprep.subr.bf16.mxu0 %v5236
        %5333 = vmatpush1.bf16.msra.mxu0 %v5235
        %5334 = vmatprep.subr.bf16.mxu0 %v5240
        %5335 = vmatpush1.bf16.msra.mxu0 %v5239
        %5336 = vmatprep.subr.bf16.mxu0 %v5244
        %5337 = vmatpush1.bf16.msra.mxu0 %v5243
        %5338 = vmatprep.subr.bf16.mxu0 %v5248
        %5339 = vmatpush1.bf16.msra.mxu0 %v5247
        %5340 = vmatprep.subr.bf16.mxu0 %v5252
        %5341 = vmatpush1.bf16.msra.mxu0 %v5251
        %5342 = vmatprep.subr.bf16.mxu0 0
        %5343 = vmatpush1.bf16.msra.mxu0 0
        %5344 = vmatprep.subr.bf16.mxu0 0
        %5345 = vmatpush1.bf16.msra.mxu0 0
        %5346 = vmatprep.subr.bf16.mxu0 0
        %5347 = vmatpush1.bf16.msra.mxu0 0
        %5348 = vmatprep.subr.bf16.mxu0 0
        %5349 = vmatpush1.bf16.msra.mxu0 0
        %5350 = vmatprep.subr.bf16.mxu0 0
        %5351 = vmatpush1.bf16.msra.mxu0 0
        %5352 = vmatprep.subr.bf16.mxu0 0
        %5353 = vmatpush1.bf16.msra.mxu0 0
        %5354 = vmatprep.subr.bf16.mxu0 0
        %5355 = vmatpush1.bf16.msra.mxu0 0
        %5356 = vmatprep.subr.bf16.mxu0 0
        %5357 = vmatpush1.bf16.msra.mxu0 0
        %5358 = vmatprep.mubr.bf16.mxu0 0
        %5359 = vmatmul.mubr.bf16.gmra.mrb[0].mxu0 %v5123
        %v5360 = vpop.f32.mrb[0].mxu0
        %v5361 = vadd.f32 0.0, %v5360
        %v5362 = vpop.f32.mrb[0].mxu0
        %v5363 = vadd.f32 0.0, %v5362
        %v5364 = vpop.f32.mrb[0].mxu0
        %v5365 = vpop.f32.mrb[0].mxu0
        %5366 = vdwg.mxu0
        %v5367 = vadd.f32 %v5084, %v5320
        %v5368 = vadd.f32 %v5085, %v5322
        %v5369 = vadd.f32 %v5086, %v5361
        %v5370 = vadd.f32 %v5087, %v5363
        %v5371 = vld [vmem:[%s412] sm:$0xf]
        %v5373 = vlaneseq
        %v5374 = vshrl.u32 %v5373, 7
        %v5375 = vsub.s32 0, %v5374
        %v5376 = vrot.slane %v5371, %v5375
        %v5377 = vlaneseq
        %v5378 = vshrl.u32 %v5377, 7
        %v5379 = vsub.s32 1, %v5378
        %v5380 = vrot.slane %v5371, %v5379
        %v5381 = vlaneseq
        %v5382 = vshrl.u32 %v5381, 7
        %v5383 = vsub.s32 2, %v5382
        %v5384 = vrot.slane %v5371, %v5383
        %v5385 = vlaneseq
        %v5386 = vshrl.u32 %v5385, 7
        %v5387 = vsub.s32 3, %v5386
        %v5388 = vrot.slane %v5371, %v5387
        %v5393 = vadd.f32 %v5367, %v5376
        %v5394 = vadd.f32 %v5368, %v5380
        %v5395 = vadd.f32 %v5369, %v5384
        %v5396 = vadd.f32 %v5370, %v5388
        %v5397 = vmax.f32 %v5393, 0.0
        %v5398 = vmax.f32 %v5394, 0.0
        %v5399 = vmax.f32 %v5395, 0.0
        %v5400 = vmax.f32 %v5396, 0.0
        %v5401 = vpack.c.bf16 %v5397, %v5397
        %v5402 = vpack.c.bf16 %v5398, %v5398
        %v5403 = vpack.c.bf16 %v5399, %v5399
        %v5404 = vpack.c.bf16 %v5400, %v5400
        %v5405 = vld [vmem:[%s472] sm:$0x3]
        %v5406 = vld [vmem:[%s421] sm:$0xf]
        %v5407 = vld [vmem:[%s421 + $0x4] sm:$0xf]
        %v5408 = vld [vmem:[%s421 + $0x8] sm:$0xf]
        %v5409 = vld [vmem:[%s421 + $0xc] sm:$0xf]
        %v5410 = vld [vmem:[%s421 + $0x10] sm:$0xf]
        %v5411 = vld [vmem:[%s421 + $0x14] sm:$0xf]
        %v5412 = vld [vmem:[%s421 + $0x18] sm:$0xf]
        %v5413 = vld [vmem:[%s421 + $0x1c] sm:$0xf]
        %v5414 = vld [vmem:[%s421 + $0x20] sm:$0xf]
        %v5415 = vld [vmem:[%s421 + $0x24] sm:$0xf]
        %v5416 = vld [vmem:[%s421 + $0x28] sm:$0xf]
        %v5417 = vld [vmem:[%s421 + $0x2c] sm:$0xf]
        %v5418 = vld [vmem:[%s421 + $0x30] sm:$0xf]
        %v5419 = vld [vmem:[%s421 + $0x34] sm:$0xf]
        %v5420 = vld [vmem:[%s421 + $0x38] sm:$0xf]
        %v5421 = vld [vmem:[%s421 + $0x3c] sm:$0xf]
        %v5422 = vld [vmem:[%s421 + $0x40] sm:$0xf]
        %v5423 = vld [vmem:[%s421 + $0x44] sm:$0xf]
        %v5424 = vld [vmem:[%s421 + $0x48] sm:$0xf]
        %v5425 = vld [vmem:[%s421 + $0x4c] sm:$0xf]
        %v5426 = vld [vmem:[%s421 + $0x50] sm:$0xf]
        %v5427 = vld [vmem:[%s421 + $0x54] sm:$0xf]
        %v5428 = vld [vmem:[%s421 + $0x58] sm:$0xf]
        %v5429 = vld [vmem:[%s421 + $0x5c] sm:$0xf]
        %v5430 = vld [vmem:[%s421 + $0x60] sm:$0xf]
        %v5431 = vld [vmem:[%s421 + $0x64] sm:$0xf]
        %v5432 = vld [vmem:[%s421 + $0x68] sm:$0xf]
        %v5433 = vld [vmem:[%s421 + $0x6c] sm:$0xf]
        %v5434 = vld [vmem:[%s421 + $0x70] sm:$0xf]
        %v5435 = vld [vmem:[%s421 + $0x74] sm:$0xf]
        %v5436 = vld [vmem:[%s421 + $0x78] sm:$0xf]
        %v5437 = vld [vmem:[%s421 + $0x7c] sm:$0xf]
        %v5438 = vld [vmem:[%s421 + $0x80] sm:$0xf]
        %v5439 = vld [vmem:[%s421 + $0x84] sm:$0xf]
        %v5440 = vld [vmem:[%s421 + $0x88] sm:$0xf]
        %v5441 = vld [vmem:[%s421 + $0x8c] sm:$0xf]
        %v5442 = vld [vmem:[%s421 + $0x90] sm:$0xf]
        %v5443 = vld [vmem:[%s421 + $0x94] sm:$0xf]
        %v5444 = vld [vmem:[%s421 + $0x98] sm:$0xf]
        %v5445 = vld [vmem:[%s421 + $0x9c] sm:$0xf]
        %v5446 = vld [vmem:[%s421 + $0xa0] sm:$0xf]
        %v5447 = vld [vmem:[%s421 + $0xa4] sm:$0xf]
        %v5448 = vld [vmem:[%s421 + $0xa8] sm:$0xf]
        %v5449 = vld [vmem:[%s421 + $0xac] sm:$0xf]
        %v5450 = vld [vmem:[%s421 + $0xb0] sm:$0xf]
        %v5451 = vld [vmem:[%s421 + $0xb4] sm:$0xf]
        %v5452 = vld [vmem:[%s421 + $0xb8] sm:$0xf]
        %v5453 = vld [vmem:[%s421 + $0xbc] sm:$0xf]
        %v5454 = vld [vmem:[%s421 + $0xc0] sm:$0xf]
        %v5455 = vld [vmem:[%s421 + $0xc4] sm:$0xf]
        %v5456 = vld [vmem:[%s421 + $0xc8] sm:$0xf]
        %v5457 = vld [vmem:[%s421 + $0xcc] sm:$0xf]
        %v5458 = vld [vmem:[%s421 + $0xd0] sm:$0xf]
        %v5459 = vld [vmem:[%s421 + $0xd4] sm:$0xf]
        %v5460 = vld [vmem:[%s421 + $0xd8] sm:$0xf]
        %v5461 = vld [vmem:[%s421 + $0xdc] sm:$0xf]
        %v5462 = vld [vmem:[%s421 + $0xe0] sm:$0xf]
        %v5463 = vld [vmem:[%s421 + $0xe4] sm:$0xf]
        %v5464 = vld [vmem:[%s421 + $0xe8] sm:$0xf]
        %v5465 = vld [vmem:[%s421 + $0xec] sm:$0xf]
        %v5466 = vld [vmem:[%s421 + $0xf0] sm:$0xf]
        %v5467 = vld [vmem:[%s421 + $0xf4] sm:$0xf]
        %v5468 = vld [vmem:[%s421 + $0xf8] sm:$0xf]
        %v5469 = vld [vmem:[%s421 + $0xfc] sm:$0xf]
        %v5534 = vunpack.c.l.b16 %v5406
        %v5535 = vunpack.c.l.b16 %v5407
        %v5536 = vunpack.c.l.b16 %v5408
        %v5537 = vunpack.c.l.b16 %v5409
        %v5538 = vunpack.c.l.b16 %v5410
        %v5539 = vunpack.c.l.b16 %v5411
        %v5540 = vunpack.c.l.b16 %v5412
        %v5541 = vunpack.c.l.b16 %v5413
        %v5542 = vunpack.c.l.b16 %v5414
        %v5543 = vunpack.c.l.b16 %v5415
        %v5544 = vunpack.c.l.b16 %v5416
        %v5545 = vunpack.c.l.b16 %v5417
        %v5546 = vunpack.c.l.b16 %v5418
        %v5547 = vunpack.c.l.b16 %v5419
        %v5548 = vunpack.c.l.b16 %v5420
        %v5549 = vunpack.c.l.b16 %v5421
        %v5550 = vunpack.c.l.b16 %v5422
        %v5551 = vunpack.c.l.b16 %v5423
        %v5552 = vunpack.c.l.b16 %v5424
        %v5553 = vunpack.c.l.b16 %v5425
        %v5554 = vunpack.c.l.b16 %v5426
        %v5555 = vunpack.c.l.b16 %v5427
        %v5556 = vunpack.c.l.b16 %v5428
        %v5557 = vunpack.c.l.b16 %v5429
        %v5558 = vunpack.c.l.b16 %v5430
        %v5559 = vunpack.c.l.b16 %v5431
        %v5560 = vunpack.c.l.b16 %v5432
        %v5561 = vunpack.c.l.b16 %v5433
        %v5562 = vunpack.c.l.b16 %v5434
        %v5563 = vunpack.c.l.b16 %v5435
        %v5564 = vunpack.c.l.b16 %v5436
        %v5565 = vunpack.c.l.b16 %v5437
        %v5566 = vunpack.c.l.b16 %v5438
        %v5567 = vunpack.c.l.b16 %v5439
        %v5568 = vunpack.c.l.b16 %v5440
        %v5569 = vunpack.c.l.b16 %v5441
        %v5570 = vunpack.c.l.b16 %v5442
        %v5571 = vunpack.c.l.b16 %v5443
        %v5572 = vunpack.c.l.b16 %v5444
        %v5573 = vunpack.c.l.b16 %v5445
        %v5574 = vunpack.c.l.b16 %v5446
        %v5575 = vunpack.c.l.b16 %v5447
        %v5576 = vunpack.c.l.b16 %v5448
        %v5577 = vunpack.c.l.b16 %v5449
        %v5578 = vunpack.c.l.b16 %v5450
        %v5579 = vunpack.c.l.b16 %v5451
        %v5580 = vunpack.c.l.b16 %v5452
        %v5581 = vunpack.c.l.b16 %v5453
        %v5582 = vunpack.c.l.b16 %v5454
        %v5583 = vunpack.c.l.b16 %v5455
        %v5584 = vunpack.c.l.b16 %v5456
        %v5585 = vunpack.c.l.b16 %v5457
        %v5586 = vunpack.c.l.b16 %v5458
        %v5587 = vunpack.c.l.b16 %v5459
        %v5588 = vunpack.c.l.b16 %v5460
        %v5589 = vunpack.c.l.b16 %v5461
        %v5590 = vunpack.c.l.b16 %v5462
        %v5591 = vunpack.c.l.b16 %v5463
        %v5592 = vunpack.c.l.b16 %v5464
        %v5593 = vunpack.c.l.b16 %v5465
        %v5594 = vunpack.c.l.b16 %v5466
        %v5595 = vunpack.c.l.b16 %v5467
        %v5596 = vunpack.c.l.b16 %v5468
        %v5597 = vunpack.c.l.b16 %v5469
        %v5598 = vpack.c.b16 %v5535, %v5534
        %v5599 = vpack.c.b16 %v5537, %v5536
        %v5600 = vpack.c.b16 %v5539, %v5538
        %v5601 = vpack.c.b16 %v5541, %v5540
        %v5602 = vpack.c.b16 %v5543, %v5542
        %v5603 = vpack.c.b16 %v5545, %v5544
        %v5604 = vpack.c.b16 %v5547, %v5546
        %v5605 = vpack.c.b16 %v5549, %v5548
        %v5606 = vpack.c.b16 %v5551, %v5550
        %v5607 = vpack.c.b16 %v5553, %v5552
        %v5608 = vpack.c.b16 %v5555, %v5554
        %v5609 = vpack.c.b16 %v5557, %v5556
        %v5610 = vpack.c.b16 %v5559, %v5558
        %v5611 = vpack.c.b16 %v5561, %v5560
        %v5612 = vpack.c.b16 %v5563, %v5562
        %v5613 = vpack.c.b16 %v5565, %v5564
        %v5614 = vpack.c.b16 %v5567, %v5566
        %v5615 = vpack.c.b16 %v5569, %v5568
        %v5616 = vpack.c.b16 %v5571, %v5570
        %v5617 = vpack.c.b16 %v5573, %v5572
        %v5618 = vpack.c.b16 %v5575, %v5574
        %v5619 = vpack.c.b16 %v5577, %v5576
        %v5620 = vpack.c.b16 %v5579, %v5578
        %v5621 = vpack.c.b16 %v5581, %v5580
        %v5622 = vpack.c.b16 %v5583, %v5582
        %v5623 = vpack.c.b16 %v5585, %v5584
        %v5624 = vpack.c.b16 %v5587, %v5586
        %v5625 = vpack.c.b16 %v5589, %v5588
        %v5626 = vpack.c.b16 %v5591, %v5590
        %v5627 = vpack.c.b16 %v5593, %v5592
        %v5628 = vpack.c.b16 %v5595, %v5594
        %v5629 = vpack.c.b16 %v5597, %v5596
        %5662 = vmatprep.subr.bf16.mxu0 0
        %5663 = vmatpush1.bf16.msra.mxu0 %v5598
        %5664 = vmatprep.subr.bf16.mxu0 0
        %5665 = vmatpush1.bf16.msra.mxu0 %v5599
        %5666 = vmatprep.subr.bf16.mxu0 0
        %5667 = vmatpush1.bf16.msra.mxu0 %v5600
        %5668 = vmatprep.subr.bf16.mxu0 0
        %5669 = vmatpush1.bf16.msra.mxu0 %v5601
        %5670 = vmatprep.subr.bf16.mxu0 0
        %5671 = vmatpush1.bf16.msra.mxu0 %v5602
        %5672 = vmatprep.subr.bf16.mxu0 0
        %5673 = vmatpush1.bf16.msra.mxu0 %v5603
        %5674 = vmatprep.subr.bf16.mxu0 0
        %5675 = vmatpush1.bf16.msra.mxu0 %v5604
        %5676 = vmatprep.subr.bf16.mxu0 0
        %5677 = vmatpush1.bf16.msra.mxu0 %v5605
        %5678 = vmatprep.subr.bf16.mxu0 0
        %5679 = vmatpush1.bf16.msra.mxu0 %v5606
        %5680 = vmatprep.subr.bf16.mxu0 0
        %5681 = vmatpush1.bf16.msra.mxu0 %v5607
        %5682 = vmatprep.subr.bf16.mxu0 0
        %5683 = vmatpush1.bf16.msra.mxu0 %v5608
        %5684 = vmatprep.subr.bf16.mxu0 0
        %5685 = vmatpush1.bf16.msra.mxu0 %v5609
        %5686 = vmatprep.subr.bf16.mxu0 0
        %5687 = vmatpush1.bf16.msra.mxu0 %v5610
        %5688 = vmatprep.subr.bf16.mxu0 0
        %5689 = vmatpush1.bf16.msra.mxu0 %v5611
        %5690 = vmatprep.subr.bf16.mxu0 0
        %5691 = vmatpush1.bf16.msra.mxu0 %v5612
        %5692 = vmatprep.subr.bf16.mxu0 0
        %5693 = vmatpush1.bf16.msra.mxu0 %v5613
        %5694 = vmatprep.mubr.bf16.mxu0 %v5402
        %5695 = vmatmul.mubr.bf16.gmra.mrb[0].mxu0 %v5401
        %v5696 = vpop.f32.mrb[0].mxu0
        %v5697 = vadd.f32 0.0, %v5696
        %v5698 = vpop.f32.mrb[0].mxu0
        %v5699 = vpop.f32.mrb[0].mxu0
        %v5700 = vpop.f32.mrb[0].mxu0
        %5701 = vdwg.mxu0
        %5702 = vmatprep.subr.bf16.mxu0 0
        %5703 = vmatpush1.bf16.msra.mxu0 %v5614
        %5704 = vmatprep.subr.bf16.mxu0 0
        %5705 = vmatpush1.bf16.msra.mxu0 %v5615
        %5706 = vmatprep.subr.bf16.mxu0 0
        %5707 = vmatpush1.bf16.msra.mxu0 %v5616
        %5708 = vmatprep.subr.bf16.mxu0 0
        %5709 = vmatpush1.bf16.msra.mxu0 %v5617
        %5710 = vmatprep.subr.bf16.mxu0 0
        %5711 = vmatpush1.bf16.msra.mxu0 %v5618
        %5712 = vmatprep.subr.bf16.mxu0 0
        %5713 = vmatpush1.bf16.msra.mxu0 %v5619
        %5714 = vmatprep.subr.bf16.mxu0 0
        %5715 = vmatpush1.bf16.msra.mxu0 %v5620
        %5716 = vmatprep.subr.bf16.mxu0 0
        %5717 = vmatpush1.bf16.msra.mxu0 %v5621
        %5718 = vmatprep.subr.bf16.mxu0 0
        %5719 = vmatpush1.bf16.msra.mxu0 %v5622
        %5720 = vmatprep.subr.bf16.mxu0 0
        %5721 = vmatpush1.bf16.msra.mxu0 %v5623
        %5722 = vmatprep.subr.bf16.mxu0 0
        %5723 = vmatpush1.bf16.msra.mxu0 %v5624
        %5724 = vmatprep.subr.bf16.mxu0 0
        %5725 = vmatpush1.bf16.msra.mxu0 %v5625
        %5726 = vmatprep.subr.bf16.mxu0 0
        %5727 = vmatpush1.bf16.msra.mxu0 %v5626
        %5728 = vmatprep.subr.bf16.mxu0 0
        %5729 = vmatpush1.bf16.msra.mxu0 %v5627
        %5730 = vmatprep.subr.bf16.mxu0 0
        %5731 = vmatpush1.bf16.msra.mxu0 %v5628
        %5732 = vmatprep.subr.bf16.mxu0 0
        %5733 = vmatpush1.bf16.msra.mxu0 %v5629
        %5734 = vmatprep.mubr.bf16.mxu0 %v5404
        %5735 = vmatmul.mubr.bf16.gmra.mrb[0].mxu0 %v5403
        %v5736 = vpop.f32.mrb[0].mxu0
        %v5737 = vadd.f32 %v5697, %v5736
        %v5738 = vpop.f32.mrb[0].mxu0
        %v5739 = vpop.f32.mrb[0].mxu0
        %v5740 = vpop.f32.mrb[0].mxu0
        %5741 = vdwg.mxu0
        %v5742 = vadd.f32 %v5405, %v5737
        %5743 = vst [vmem:[%s472] sm:$0x3] %v5742
        %p5744 = scmp.lt.s32.totalorder %s26, 1
        %s5745 = scalar_select %p5744, %s26, 1
        %s5746 = smul.addr %s5745, 2
        %s5747 = scalar_lea.vmem %s8, %s5746
        // Predicated region
        $region85: #{forward.1} parent=51 // pred_check
          %p5748 = pneg %p241
        $region86: #{forward.1} parent=51 // pred_check_branch
          %5750 = sbr.rel (%p5748) target = $region88
        $region87: #{forward.1} parent=51 // pred_region
          _
        $region88: #{forward.1} parent=51 // pred_fallthru
          _
      $region52: #{forward.1} parent=5 // pred_fallthru
        _
      %p5751 = scmp.le.s32.totalorder 2, %s17
      // Predicated region
      $region89: #{forward.1} parent=5 // pred_check
        %p5752 = pneg %p5751
      $region90: #{forward.1} parent=5 // pred_check_branch
        %5754 = sbr.rel (%p5752) target = $region92
      $region91: #{forward.1} parent=5 // pred_region
        %s5755 = ssub.s32 %s17, 2
        // Predicated region
        $region93: #{forward.1} parent=91 // pred_check
          %p5756 = pneg %p247
        $region94: #{forward.1} parent=91 // pred_check_branch
          %5758 = sbr.rel (%p5756) target = $region96
        $region95: #{forward.1} parent=91 // pred_region
          %p5759 = scmp.lt.s32.totalorder %s28, 1
          %s5760 = scalar_select %p5759, %s28, 1
          %s5761 = smul.addr %s5760, 2
          %s5762 = scalar_lea.vmem %s8, %s5761
        $region96: #{forward.1} parent=91 // pred_fallthru
          _
      $region92: #{forward.1} parent=5 // pred_fallthru
        _
    $region6: #{forward.1} parent=1 // loop_footer
      %s21 = sadd.s32 1, %s17
    $region7: #{forward.1} parent=1 // loop_footer_branch
      %16 = sbr.rel target = $region3
    $region8: #{forward.1} parent=1 // loop_exit
      _
    %5763 = vsyncpa [#allocation4], 1
    %s5764 = scalar_lea.sflag [#allocation4], 1
    %5765 = vsyncpa %s5764, 1
    %5766 = vsyncpa [#allocation6], 1
    %5767 = vsyncpa [#allocation9], 1

</llo_original>
